<compile_context>
chip_gen: v5e
topology: v5e:2x2
jax: 0.10.0
libtpu: 0.0.40
codegen_flags: <defaults>
</compile_context>

<pallas_src>
import functools

import jax
import jax.numpy as jnp
from jax.experimental import pallas as pl
from jax.experimental.pallas import tpu as pltpu

# ----------------------------- model dimensions -----------------------------
B = 2            # batch
K_CODES = 16     # VQ codebook size
D_EMB = 32       # latent / embedding dim
H_LAT, W_LAT = 4, 4          # latent grid (height, width)
N_POS = H_LAT * W_LAT        # 16
N_MELS = 16      # mel channels
UP_T = 2         # temporal upsample inside VQVAE decoder  -> T = N_POS * UP_T
T_MEL = N_POS * UP_T         # 32
HID = 32         # HiFi-GAN hidden channels
UP_W = 4         # HiFi-GAN upsample factor
OUT_LEN = T_MEL * UP_W       # 128
LEAKY_SLOPE = 0.1  # TODO(synk): HiFi-GAN uses 0.1; confirm VQVAE decoder slope too.


# ----------------------------- in-kernel helpers ----------------------------
def _iota2(shape, dim):
    return jax.lax.broadcasted_iota(jnp.int32, shape, dim)


def _shr(x, d):
    """x // d for power-of-two d (vector-safe: lowers to a shift)."""
    return x >> (d.bit_length() - 1)


def _mod(x, d):
    """x % d for power-of-two d (vector-safe: lowers to a bitwise and)."""
    return x & (d - 1)


def _leaky(x):
    return jnp.where(x > 0, x, LEAKY_SLOPE * x)


# ----------------------------- fused cascade kernel -------------------------
def _cascade_kernel(onehot_ref, pos_ref, pemb_ref, pw_ref, cb_ref,
                    decw_ref, c1w_ref, upw_ref, c2w_ref, bias_ref, out_ref):
    f32 = jnp.float32
    bias = bias_ref[...]                                # (16, 128) packed bias slab

    def brow(i, n):                                     # (1, n) bias row, broadcast over rows
        return bias[i:i + 1, 0:n]

    rows_q = B * N_POS                                  # 32
    rows_m = B * T_MEL                                  # 64
    rows_o = B * OUT_LEN                                # 256

    # ---- stage 1: PixelSNAIL-style prior (single-shot argmax) --------------
    hidden = jnp.dot(onehot_ref[...], pemb_ref[...], preferred_element_type=f32)
    hidden = hidden + pos_ref[...]                                          # (32, 32)
    logits = jnp.dot(hidden, pw_ref[...], preferred_element_type=f32)
    logits = logits + brow(0, K_CODES)                                      # (32, 16)
    m = jnp.max(logits, axis=-1, keepdims=True)
    lane = _iota2(logits.shape, 1)
    winner = jnp.min(jnp.where(logits >= m, lane, jnp.int32(K_CODES)),
                     axis=-1, keepdims=True)            # first-index argmax (torch semantics)
    onehot_codes = (lane == winner).astype(f32)                             # (32, 16)
    # codebook "gather" as exact one-hot matmul on the MXU
    quantized = jnp.dot(onehot_codes, cb_ref[...], preferred_element_type=f32)  # (32, 32)

    # ---- stage 2: VQVAE decode (codes -> mel, channel-last) ----------------
    # time-upsample x UP_T = UP_T pointwise decodes + row-interleave (selection matmul)
    d_parts = []
    for u in range(UP_T):
        d = jnp.dot(quantized, decw_ref[u], preferred_element_type=f32)
        d_parts.append(_leaky(d + brow(1 + u, N_MELS)))                     # (32, 16)
    rm = _iota2((rows_m, rows_q), 0)
    cm = _iota2((rows_m, rows_q), 1)
    mel = jnp.zeros((rows_m, N_MELS), f32)
    for u in range(UP_T):
        sel = ((cm == _shr(rm, UP_T)) & (_mod(rm, UP_T) == u)).astype(f32)  # (64, 32)
        mel = mel + jnp.dot(sel, d_parts[u], preferred_element_type=f32)    # (64, 16)

    # ---- stage 3: HiFi-GAN generator ----------------------------------------
    # conv1d k=3 'same' over time: taps via in-kernel shift matrices (no im2col)
    r1 = _iota2((rows_m, rows_m), 0)
    c1 = _iota2((rows_m, rows_m), 1)
    prev1 = ((c1 == r1 - 1) & (_mod(r1, T_MEL) != 0)).astype(f32)
    next1 = ((c1 == r1 + 1) & (_mod(r1, T_MEL) != T_MEL - 1)).astype(f32)
    mel_prev = jnp.dot(prev1, mel, preferred_element_type=f32)
    mel_next = jnp.dot(next1, mel, preferred_element_type=f32)
    h = (jnp.dot(mel_prev, c1w_ref[0], preferred_element_type=f32)
         + jnp.dot(mel, c1w_ref[1], preferred_element_type=f32)
         + jnp.dot(mel_next, c1w_ref[2], preferred_element_type=f32))
    h = _leaky(h + brow(3, HID))                                            # (64, 32)

    # time-upsample x UP_W = UP_W pointwise convs + row-interleave
    up_parts = []
    for u in range(UP_W):
        g = jnp.dot(h, upw_ref[u], preferred_element_type=f32)
        up_parts.append(_leaky(g + brow(4 + u, HID)))                       # (64, 32)
    ro = _iota2((rows_o, rows_m), 0)
    co = _iota2((rows_o, rows_m), 1)
    up = jnp.zeros((rows_o, HID), f32)
    for u in range(UP_W):
        sel = ((co == _shr(ro, UP_W)) & (_mod(ro, UP_W) == u)).astype(f32)  # (256, 64)
        up = up + jnp.dot(sel, up_parts[u], preferred_element_type=f32)     # (256, 32)

    # conv1d k=3 'same' over time, HID -> 1
    r2 = _iota2((rows_o, rows_o), 0)
    c2 = _iota2((rows_o, rows_o), 1)
    prev2 = ((c2 == r2 - 1) & (_mod(r2, OUT_LEN) != 0)).astype(f32)
    next2 = ((c2 == r2 + 1) & (_mod(r2, OUT_LEN) != OUT_LEN - 1)).astype(f32)
    up_prev = jnp.dot(prev2, up, preferred_element_type=f32)
    up_next = jnp.dot(next2, up, preferred_element_type=f32)
    wav = (jnp.dot(up_prev, c2w_ref[0], preferred_element_type=f32)
           + jnp.dot(up, c2w_ref[1], preferred_element_type=f32)
           + jnp.dot(up_next, c2w_ref[2], preferred_element_type=f32))
    wav = wav + brow(8, 1)                                                  # (256, 1)

    # fold the (B*L, 1) column into a lane-dense (B, OUT_LEN) slab via an exact
    # selection matmul -> unmasked, lane-dense HBM store
    mb = (_shr(_iota2((B, rows_o), 1), OUT_LEN) == _iota2((B, rows_o), 0)).astype(f32)
    ml = (_mod(_iota2((rows_o, OUT_LEN), 0), OUT_LEN)
          == _iota2((rows_o, OUT_LEN), 1)).astype(f32)
    folded = jnp.dot(mb, wav * ml, preferred_element_type=f32)              # (2, 128)
    out_ref[...] = jnp.tanh(folded).astype(out_ref.dtype)


# ----------------------------- parameter init --------------------------------
def init_params(key):
    ks = jax.random.split(key, 13)
    s = 0.1
    return {
        "prior_embed": s * jax.random.normal(ks[0], (K_CODES, D_EMB), jnp.float32),
        "prior_pos":   s * jax.random.normal(ks[1], (N_POS, D_EMB), jnp.float32),
        "prior_w":     s * jax.random.normal(ks[2], (D_EMB, K_CODES), jnp.float32),
        "prior_b":     s * jax.random.normal(ks[3], (K_CODES,), jnp.float32),
        "codebook":    s * jax.random.normal(ks[4], (K_CODES, D_EMB), jnp.float32),
        "dec_w":       s * jax.random.normal(ks[5], (D_EMB, UP_T * N_MELS), jnp.float32),
        "dec_b":       s * jax.random.normal(ks[6], (UP_T * N_MELS,), jnp.float32),
        "g_conv1_w":   s * jax.random.normal(ks[7], (3 * N_MELS, HID), jnp.float32),
        "g_conv1_b":   s * jax.random.normal(ks[8], (HID,), jnp.float32),
        "g_up_w":      s * jax.random.normal(ks[9], (HID, UP_W * HID), jnp.float32),
        "g_up_b":      s * jax.random.normal(ks[10], (UP_W * HID,), jnp.float32),
        "g_conv2_w":   s * jax.random.normal(ks[11], (3 * HID, 1), jnp.float32),
        "g_conv2_b":   s * jax.random.normal(ks[12], (1,), jnp.float32),
    }


# ----------------------------- wrapper-side packing ---------------------------
def _pack_kernel_inputs(params, initial_state):
    """One-time prep of kernel inputs (param re-layout + tiny input encodings)."""
    b = initial_state.shape[0]
    codes0 = initial_state[:, 0, 0]                                          # (B,)
    onehot0 = (codes0[:, None] == jnp.arange(K_CODES)[None, :]).astype(jnp.float32)
    onehot_init = jnp.repeat(onehot0, N_POS, axis=0)                         # (B*P, K)
    pos_tiled = jnp.tile(params["prior_pos"], (b, 1))                        # (B*P, D)

    # pre-split weights into per-tap / per-upsample stacks (indexed statically in-kernel)
    dec_w_s = params["dec_w"].reshape(D_EMB, UP_T, N_MELS).transpose(1, 0, 2)  # (UP_T, D, M)
    c1w_s = params["g_conv1_w"].reshape(3, N_MELS, HID)                        # (3, M, HID)
    upw_s = params["g_up_w"].reshape(HID, UP_W, HID).transpose(1, 0, 2)        # (UP_W, HID, HID)
    c2w_s = params["g_conv2_w"].reshape(3, HID, 1)                             # (3, HID, 1)

    # pack every bias into one lane-dense (16, 128) slab: one row per bias
    bias = jnp.zeros((16, 128), jnp.float32)
    bias = bias.at[0, :K_CODES].set(params["prior_b"])
    for u in range(UP_T):
        bias = bias.at[1 + u, :N_MELS].set(params["dec_b"][u * N_MELS:(u + 1) * N_MELS])
    bias = bias.at[3, :HID].set(params["g_conv1_b"])
    for u in range(UP_W):
        bias = bias.at[4 + u, :HID].set(params["g_up_b"][u * HID:(u + 1) * HID])
    bias = bias.at[8, :1].set(params["g_conv2_b"])

    return (onehot_init, pos_tiled, params["prior_embed"], params["prior_w"],
            params["codebook"], dec_w_s, c1w_s, upw_s, c2w_s, bias)


def _full_spec(x):
    if x.ndim == 2:
        return pl.BlockSpec(x.shape, lambda i: (0, 0))
    assert x.ndim == 3
    return pl.BlockSpec(x.shape, lambda i: (0, 0, 0))


# ----------------------------- cascade inference -----------------------------
@functools.partial(jax.jit, static_argnames=("height", "width"))
def baseline_inference(params, initial_state, height=H_LAT, width=W_LAT):
    """initial_state: (B, 1, 1) int32 codes  ->  waveform (B, 1, OUT_LEN)."""
    assert height * width == N_POS
    b = initial_state.shape[0]
    args = _pack_kernel_inputs(params, initial_state)

    wav = pl.pallas_call(
        _cascade_kernel,
        out_shape=jax.ShapeDtypeStruct((b, OUT_LEN), jnp.float32),
        grid=(1,),
        in_specs=[_full_spec(a) for a in args],
        out_specs=pl.BlockSpec((b, OUT_LEN), lambda i: (0, 0)),
        compiler_params=pltpu.CompilerParams(dimension_semantics=("arbitrary",)),
    )(*args)
    return wav.reshape(b, 1, OUT_LEN)                                        # (B, 1, L)


# ----------------------------- main ------------------------------------------
if __name__ == "__main__":
    key = jax.random.PRNGKey(0)
    pkey, ikey = jax.random.split(key)
    params = init_params(pkey)

    # initial_state: (batch_size, 1, 1) integer codes, as in BaselineModel.inference
    initial_state = jax.random.randint(ikey, (B, 1, 1), 0, K_CODES, dtype=jnp.int32)

    out = baseline_inference(params, initial_state, height=H_LAT, width=W_LAT)
    out = jax.block_until_ready(out)

    assert out.shape == (B, 1, OUT_LEN), out.shape
    assert bool(jnp.all(jnp.isfinite(out)))
    print("KERNEL_OK")
</pallas_src>

<mosaic_0001>
module attributes {stable_mosaic.version = 11 : i64} {
  func.func @_cascade_kernel(%arg0: i32, %arg1: memref<32x16xf32, #tpu.memory_space<vmem>>, %arg2: memref<32x32xf32, #tpu.memory_space<vmem>>, %arg3: memref<16x32xf32, #tpu.memory_space<vmem>>, %arg4: memref<32x16xf32, #tpu.memory_space<vmem>>, %arg5: memref<16x32xf32, #tpu.memory_space<vmem>>, %arg6: memref<2x32x16xf32, #tpu.memory_space<vmem>>, %arg7: memref<3x16x32xf32, #tpu.memory_space<vmem>>, %arg8: memref<4x32x32xf32, #tpu.memory_space<vmem>>, %arg9: memref<3x32x1xf32, #tpu.memory_space<vmem>>, %arg10: memref<16x128xf32, #tpu.memory_space<vmem>>, %arg11: memref<2x128xf32, #tpu.memory_space<vmem>>) attributes {dimension_semantics = [#tpu.dimension_semantics<arbitrary>], iteration_bounds = array<i64: 1>, scalar_prefetch = 0 : i64, scratch_operands = 0 : i64, tpu.core_type = #tpu.core_type<tc>, window_params = [{pipeline_mode = #tpu.pipeline_mode<synchronous>, transform_indices = @transform_0, window_bounds = array<i64: 32, 16>}, {pipeline_mode = #tpu.pipeline_mode<synchronous>, transform_indices = @transform_1, window_bounds = array<i64: 32, 32>}, {pipeline_mode = #tpu.pipeline_mode<synchronous>, transform_indices = @transform_2, window_bounds = array<i64: 16, 32>}, {pipeline_mode = #tpu.pipeline_mode<synchronous>, transform_indices = @transform_3, window_bounds = array<i64: 32, 16>}, {pipeline_mode = #tpu.pipeline_mode<synchronous>, transform_indices = @transform_4, window_bounds = array<i64: 16, 32>}, {pipeline_mode = #tpu.pipeline_mode<synchronous>, transform_indices = @transform_5, window_bounds = array<i64: 2, 32, 16>}, {pipeline_mode = #tpu.pipeline_mode<synchronous>, transform_indices = @transform_6, window_bounds = array<i64: 3, 16, 32>}, {pipeline_mode = #tpu.pipeline_mode<synchronous>, transform_indices = @transform_7, window_bounds = array<i64: 4, 32, 32>}, {pipeline_mode = #tpu.pipeline_mode<synchronous>, transform_indices = @transform_8, window_bounds = array<i64: 3, 32, 1>}, {pipeline_mode = #tpu.pipeline_mode<synchronous>, transform_indices = @transform_9, window_bounds = array<i64: 16, 128>}, {pipeline_mode = #tpu.pipeline_mode<synchronous>, transform_indices = @transform_10, window_bounds = array<i64: 2, 128>}]} {
    %c0 = arith.constant 0 : index
    %c0_0 = arith.constant 0 : index
    %0 = vector.load %arg10[%c0, %c0_0] : memref<16x128xf32, #tpu.memory_space<vmem>>, vector<16x128xf32>
    %c0_1 = arith.constant 0 : index
    %c0_2 = arith.constant 0 : index
    %1 = vector.load %arg1[%c0_1, %c0_2] : memref<32x16xf32, #tpu.memory_space<vmem>>, vector<32x16xf32>
    %c0_3 = arith.constant 0 : index
    %c0_4 = arith.constant 0 : index
    %2 = vector.load %arg3[%c0_3, %c0_4] : memref<16x32xf32, #tpu.memory_space<vmem>>, vector<16x32xf32>
    %cst = arith.constant dense<0.000000e+00> : vector<32x32xf32>
    %3 = tpu.matmul %1, %2, %cst {dimension_numbers = #tpu.dot_dimension_numbers<[1], [0], [0], [1], [0, 0, 1, 1], [], []>} : vector<32x16xf32>, vector<16x32xf32>, vector<32x32xf32> -> vector<32x32xf32>
    %c0_5 = arith.constant 0 : index
    %c0_6 = arith.constant 0 : index
    %4 = vector.load %arg2[%c0_5, %c0_6] : memref<32x32xf32, #tpu.memory_space<vmem>>, vector<32x32xf32>
    %5 = arith.addf %3, %4 : vector<32x32xf32>
    %c0_7 = arith.constant 0 : index
    %c0_8 = arith.constant 0 : index
    %6 = vector.load %arg4[%c0_7, %c0_8] : memref<32x16xf32, #tpu.memory_space<vmem>>, vector<32x16xf32>
    %cst_9 = arith.constant dense<0.000000e+00> : vector<32x16xf32>
    %7 = tpu.matmul %5, %6, %cst_9 {dimension_numbers = #tpu.dot_dimension_numbers<[1], [0], [0], [1], [0, 0, 1, 1], [], []>} : vector<32x32xf32>, vector<32x16xf32>, vector<32x16xf32> -> vector<32x16xf32>
    %8 = vector.extract_strided_slice %0 {offsets = [0, 0], sizes = [1, 16], strides = [1, 1]} : vector<16x128xf32> to vector<1x16xf32>
    %9 = vector.broadcast %8 : vector<1x16xf32> to vector<32x16xf32>
    %10 = arith.addf %7, %9 : vector<32x16xf32>
    %cst_10 = arith.constant dense<0xFF800000> : vector<32xf32>
    %11 = vector.multi_reduction <maximumf>, %10, %cst_10 [1] : vector<32x16xf32> to vector<32xf32>
    %12 = vector.shape_cast %11 : vector<32xf32> to vector<32x1xf32>
    %13 = tpu.iota {dimensions = array<i32: 1>} : vector<32x16xi32>
    %14 = vector.broadcast %12 : vector<32x1xf32> to vector<32x16xf32>
    %15 = arith.cmpf oge, %10, %14 : vector<32x16xf32>
    %c16_i32 = arith.constant 16 : i32
    %16 = vector.broadcast %c16_i32 : i32 to vector<32x16xi32>
    %17 = arith.select %15, %13, %16 : vector<32x16xi1>, vector<32x16xi32>
    %cst_11 = arith.constant dense<2147483647> : vector<32xi32>
    %18 = vector.multi_reduction <minsi>, %17, %cst_11 [1] : vector<32x16xi32> to vector<32xi32>
    %19 = vector.shape_cast %18 : vector<32xi32> to vector<32x1xi32>
    %20 = vector.broadcast %19 : vector<32x1xi32> to vector<32x16xi32>
    %21 = arith.cmpi eq, %13, %20 : vector<32x16xi32>
    %22 = arith.extui %21 : vector<32x16xi1> to vector<32x16xi32>
    %23 = arith.sitofp %22 : vector<32x16xi32> to vector<32x16xf32>
    %c0_12 = arith.constant 0 : index
    %c0_13 = arith.constant 0 : index
    %24 = vector.load %arg5[%c0_12, %c0_13] : memref<16x32xf32, #tpu.memory_space<vmem>>, vector<16x32xf32>
    %cst_14 = arith.constant dense<0.000000e+00> : vector<32x32xf32>
    %25 = tpu.matmul %23, %24, %cst_14 {dimension_numbers = #tpu.dot_dimension_numbers<[1], [0], [0], [1], [0, 0, 1, 1], [], []>} : vector<32x16xf32>, vector<16x32xf32>, vector<32x32xf32> -> vector<32x32xf32>
    %c0_15 = arith.constant 0 : index
    %c0_16 = arith.constant 0 : index
    %c0_17 = arith.constant 0 : index
    %26 = vector.load %arg6[%c0_15, %c0_16, %c0_17] : memref<2x32x16xf32, #tpu.memory_space<vmem>>, vector<1x32x16xf32>
    %27 = vector.shape_cast %26 : vector<1x32x16xf32> to vector<32x16xf32>
    %cst_18 = arith.constant dense<0.000000e+00> : vector<32x16xf32>
    %28 = tpu.matmul %25, %27, %cst_18 {dimension_numbers = #tpu.dot_dimension_numbers<[1], [0], [0], [1], [0, 0, 1, 1], [], []>} : vector<32x32xf32>, vector<32x16xf32>, vector<32x16xf32> -> vector<32x16xf32>
    %29 = vector.extract_strided_slice %0 {offsets = [1, 0], sizes = [1, 16], strides = [1, 1]} : vector<16x128xf32> to vector<1x16xf32>
    %30 = vector.broadcast %29 : vector<1x16xf32> to vector<32x16xf32>
    %31 = arith.addf %28, %30 : vector<32x16xf32>
    %cst_19 = arith.constant 0.000000e+00 : f32
    %32 = vector.broadcast %cst_19 : f32 to vector<32x16xf32>
    %33 = arith.cmpf ogt, %31, %32 : vector<32x16xf32>
    %cst_20 = arith.constant 1.000000e-01 : f32
    %34 = vector.broadcast %cst_20 : f32 to vector<32x16xf32>
    %35 = arith.mulf %34, %31 : vector<32x16xf32>
    %36 = arith.select %33, %31, %35 : vector<32x16xi1>, vector<32x16xf32>
    %c1 = arith.constant 1 : index
    %c0_21 = arith.constant 0 : index
    %c0_22 = arith.constant 0 : index
    %37 = vector.load %arg6[%c1, %c0_21, %c0_22] : memref<2x32x16xf32, #tpu.memory_space<vmem>>, vector<1x32x16xf32>
    %38 = vector.shape_cast %37 : vector<1x32x16xf32> to vector<32x16xf32>
    %cst_23 = arith.constant dense<0.000000e+00> : vector<32x16xf32>
    %39 = tpu.matmul %25, %38, %cst_23 {dimension_numbers = #tpu.dot_dimension_numbers<[1], [0], [0], [1], [0, 0, 1, 1], [], []>} : vector<32x32xf32>, vector<32x16xf32>, vector<32x16xf32> -> vector<32x16xf32>
    %40 = vector.extract_strided_slice %0 {offsets = [2, 0], sizes = [1, 16], strides = [1, 1]} : vector<16x128xf32> to vector<1x16xf32>
    %41 = vector.broadcast %40 : vector<1x16xf32> to vector<32x16xf32>
    %42 = arith.addf %39, %41 : vector<32x16xf32>
    %cst_24 = arith.constant 0.000000e+00 : f32
    %43 = vector.broadcast %cst_24 : f32 to vector<32x16xf32>
    %44 = arith.cmpf ogt, %42, %43 : vector<32x16xf32>
    %cst_25 = arith.constant 1.000000e-01 : f32
    %45 = vector.broadcast %cst_25 : f32 to vector<32x16xf32>
    %46 = arith.mulf %45, %42 : vector<32x16xf32>
    %47 = arith.select %44, %42, %46 : vector<32x16xi1>, vector<32x16xf32>
    %48 = tpu.iota {dimensions = array<i32: 0>} : vector<64x32xi32>
    %49 = tpu.iota {dimensions = array<i32: 1>} : vector<64x32xi32>
    %cst_26 = arith.constant 0.000000e+00 : f32
    %50 = vector.broadcast %cst_26 : f32 to vector<64x16xf32>
    %c1_i32 = arith.constant 1 : i32
    %51 = vector.broadcast %c1_i32 : i32 to vector<64x32xi32>
    %52 = arith.shrsi %48, %51 : vector<64x32xi32>
    %53 = arith.cmpi eq, %49, %52 : vector<64x32xi32>
    %c1_i32_27 = arith.constant 1 : i32
    %54 = vector.broadcast %c1_i32_27 : i32 to vector<64x32xi32>
    %55 = arith.andi %48, %54 : vector<64x32xi32>
    %c0_i32 = arith.constant 0 : i32
    %56 = vector.broadcast %c0_i32 : i32 to vector<64x32xi32>
    %57 = arith.cmpi eq, %55, %56 : vector<64x32xi32>
    %58 = arith.andi %53, %57 : vector<64x32xi1>
    %59 = arith.extui %58 : vector<64x32xi1> to vector<64x32xi32>
    %60 = arith.sitofp %59 : vector<64x32xi32> to vector<64x32xf32>
    %cst_28 = arith.constant dense<0.000000e+00> : vector<64x16xf32>
    %61 = tpu.matmul %60, %36, %cst_28 {dimension_numbers = #tpu.dot_dimension_numbers<[1], [0], [0], [1], [0, 0, 1, 1], [], []>} : vector<64x32xf32>, vector<32x16xf32>, vector<64x16xf32> -> vector<64x16xf32>
    %62 = arith.addf %50, %61 : vector<64x16xf32>
    %c1_i32_29 = arith.constant 1 : i32
    %63 = vector.broadcast %c1_i32_29 : i32 to vector<64x32xi32>
    %64 = arith.shrsi %48, %63 : vector<64x32xi32>
    %65 = arith.cmpi eq, %49, %64 : vector<64x32xi32>
    %c1_i32_30 = arith.constant 1 : i32
    %66 = vector.broadcast %c1_i32_30 : i32 to vector<64x32xi32>
    %67 = arith.andi %48, %66 : vector<64x32xi32>
    %c1_i32_31 = arith.constant 1 : i32
    %68 = vector.broadcast %c1_i32_31 : i32 to vector<64x32xi32>
    %69 = arith.cmpi eq, %67, %68 : vector<64x32xi32>
    %70 = arith.andi %65, %69 : vector<64x32xi1>
    %71 = arith.extui %70 : vector<64x32xi1> to vector<64x32xi32>
    %72 = arith.sitofp %71 : vector<64x32xi32> to vector<64x32xf32>
    %cst_32 = arith.constant dense<0.000000e+00> : vector<64x16xf32>
    %73 = tpu.matmul %72, %47, %cst_32 {dimension_numbers = #tpu.dot_dimension_numbers<[1], [0], [0], [1], [0, 0, 1, 1], [], []>} : vector<64x32xf32>, vector<32x16xf32>, vector<64x16xf32> -> vector<64x16xf32>
    %74 = arith.addf %62, %73 : vector<64x16xf32>
    %75 = tpu.iota {dimensions = array<i32: 0>} : vector<64x64xi32>
    %76 = tpu.iota {dimensions = array<i32: 1>} : vector<64x64xi32>
    %c1_i32_33 = arith.constant 1 : i32
    %77 = vector.broadcast %c1_i32_33 : i32 to vector<64x64xi32>
    %78 = arith.subi %75, %77 : vector<64x64xi32>
    %79 = arith.cmpi eq, %76, %78 : vector<64x64xi32>
    %c31_i32 = arith.constant 31 : i32
    %80 = vector.broadcast %c31_i32 : i32 to vector<64x64xi32>
    %81 = arith.andi %75, %80 : vector<64x64xi32>
    %c0_i32_34 = arith.constant 0 : i32
    %82 = vector.broadcast %c0_i32_34 : i32 to vector<64x64xi32>
    %83 = arith.cmpi ne, %81, %82 : vector<64x64xi32>
    %84 = arith.andi %79, %83 : vector<64x64xi1>
    %85 = arith.extui %84 : vector<64x64xi1> to vector<64x64xi32>
    %86 = arith.sitofp %85 : vector<64x64xi32> to vector<64x64xf32>
    %c1_i32_35 = arith.constant 1 : i32
    %87 = vector.broadcast %c1_i32_35 : i32 to vector<64x64xi32>
    %88 = arith.addi %75, %87 : vector<64x64xi32>
    %89 = arith.cmpi eq, %76, %88 : vector<64x64xi32>
    %c31_i32_36 = arith.constant 31 : i32
    %90 = vector.broadcast %c31_i32_36 : i32 to vector<64x64xi32>
    %91 = arith.andi %75, %90 : vector<64x64xi32>
    %c31_i32_37 = arith.constant 31 : i32
    %92 = vector.broadcast %c31_i32_37 : i32 to vector<64x64xi32>
    %93 = arith.cmpi ne, %91, %92 : vector<64x64xi32>
    %94 = arith.andi %89, %93 : vector<64x64xi1>
    %95 = arith.extui %94 : vector<64x64xi1> to vector<64x64xi32>
    %96 = arith.sitofp %95 : vector<64x64xi32> to vector<64x64xf32>
    %cst_38 = arith.constant dense<0.000000e+00> : vector<64x16xf32>
    %97 = tpu.matmul %86, %74, %cst_38 {dimension_numbers = #tpu.dot_dimension_numbers<[1], [0], [0], [1], [0, 0, 1, 1], [], []>} : vector<64x64xf32>, vector<64x16xf32>, vector<64x16xf32> -> vector<64x16xf32>
    %cst_39 = arith.constant dense<0.000000e+00> : vector<64x16xf32>
    %98 = tpu.matmul %96, %74, %cst_39 {dimension_numbers = #tpu.dot_dimension_numbers<[1], [0], [0], [1], [0, 0, 1, 1], [], []>} : vector<64x64xf32>, vector<64x16xf32>, vector<64x16xf32> -> vector<64x16xf32>
    %c0_40 = arith.constant 0 : index
    %c0_41 = arith.constant 0 : index
    %c0_42 = arith.constant 0 : index
    %99 = vector.load %arg7[%c0_40, %c0_41, %c0_42] : memref<3x16x32xf32, #tpu.memory_space<vmem>>, vector<1x16x32xf32>
    %100 = vector.shape_cast %99 : vector<1x16x32xf32> to vector<16x32xf32>
    %cst_43 = arith.constant dense<0.000000e+00> : vector<64x32xf32>
    %101 = tpu.matmul %97, %100, %cst_43 {dimension_numbers = #tpu.dot_dimension_numbers<[1], [0], [0], [1], [0, 0, 1, 1], [], []>} : vector<64x16xf32>, vector<16x32xf32>, vector<64x32xf32> -> vector<64x32xf32>
    %c1_44 = arith.constant 1 : index
    %c0_45 = arith.constant 0 : index
    %c0_46 = arith.constant 0 : index
    %102 = vector.load %arg7[%c1_44, %c0_45, %c0_46] : memref<3x16x32xf32, #tpu.memory_space<vmem>>, vector<1x16x32xf32>
    %103 = vector.shape_cast %102 : vector<1x16x32xf32> to vector<16x32xf32>
    %cst_47 = arith.constant dense<0.000000e+00> : vector<64x32xf32>
    %104 = tpu.matmul %74, %103, %cst_47 {dimension_numbers = #tpu.dot_dimension_numbers<[1], [0], [0], [1], [0, 0, 1, 1], [], []>} : vector<64x16xf32>, vector<16x32xf32>, vector<64x32xf32> -> vector<64x32xf32>
    %105 = arith.addf %101, %104 : vector<64x32xf32>
    %c2 = arith.constant 2 : index
    %c0_48 = arith.constant 0 : index
    %c0_49 = arith.constant 0 : index
    %106 = vector.load %arg7[%c2, %c0_48, %c0_49] : memref<3x16x32xf32, #tpu.memory_space<vmem>>, vector<1x16x32xf32>
    %107 = vector.shape_cast %106 : vector<1x16x32xf32> to vector<16x32xf32>
    %cst_50 = arith.constant dense<0.000000e+00> : vector<64x32xf32>
    %108 = tpu.matmul %98, %107, %cst_50 {dimension_numbers = #tpu.dot_dimension_numbers<[1], [0], [0], [1], [0, 0, 1, 1], [], []>} : vector<64x16xf32>, vector<16x32xf32>, vector<64x32xf32> -> vector<64x32xf32>
    %109 = arith.addf %105, %108 : vector<64x32xf32>
    %110 = vector.extract_strided_slice %0 {offsets = [3, 0], sizes = [1, 32], strides = [1, 1]} : vector<16x128xf32> to vector<1x32xf32>
    %111 = vector.broadcast %110 : vector<1x32xf32> to vector<64x32xf32>
    %112 = arith.addf %109, %111 : vector<64x32xf32>
    %cst_51 = arith.constant 0.000000e+00 : f32
    %113 = vector.broadcast %cst_51 : f32 to vector<64x32xf32>
    %114 = arith.cmpf ogt, %112, %113 : vector<64x32xf32>
    %cst_52 = arith.constant 1.000000e-01 : f32
    %115 = vector.broadcast %cst_52 : f32 to vector<64x32xf32>
    %116 = arith.mulf %115, %112 : vector<64x32xf32>
    %117 = arith.select %114, %112, %116 : vector<64x32xi1>, vector<64x32xf32>
    %c0_53 = arith.constant 0 : index
    %c0_54 = arith.constant 0 : index
    %c0_55 = arith.constant 0 : index
    %118 = vector.load %arg8[%c0_53, %c0_54, %c0_55] : memref<4x32x32xf32, #tpu.memory_space<vmem>>, vector<1x32x32xf32>
    %119 = vector.shape_cast %118 : vector<1x32x32xf32> to vector<32x32xf32>
    %cst_56 = arith.constant dense<0.000000e+00> : vector<64x32xf32>
    %120 = tpu.matmul %117, %119, %cst_56 {dimension_numbers = #tpu.dot_dimension_numbers<[1], [0], [0], [1], [0, 0, 1, 1], [], []>} : vector<64x32xf32>, vector<32x32xf32>, vector<64x32xf32> -> vector<64x32xf32>
    %121 = vector.extract_strided_slice %0 {offsets = [4, 0], sizes = [1, 32], strides = [1, 1]} : vector<16x128xf32> to vector<1x32xf32>
    %122 = vector.broadcast %121 : vector<1x32xf32> to vector<64x32xf32>
    %123 = arith.addf %120, %122 : vector<64x32xf32>
    %cst_57 = arith.constant 0.000000e+00 : f32
    %124 = vector.broadcast %cst_57 : f32 to vector<64x32xf32>
    %125 = arith.cmpf ogt, %123, %124 : vector<64x32xf32>
    %cst_58 = arith.constant 1.000000e-01 : f32
    %126 = vector.broadcast %cst_58 : f32 to vector<64x32xf32>
    %127 = arith.mulf %126, %123 : vector<64x32xf32>
    %128 = arith.select %125, %123, %127 : vector<64x32xi1>, vector<64x32xf32>
    %c1_59 = arith.constant 1 : index
    %c0_60 = arith.constant 0 : index
    %c0_61 = arith.constant 0 : index
    %129 = vector.load %arg8[%c1_59, %c0_60, %c0_61] : memref<4x32x32xf32, #tpu.memory_space<vmem>>, vector<1x32x32xf32>
    %130 = vector.shape_cast %129 : vector<1x32x32xf32> to vector<32x32xf32>
    %cst_62 = arith.constant dense<0.000000e+00> : vector<64x32xf32>
    %131 = tpu.matmul %117, %130, %cst_62 {dimension_numbers = #tpu.dot_dimension_numbers<[1], [0], [0], [1], [0, 0, 1, 1], [], []>} : vector<64x32xf32>, vector<32x32xf32>, vector<64x32xf32> -> vector<64x32xf32>
    %132 = vector.extract_strided_slice %0 {offsets = [5, 0], sizes = [1, 32], strides = [1, 1]} : vector<16x128xf32> to vector<1x32xf32>
    %133 = vector.broadcast %132 : vector<1x32xf32> to vector<64x32xf32>
    %134 = arith.addf %131, %133 : vector<64x32xf32>
    %cst_63 = arith.constant 0.000000e+00 : f32
    %135 = vector.broadcast %cst_63 : f32 to vector<64x32xf32>
    %136 = arith.cmpf ogt, %134, %135 : vector<64x32xf32>
    %cst_64 = arith.constant 1.000000e-01 : f32
    %137 = vector.broadcast %cst_64 : f32 to vector<64x32xf32>
    %138 = arith.mulf %137, %134 : vector<64x32xf32>
    %139 = arith.select %136, %134, %138 : vector<64x32xi1>, vector<64x32xf32>
    %c2_65 = arith.constant 2 : index
    %c0_66 = arith.constant 0 : index
    %c0_67 = arith.constant 0 : index
    %140 = vector.load %arg8[%c2_65, %c0_66, %c0_67] : memref<4x32x32xf32, #tpu.memory_space<vmem>>, vector<1x32x32xf32>
    %141 = vector.shape_cast %140 : vector<1x32x32xf32> to vector<32x32xf32>
    %cst_68 = arith.constant dense<0.000000e+00> : vector<64x32xf32>
    %142 = tpu.matmul %117, %141, %cst_68 {dimension_numbers = #tpu.dot_dimension_numbers<[1], [0], [0], [1], [0, 0, 1, 1], [], []>} : vector<64x32xf32>, vector<32x32xf32>, vector<64x32xf32> -> vector<64x32xf32>
    %143 = vector.extract_strided_slice %0 {offsets = [6, 0], sizes = [1, 32], strides = [1, 1]} : vector<16x128xf32> to vector<1x32xf32>
    %144 = vector.broadcast %143 : vector<1x32xf32> to vector<64x32xf32>
    %145 = arith.addf %142, %144 : vector<64x32xf32>
    %cst_69 = arith.constant 0.000000e+00 : f32
    %146 = vector.broadcast %cst_69 : f32 to vector<64x32xf32>
    %147 = arith.cmpf ogt, %145, %146 : vector<64x32xf32>
    %cst_70 = arith.constant 1.000000e-01 : f32
    %148 = vector.broadcast %cst_70 : f32 to vector<64x32xf32>
    %149 = arith.mulf %148, %145 : vector<64x32xf32>
    %150 = arith.select %147, %145, %149 : vector<64x32xi1>, vector<64x32xf32>
    %c3 = arith.constant 3 : index
    %c0_71 = arith.constant 0 : index
    %c0_72 = arith.constant 0 : index
    %151 = vector.load %arg8[%c3, %c0_71, %c0_72] : memref<4x32x32xf32, #tpu.memory_space<vmem>>, vector<1x32x32xf32>
    %152 = vector.shape_cast %151 : vector<1x32x32xf32> to vector<32x32xf32>
    %cst_73 = arith.constant dense<0.000000e+00> : vector<64x32xf32>
    %153 = tpu.matmul %117, %152, %cst_73 {dimension_numbers = #tpu.dot_dimension_numbers<[1], [0], [0], [1], [0, 0, 1, 1], [], []>} : vector<64x32xf32>, vector<32x32xf32>, vector<64x32xf32> -> vector<64x32xf32>
    %154 = vector.extract_strided_slice %0 {offsets = [7, 0], sizes = [1, 32], strides = [1, 1]} : vector<16x128xf32> to vector<1x32xf32>
    %155 = vector.broadcast %154 : vector<1x32xf32> to vector<64x32xf32>
    %156 = arith.addf %153, %155 : vector<64x32xf32>
    %cst_74 = arith.constant 0.000000e+00 : f32
    %157 = vector.broadcast %cst_74 : f32 to vector<64x32xf32>
    %158 = arith.cmpf ogt, %156, %157 : vector<64x32xf32>
    %cst_75 = arith.constant 1.000000e-01 : f32
    %159 = vector.broadcast %cst_75 : f32 to vector<64x32xf32>
    %160 = arith.mulf %159, %156 : vector<64x32xf32>
    %161 = arith.select %158, %156, %160 : vector<64x32xi1>, vector<64x32xf32>
    %162 = tpu.iota {dimensions = array<i32: 0>} : vector<256x64xi32>
    %163 = tpu.iota {dimensions = array<i32: 1>} : vector<256x64xi32>
    %cst_76 = arith.constant 0.000000e+00 : f32
    %164 = vector.broadcast %cst_76 : f32 to vector<256x32xf32>
    %c2_i32 = arith.constant 2 : i32
    %165 = vector.broadcast %c2_i32 : i32 to vector<256x64xi32>
    %166 = arith.shrsi %162, %165 : vector<256x64xi32>
    %167 = arith.cmpi eq, %163, %166 : vector<256x64xi32>
    %c3_i32 = arith.constant 3 : i32
    %168 = vector.broadcast %c3_i32 : i32 to vector<256x64xi32>
    %169 = arith.andi %162, %168 : vector<256x64xi32>
    %c0_i32_77 = arith.constant 0 : i32
    %170 = vector.broadcast %c0_i32_77 : i32 to vector<256x64xi32>
    %171 = arith.cmpi eq, %169, %170 : vector<256x64xi32>
    %172 = arith.andi %167, %171 : vector<256x64xi1>
    %173 = arith.extui %172 : vector<256x64xi1> to vector<256x64xi32>
    %174 = arith.sitofp %173 : vector<256x64xi32> to vector<256x64xf32>
    %cst_78 = arith.constant dense<0.000000e+00> : vector<256x32xf32>
    %175 = tpu.matmul %174, %128, %cst_78 {dimension_numbers = #tpu.dot_dimension_numbers<[1], [0], [0], [1], [0, 0, 1, 1], [], []>} : vector<256x64xf32>, vector<64x32xf32>, vector<256x32xf32> -> vector<256x32xf32>
    %176 = arith.addf %164, %175 : vector<256x32xf32>
    %c2_i32_79 = arith.constant 2 : i32
    %177 = vector.broadcast %c2_i32_79 : i32 to vector<256x64xi32>
    %178 = arith.shrsi %162, %177 : vector<256x64xi32>
    %179 = arith.cmpi eq, %163, %178 : vector<256x64xi32>
    %c3_i32_80 = arith.constant 3 : i32
    %180 = vector.broadcast %c3_i32_80 : i32 to vector<256x64xi32>
    %181 = arith.andi %162, %180 : vector<256x64xi32>
    %c1_i32_81 = arith.constant 1 : i32
    %182 = vector.broadcast %c1_i32_81 : i32 to vector<256x64xi32>
    %183 = arith.cmpi eq, %181, %182 : vector<256x64xi32>
    %184 = arith.andi %179, %183 : vector<256x64xi1>
    %185 = arith.extui %184 : vector<256x64xi1> to vector<256x64xi32>
    %186 = arith.sitofp %185 : vector<256x64xi32> to vector<256x64xf32>
    %cst_82 = arith.constant dense<0.000000e+00> : vector<256x32xf32>
    %187 = tpu.matmul %186, %139, %cst_82 {dimension_numbers = #tpu.dot_dimension_numbers<[1], [0], [0], [1], [0, 0, 1, 1], [], []>} : vector<256x64xf32>, vector<64x32xf32>, vector<256x32xf32> -> vector<256x32xf32>
    %188 = arith.addf %176, %187 : vector<256x32xf32>
    %c2_i32_83 = arith.constant 2 : i32
    %189 = vector.broadcast %c2_i32_83 : i32 to vector<256x64xi32>
    %190 = arith.shrsi %162, %189 : vector<256x64xi32>
    %191 = arith.cmpi eq, %163, %190 : vector<256x64xi32>
    %c3_i32_84 = arith.constant 3 : i32
    %192 = vector.broadcast %c3_i32_84 : i32 to vector<256x64xi32>
    %193 = arith.andi %162, %192 : vector<256x64xi32>
    %c2_i32_85 = arith.constant 2 : i32
    %194 = vector.broadcast %c2_i32_85 : i32 to vector<256x64xi32>
    %195 = arith.cmpi eq, %193, %194 : vector<256x64xi32>
    %196 = arith.andi %191, %195 : vector<256x64xi1>
    %197 = arith.extui %196 : vector<256x64xi1> to vector<256x64xi32>
    %198 = arith.sitofp %197 : vector<256x64xi32> to vector<256x64xf32>
    %cst_86 = arith.constant dense<0.000000e+00> : vector<256x32xf32>
    %199 = tpu.matmul %198, %150, %cst_86 {dimension_numbers = #tpu.dot_dimension_numbers<[1], [0], [0], [1], [0, 0, 1, 1], [], []>} : vector<256x64xf32>, vector<64x32xf32>, vector<256x32xf32> -> vector<256x32xf32>
    %200 = arith.addf %188, %199 : vector<256x32xf32>
    %c2_i32_87 = arith.constant 2 : i32
    %201 = vector.broadcast %c2_i32_87 : i32 to vector<256x64xi32>
    %202 = arith.shrsi %162, %201 : vector<256x64xi32>
    %203 = arith.cmpi eq, %163, %202 : vector<256x64xi32>
    %c3_i32_88 = arith.constant 3 : i32
    %204 = vector.broadcast %c3_i32_88 : i32 to vector<256x64xi32>
    %205 = arith.andi %162, %204 : vector<256x64xi32>
    %c3_i32_89 = arith.constant 3 : i32
    %206 = vector.broadcast %c3_i32_89 : i32 to vector<256x64xi32>
    %207 = arith.cmpi eq, %205, %206 : vector<256x64xi32>
    %208 = arith.andi %203, %207 : vector<256x64xi1>
    %209 = arith.extui %208 : vector<256x64xi1> to vector<256x64xi32>
    %210 = arith.sitofp %209 : vector<256x64xi32> to vector<256x64xf32>
    %cst_90 = arith.constant dense<0.000000e+00> : vector<256x32xf32>
    %211 = tpu.matmul %210, %161, %cst_90 {dimension_numbers = #tpu.dot_dimension_numbers<[1], [0], [0], [1], [0, 0, 1, 1], [], []>} : vector<256x64xf32>, vector<64x32xf32>, vector<256x32xf32> -> vector<256x32xf32>
    %212 = arith.addf %200, %211 : vector<256x32xf32>
    %213 = tpu.iota {dimensions = array<i32: 0>} : vector<256x256xi32>
    %214 = tpu.iota {dimensions = array<i32: 1>} : vector<256x256xi32>
    %c1_i32_91 = arith.constant 1 : i32
    %215 = vector.broadcast %c1_i32_91 : i32 to vector<256x256xi32>
    %216 = arith.subi %213, %215 : vector<256x256xi32>
    %217 = arith.cmpi eq, %214, %216 : vector<256x256xi32>
    %c127_i32 = arith.constant 127 : i32
    %218 = vector.broadcast %c127_i32 : i32 to vector<256x256xi32>
    %219 = arith.andi %213, %218 : vector<256x256xi32>
    %c0_i32_92 = arith.constant 0 : i32
    %220 = vector.broadcast %c0_i32_92 : i32 to vector<256x256xi32>
    %221 = arith.cmpi ne, %219, %220 : vector<256x256xi32>
    %222 = arith.andi %217, %221 : vector<256x256xi1>
    %223 = arith.extui %222 : vector<256x256xi1> to vector<256x256xi32>
    %224 = arith.sitofp %223 : vector<256x256xi32> to vector<256x256xf32>
    %c1_i32_93 = arith.constant 1 : i32
    %225 = vector.broadcast %c1_i32_93 : i32 to vector<256x256xi32>
    %226 = arith.addi %213, %225 : vector<256x256xi32>
    %227 = arith.cmpi eq, %214, %226 : vector<256x256xi32>
    %c127_i32_94 = arith.constant 127 : i32
    %228 = vector.broadcast %c127_i32_94 : i32 to vector<256x256xi32>
    %229 = arith.andi %213, %228 : vector<256x256xi32>
    %c127_i32_95 = arith.constant 127 : i32
    %230 = vector.broadcast %c127_i32_95 : i32 to vector<256x256xi32>
    %231 = arith.cmpi ne, %229, %230 : vector<256x256xi32>
    %232 = arith.andi %227, %231 : vector<256x256xi1>
    %233 = arith.extui %232 : vector<256x256xi1> to vector<256x256xi32>
    %234 = arith.sitofp %233 : vector<256x256xi32> to vector<256x256xf32>
    %cst_96 = arith.constant dense<0.000000e+00> : vector<256x32xf32>
    %235 = tpu.matmul %224, %212, %cst_96 {dimension_numbers = #tpu.dot_dimension_numbers<[1], [0], [0], [1], [0, 0, 1, 1], [], []>} : vector<256x256xf32>, vector<256x32xf32>, vector<256x32xf32> -> vector<256x32xf32>
    %cst_97 = arith.constant dense<0.000000e+00> : vector<256x32xf32>
    %236 = tpu.matmul %234, %212, %cst_97 {dimension_numbers = #tpu.dot_dimension_numbers<[1], [0], [0], [1], [0, 0, 1, 1], [], []>} : vector<256x256xf32>, vector<256x32xf32>, vector<256x32xf32> -> vector<256x32xf32>
    %c0_98 = arith.constant 0 : index
    %c0_99 = arith.constant 0 : index
    %c0_100 = arith.constant 0 : index
    %237 = vector.load %arg9[%c0_98, %c0_99, %c0_100] : memref<3x32x1xf32, #tpu.memory_space<vmem>>, vector<1x32x1xf32>
    %238 = vector.shape_cast %237 : vector<1x32x1xf32> to vector<32x1xf32>
    %cst_101 = arith.constant dense<0.000000e+00> : vector<256x1xf32>
    %239 = tpu.matmul %235, %238, %cst_101 {dimension_numbers = #tpu.dot_dimension_numbers<[1], [0], [0], [1], [0, 0, 1, 1], [], []>} : vector<256x32xf32>, vector<32x1xf32>, vector<256x1xf32> -> vector<256x1xf32>
    %c1_102 = arith.constant 1 : index
    %c0_103 = arith.constant 0 : index
    %c0_104 = arith.constant 0 : index
    %240 = vector.load %arg9[%c1_102, %c0_103, %c0_104] : memref<3x32x1xf32, #tpu.memory_space<vmem>>, vector<1x32x1xf32>
    %241 = vector.shape_cast %240 : vector<1x32x1xf32> to vector<32x1xf32>
    %cst_105 = arith.constant dense<0.000000e+00> : vector<256x1xf32>
    %242 = tpu.matmul %212, %241, %cst_105 {dimension_numbers = #tpu.dot_dimension_numbers<[1], [0], [0], [1], [0, 0, 1, 1], [], []>} : vector<256x32xf32>, vector<32x1xf32>, vector<256x1xf32> -> vector<256x1xf32>
    %243 = arith.addf %239, %242 : vector<256x1xf32>
    %c2_106 = arith.constant 2 : index
    %c0_107 = arith.constant 0 : index
    %c0_108 = arith.constant 0 : index
    %244 = vector.load %arg9[%c2_106, %c0_107, %c0_108] : memref<3x32x1xf32, #tpu.memory_space<vmem>>, vector<1x32x1xf32>
    %245 = vector.shape_cast %244 : vector<1x32x1xf32> to vector<32x1xf32>
    %cst_109 = arith.constant dense<0.000000e+00> : vector<256x1xf32>
    %246 = tpu.matmul %236, %245, %cst_109 {dimension_numbers = #tpu.dot_dimension_numbers<[1], [0], [0], [1], [0, 0, 1, 1], [], []>} : vector<256x32xf32>, vector<32x1xf32>, vector<256x1xf32> -> vector<256x1xf32>
    %247 = arith.addf %243, %246 : vector<256x1xf32>
    %248 = vector.extract_strided_slice %0 {offsets = [8, 0], sizes = [1, 1], strides = [1, 1]} : vector<16x128xf32> to vector<1x1xf32>
    %249 = vector.broadcast %248 : vector<1x1xf32> to vector<256x1xf32>
    %250 = arith.addf %247, %249 : vector<256x1xf32>
    %251 = tpu.iota {dimensions = array<i32: 1>} : vector<2x256xi32>
    %c7_i32 = arith.constant 7 : i32
    %252 = vector.broadcast %c7_i32 : i32 to vector<2x256xi32>
    %253 = arith.shrsi %251, %252 : vector<2x256xi32>
    %254 = tpu.iota {dimensions = array<i32: 0>} : vector<2x256xi32>
    %255 = arith.cmpi eq, %253, %254 : vector<2x256xi32>
    %256 = arith.extui %255 : vector<2x256xi1> to vector<2x256xi32>
    %257 = arith.sitofp %256 : vector<2x256xi32> to vector<2x256xf32>
    %258 = tpu.iota {dimensions = array<i32: 0>} : vector<256x128xi32>
    %c127_i32_110 = arith.constant 127 : i32
    %259 = vector.broadcast %c127_i32_110 : i32 to vector<256x128xi32>
    %260 = arith.andi %258, %259 : vector<256x128xi32>
    %261 = tpu.iota {dimensions = array<i32: 1>} : vector<256x128xi32>
    %262 = arith.cmpi eq, %260, %261 : vector<256x128xi32>
    %263 = arith.extui %262 : vector<256x128xi1> to vector<256x128xi32>
    %264 = arith.sitofp %263 : vector<256x128xi32> to vector<256x128xf32>
    %265 = vector.broadcast %250 : vector<256x1xf32> to vector<256x128xf32>
    %266 = arith.mulf %265, %264 : vector<256x128xf32>
    %cst_111 = arith.constant dense<0.000000e+00> : vector<2x128xf32>
    %267 = tpu.matmul %257, %266, %cst_111 {dimension_numbers = #tpu.dot_dimension_numbers<[1], [0], [0], [1], [0, 0, 1, 1], [], []>} : vector<2x256xf32>, vector<256x128xf32>, vector<2x128xf32> -> vector<2x128xf32>
    %268 = math.tanh %267 : vector<2x128xf32>
    %c0_112 = arith.constant 0 : index
    %c0_113 = arith.constant 0 : index
    %269 = vector.load %arg11[%c0_112, %c0_113] : memref<2x128xf32, #tpu.memory_space<vmem>>, vector<2x128xf32>
    tpu.vector_store %arg11[%c0_112, %c0_113], %268 {strides = array<i32>} : memref<2x128xf32, #tpu.memory_space<vmem>>, vector<2x128xf32>,
    return
  }
  func.func @transform_0(%arg0: i32) -> (i32, i32) {
    %c0_i32 = arith.constant 0 : i32
    %c0_i32_0 = arith.constant 0 : i32
    %c0_i32_1 = arith.constant 0 : i32
    return %c0_i32, %c0_i32_0 : i32, i32
  }
  func.func @transform_1(%arg0: i32) -> (i32, i32) {
    %c0_i32 = arith.constant 0 : i32
    %c0_i32_0 = arith.constant 0 : i32
    %c0_i32_1 = arith.constant 0 : i32
    return %c0_i32, %c0_i32_0 : i32, i32
  }
  func.func @transform_2(%arg0: i32) -> (i32, i32) {
    %c0_i32 = arith.constant 0 : i32
    %c0_i32_0 = arith.constant 0 : i32
    %c0_i32_1 = arith.constant 0 : i32
    return %c0_i32, %c0_i32_0 : i32, i32
  }
  func.func @transform_3(%arg0: i32) -> (i32, i32) {
    %c0_i32 = arith.constant 0 : i32
    %c0_i32_0 = arith.constant 0 : i32
    %c0_i32_1 = arith.constant 0 : i32
    return %c0_i32, %c0_i32_0 : i32, i32
  }
  func.func @transform_4(%arg0: i32) -> (i32, i32) {
    %c0_i32 = arith.constant 0 : i32
    %c0_i32_0 = arith.constant 0 : i32
    %c0_i32_1 = arith.constant 0 : i32
    return %c0_i32, %c0_i32_0 : i32, i32
  }
  func.func @transform_5(%arg0: i32) -> (i32, i32, i32) {
    %c0_i32 = arith.constant 0 : i32
    %c0_i32_0 = arith.constant 0 : i32
    %c0_i32_1 = arith.constant 0 : i32
    %c0_i32_2 = arith.constant 0 : i32
    return %c0_i32, %c0_i32_0, %c0_i32_1 : i32, i32, i32
  }
  func.func @transform_6(%arg0: i32) -> (i32, i32, i32) {
    %c0_i32 = arith.constant 0 : i32
    %c0_i32_0 = arith.constant 0 : i32
    %c0_i32_1 = arith.constant 0 : i32
    %c0_i32_2 = arith.constant 0 : i32
    return %c0_i32, %c0_i32_0, %c0_i32_1 : i32, i32, i32
  }
  func.func @transform_7(%arg0: i32) -> (i32, i32, i32) {
    %c0_i32 = arith.constant 0 : i32
    %c0_i32_0 = arith.constant 0 : i32
    %c0_i32_1 = arith.constant 0 : i32
    %c0_i32_2 = arith.constant 0 : i32
    return %c0_i32, %c0_i32_0, %c0_i32_1 : i32, i32, i32
  }
  func.func @transform_8(%arg0: i32) -> (i32, i32, i32) {
    %c0_i32 = arith.constant 0 : i32
    %c0_i32_0 = arith.constant 0 : i32
    %c0_i32_1 = arith.constant 0 : i32
    %c0_i32_2 = arith.constant 0 : i32
    return %c0_i32, %c0_i32_0, %c0_i32_1 : i32, i32, i32
  }
  func.func @transform_9(%arg0: i32) -> (i32, i32) {
    %c0_i32 = arith.constant 0 : i32
    %c0_i32_0 = arith.constant 0 : i32
    %c0_i32_1 = arith.constant 0 : i32
    return %c0_i32, %c0_i32_0 : i32, i32
  }
  func.func @transform_10(%arg0: i32) -> (i32, i32) {
    %c0_i32 = arith.constant 0 : i32
    %c0_i32_0 = arith.constant 0 : i32
    %c0_i32_1 = arith.constant 0 : i32
    return %c0_i32, %c0_i32_0 : i32, i32
  }
}

</mosaic_0001>

<llo_original>
// kernel: baseline_inference.1
$region0: #{baseline_inference.1}
  #allocation0 [shape = 'u32[]', space=smem, size = 0x4, offset = 0x4, fixed_abs, tag = 'smem constant byte address 0x4 - core index']
  #allocation1 [shape = 'u32[72,128]{1,0:T(1,128)}', space=vmem, size = 0x9000, scoped, tag = 'internal scratch']
  %s0 = inlined_call_operand.vmem [shape: f32[32,16], index: 0, kind: input, shape index: {}]
  %s1 = inlined_call_operand.vmem [shape: f32[32,32], index: 1, kind: input, shape index: {}]
  %s2 = inlined_call_operand.vmem [shape: f32[16,32], index: 2, kind: input, shape index: {}]
  %s3 = inlined_call_operand.vmem [shape: f32[32,16], index: 3, kind: input, shape index: {}]
  %s4 = inlined_call_operand.vmem [shape: f32[16,32], index: 4, kind: input, shape index: {}]
  %s5 = inlined_call_operand.vmem [shape: f32[2,32,16], index: 5, kind: input, shape index: {}]
  %s6 = inlined_call_operand.vmem [shape: f32[3,16,32], index: 6, kind: input, shape index: {}]
  %s7 = inlined_call_operand.vmem [shape: f32[4,32,32], index: 7, kind: input, shape index: {}]
  %s8 = inlined_call_operand.vmem [shape: f32[3,32,1], index: 8, kind: input, shape index: {}]
  %s9 = inlined_call_operand.vmem [shape: f32[16,128], index: 9, kind: input, shape index: {}]
  %s10 = inlined_call_operand.hbm [shape: f32[2,128], index: 10, kind: output, shape index: {}]
  %s11 = sld [smem:[#allocation0]]
  $region50: #{baseline_inference.1} parent=0
    _
  %s13 = ssub.s32 1, %s11
  %s14 = scalar_select 0, %s13, %s11
  $region1: #{baseline_inference.1} parent=0
    #allocation2 [shape = 'u8[1024]{0}', space=vmem, size = 0x400, scoped, tag = 'output window, operand 0, single buffered']
    #allocation3 [shape = 's32[1]{0}', space=sflag, size = 0x4, scoped, tag = 'scoped memory for baseline_inference.1']
    %15 = vsyncpa [#allocation3], 0
    // Predicated region
    $region2: #{baseline_inference.1} parent=1 // pred_check
      _
    $region3: #{baseline_inference.1} parent=1 // pred_check_branch
      %17 = sbr.rel (0) target = $region5
    $region4: #{baseline_inference.1} parent=1 // pred_region
      _
    $region5: #{baseline_inference.1} parent=1 // pred_fallthru
      _
    // Predicated region
    $region6: #{baseline_inference.1} parent=1 // pred_check
      _
    $region7: #{baseline_inference.1} parent=1 // pred_check_branch
      %19 = sbr.rel (0) target = $region9
    $region8: #{baseline_inference.1} parent=1 // pred_region
      _
    $region9: #{baseline_inference.1} parent=1 // pred_fallthru
      _
    // Predicated region
    $region10: #{baseline_inference.1} parent=1 // pred_check
      _
    $region11: #{baseline_inference.1} parent=1 // pred_check_branch
      %21 = sbr.rel (0) target = $region13
    $region12: #{baseline_inference.1} parent=1 // pred_region
      _
    $region13: #{baseline_inference.1} parent=1 // pred_fallthru
      _
    // Predicated region
    $region14: #{baseline_inference.1} parent=1 // pred_check
      _
    $region15: #{baseline_inference.1} parent=1 // pred_check_branch
      %23 = sbr.rel (0) target = $region17
    $region16: #{baseline_inference.1} parent=1 // pred_region
      _
    $region17: #{baseline_inference.1} parent=1 // pred_fallthru
      _
    // Predicated region
    $region18: #{baseline_inference.1} parent=1 // pred_check
      _
    $region19: #{baseline_inference.1} parent=1 // pred_check_branch
      %25 = sbr.rel (0) target = $region21
    $region20: #{baseline_inference.1} parent=1 // pred_region
      _
    $region21: #{baseline_inference.1} parent=1 // pred_fallthru
      _
    // Predicated region
    $region22: #{baseline_inference.1} parent=1 // pred_check
      _
    $region23: #{baseline_inference.1} parent=1 // pred_check_branch
      %27 = sbr.rel (0) target = $region25
    $region24: #{baseline_inference.1} parent=1 // pred_region
      _
    $region25: #{baseline_inference.1} parent=1 // pred_fallthru
      _
    // Predicated region
    $region26: #{baseline_inference.1} parent=1 // pred_check
      _
    $region27: #{baseline_inference.1} parent=1 // pred_check_branch
      %29 = sbr.rel (0) target = $region29
    $region28: #{baseline_inference.1} parent=1 // pred_region
      _
    $region29: #{baseline_inference.1} parent=1 // pred_fallthru
      _
    // Predicated region
    $region30: #{baseline_inference.1} parent=1 // pred_check
      _
    $region31: #{baseline_inference.1} parent=1 // pred_check_branch
      %31 = sbr.rel (0) target = $region33
    $region32: #{baseline_inference.1} parent=1 // pred_region
      _
    $region33: #{baseline_inference.1} parent=1 // pred_fallthru
      _
    // Predicated region
    $region34: #{baseline_inference.1} parent=1 // pred_check
      _
    $region35: #{baseline_inference.1} parent=1 // pred_check_branch
      %33 = sbr.rel (0) target = $region37
    $region36: #{baseline_inference.1} parent=1 // pred_region
      _
    $region37: #{baseline_inference.1} parent=1 // pred_fallthru
      _
    // Predicated region
    $region38: #{baseline_inference.1} parent=1 // pred_check
      _
    $region39: #{baseline_inference.1} parent=1 // pred_check_branch
      %35 = sbr.rel (0) target = $region41
    $region40: #{baseline_inference.1} parent=1 // pred_region
      _
    $region41: #{baseline_inference.1} parent=1 // pred_fallthru
      _
    %v36 = vld [vmem:[%s9] sm:$0xff]
    %v37 = vld [vmem:[%s9 + $0x8] sm:$0xff]
    %v38 = vld [vmem:[%s0] sm:$0xff]
    %v39 = vld [vmem:[%s0 + $0x8] sm:$0xff]
    %v40 = vld [vmem:[%s0 + $0x10] sm:$0xff]
    %v41 = vld [vmem:[%s0 + $0x18] sm:$0xff]
    %v42 = vld [vmem:[%s2] sm:$0xff]
    %v43 = vld [vmem:[%s2 + $0x8] sm:$0xff]
    %v44 = vld [vmem:[%s1] sm:$0xff]
    %v45 = vld [vmem:[%s1 + $0x8] sm:$0xff]
    %v46 = vld [vmem:[%s1 + $0x10] sm:$0xff]
    %v47 = vld [vmem:[%s1 + $0x18] sm:$0xff]
    %vm48 = vcmask 130048
    %v50 = vsel %vm48, %v38, 0
    %v53 = vsel %vm48, %v39, 0
    %v56 = vsel %vm48, %v40, 0
    %v59 = vsel %vm48, %v41, 0
    %61 = vmatpush.msra.mxu0 0.0
    %62 = vmatpush.msra.mxu0 0.0
    %63 = vmatpush.msra.mxu0 0.0
    %64 = vmatpush.msra.mxu0 0.0
    %65 = vmatpush.msra.mxu0 0.0
    %66 = vmatpush.msra.mxu0 0.0
    %67 = vmatpush.msra.mxu0 0.0
    %68 = vmatpush.msra.mxu0 0.0
    %69 = vmatpush.msra.mxu0 0.0
    %70 = vmatpush.msra.mxu0 0.0
    %71 = vmatpush.msra.mxu0 0.0
    %72 = vmatpush.msra.mxu0 0.0
    %73 = vmatpush.msra.mxu0 0.0
    %74 = vmatpush.msra.mxu0 0.0
    %75 = vmatpush.msra.mxu0 %v43
    %76 = vmatpush.msra.mxu0 %v42
    %77 = vmatmul.f32.gmra.mxu0 %v50
    %v78 = vpop.f32.mrf.mxu0
    %v79 = vadd.f32 %v44, %v78
    %80 = vmatmul.f32.gmra.mxu0 %v53
    %v81 = vpop.f32.mrf.mxu0
    %v82 = vadd.f32 %v45, %v81
    %83 = vmatmul.f32.gmra.mxu0 %v56
    %v84 = vpop.f32.mrf.mxu0
    %v85 = vadd.f32 %v46, %v84
    %86 = vmatmul.f32.gmra.mxu0 %v59
    %v87 = vpop.f32.mrf.mxu0
    %v88 = vadd.f32 %v47, %v87
    %89 = vdwg.mxu0
    %v90 = vld [vmem:[%s3] sm:$0xff]
    %v91 = vld [vmem:[%s3 + $0x8] sm:$0xff]
    %v92 = vld [vmem:[%s3 + $0x10] sm:$0xff]
    %v93 = vld [vmem:[%s3 + $0x18] sm:$0xff]
    %v94 = vperm.slane %v36, 0
    %vm95 = vcmask 261120
    %v97 = vsel %vm95, %v79, 0
    %v100 = vsel %vm95, %v82, 0
    %v103 = vsel %vm95, %v85, 0
    %v106 = vsel %vm95, %v88, 0
    %108 = vmatpush.msra.mxu0 0.0
    %109 = vmatpush.msra.mxu0 0.0
    %110 = vmatpush.msra.mxu0 0.0
    %111 = vmatpush.msra.mxu0 0.0
    %112 = vmatpush.msra.mxu0 0.0
    %113 = vmatpush.msra.mxu0 0.0
    %114 = vmatpush.msra.mxu0 0.0
    %115 = vmatpush.msra.mxu0 0.0
    %116 = vmatpush.msra.mxu0 0.0
    %117 = vmatpush.msra.mxu0 0.0
    %118 = vmatpush.msra.mxu0 0.0
    %119 = vmatpush.msra.mxu0 0.0
    %120 = vmatpush.msra.mxu0 %v93
    %121 = vmatpush.msra.mxu0 %v92
    %122 = vmatpush.msra.mxu0 %v91
    %123 = vmatpush.msra.mxu0 %v90
    %124 = vmatmul.f32.gmra.mxu0 %v97
    %v125 = vpop.f32.mrf.mxu0
    %v126 = vadd.f32 %v94, %v125
    %127 = vmatmul.f32.gmra.mxu0 %v100
    %v128 = vpop.f32.mrf.mxu0
    %v129 = vadd.f32 %v94, %v128
    %130 = vmatmul.f32.gmra.mxu0 %v103
    %v131 = vpop.f32.mrf.mxu0
    %v132 = vadd.f32 %v94, %v131
    %133 = vmatmul.f32.gmra.mxu0 %v106
    %v134 = vpop.f32.mrf.mxu0
    %v135 = vadd.f32 %v94, %v134
    %136 = vdwg.mxu0
    %v137 = vsel %vm48, %v126, -inf
    %138 = vmax.xlane.f32.xlu0 %v137
    %v139 = vpop.xlane.xlu0 %138
    %v140 = vsel %vm48, %v129, -inf
    %141 = vmax.xlane.f32.xlu0 %v140
    %v142 = vpop.xlane.xlu0 %141
    %v143 = vsel %vm48, %v132, -inf
    %144 = vmax.xlane.f32.xlu0 %v143
    %v145 = vpop.xlane.xlu0 %144
    %v146 = vsel %vm48, %v135, -inf
    %147 = vmax.xlane.f32.xlu0 %v146
    %v148 = vpop.xlane.xlu0 %147
    %v149 = vlaneseq
    %v150 = vand.u32 %v149, 127
    %vm151 = vcmp.ge.f32.partialorder %v126, %v139
    %vm152 = vcmp.ge.f32.partialorder %v129, %v142
    %vm153 = vcmp.ge.f32.partialorder %v132, %v145
    %vm154 = vcmp.ge.f32.partialorder %v135, %v148
    %v155 = vsel %vm151, %v150, 16
    %v156 = vsel %vm152, %v150, 16
    %v157 = vsel %vm153, %v150, 16
    %v158 = vsel %vm154, %v150, 16
    %v159 = vsel %vm48, %v155, 2147483647
    %v160 = vand.u32 %v159, 65535
    %v161 = vshra.s32 %v159, 16
    %v162 = vcvt.s32.f32 %v160
    %v163 = vcvt.s32.f32 %v161
    %164 = vmin.xlane.f32.xlu0 %v163
    %v165 = vpop.xlane.xlu0 %164
    %vm166 = vcmp.eq.f32.partialorder %v163, %v165
    %v167 = vsel %vm166, %v162, inf
    %168 = vmin.xlane.f32.xlu0 %v167
    %v169 = vpop.xlane.xlu0 %168
    %v170 = vcvt.f32.s32 %v169
    %v171 = vcvt.f32.s32 %v165
    %v172 = vshll.u32 %v171, 16
    %v173 = vadd.s32 %v172, %v170
    %v174 = vsel %vm48, %v156, 2147483647
    %v175 = vand.u32 %v174, 65535
    %v176 = vshra.s32 %v174, 16
    %v177 = vcvt.s32.f32 %v175
    %v178 = vcvt.s32.f32 %v176
    %179 = vmin.xlane.f32.xlu0 %v178
    %v180 = vpop.xlane.xlu0 %179
    %vm181 = vcmp.eq.f32.partialorder %v178, %v180
    %v182 = vsel %vm181, %v177, inf
    %183 = vmin.xlane.f32.xlu0 %v182
    %v184 = vpop.xlane.xlu0 %183
    %v185 = vcvt.f32.s32 %v184
    %v186 = vcvt.f32.s32 %v180
    %v187 = vshll.u32 %v186, 16
    %v188 = vadd.s32 %v187, %v185
    %v189 = vsel %vm48, %v157, 2147483647
    %v190 = vand.u32 %v189, 65535
    %v191 = vshra.s32 %v189, 16
    %v192 = vcvt.s32.f32 %v190
    %v193 = vcvt.s32.f32 %v191
    %194 = vmin.xlane.f32.xlu0 %v193
    %v195 = vpop.xlane.xlu0 %194
    %vm196 = vcmp.eq.f32.partialorder %v193, %v195
    %v197 = vsel %vm196, %v192, inf
    %198 = vmin.xlane.f32.xlu0 %v197
    %v199 = vpop.xlane.xlu0 %198
    %v200 = vcvt.f32.s32 %v199
    %v201 = vcvt.f32.s32 %v195
    %v202 = vshll.u32 %v201, 16
    %v203 = vadd.s32 %v202, %v200
    %v204 = vsel %vm48, %v158, 2147483647
    %v205 = vand.u32 %v204, 65535
    %v206 = vshra.s32 %v204, 16
    %v207 = vcvt.s32.f32 %v205
    %v208 = vcvt.s32.f32 %v206
    %209 = vmin.xlane.f32.xlu0 %v208
    %v210 = vpop.xlane.xlu0 %209
    %vm211 = vcmp.eq.f32.partialorder %v208, %v210
    %v212 = vsel %vm211, %v207, inf
    %213 = vmin.xlane.f32.xlu0 %v212
    %v214 = vpop.xlane.xlu0 %213
    %v215 = vcvt.f32.s32 %v214
    %v216 = vcvt.f32.s32 %v210
    %v217 = vshll.u32 %v216, 16
    %v218 = vadd.s32 %v217, %v215
    %vm219 = vcmp.eq.s32.totalorder %v150, %v173
    %vm220 = vcmp.eq.s32.totalorder %v150, %v188
    %vm221 = vcmp.eq.s32.totalorder %v150, %v203
    %vm222 = vcmp.eq.s32.totalorder %v150, %v218
    %v223 = vsel %vm219, 1, 0
    %v224 = vsel %vm220, 1, 0
    %v225 = vsel %vm221, 1, 0
    %v226 = vsel %vm222, 1, 0
    %v227 = vcvt.s32.f32 %v223
    %v228 = vcvt.s32.f32 %v224
    %v229 = vcvt.s32.f32 %v225
    %v230 = vcvt.s32.f32 %v226
    %v231 = vld [vmem:[%s4] sm:$0xff]
    %v232 = vld [vmem:[%s4 + $0x8] sm:$0xff]
    %v234 = vsel %vm48, %v227, 0
    %v237 = vsel %vm48, %v228, 0
    %v240 = vsel %vm48, %v229, 0
    %v243 = vsel %vm48, %v230, 0
    %245 = vmatpush.msra.mxu0 0.0
    %246 = vmatpush.msra.mxu0 0.0
    %247 = vmatpush.msra.mxu0 0.0
    %248 = vmatpush.msra.mxu0 0.0
    %249 = vmatpush.msra.mxu0 0.0
    %250 = vmatpush.msra.mxu0 0.0
    %251 = vmatpush.msra.mxu0 0.0
    %252 = vmatpush.msra.mxu0 0.0
    %253 = vmatpush.msra.mxu0 0.0
    %254 = vmatpush.msra.mxu0 0.0
    %255 = vmatpush.msra.mxu0 0.0
    %256 = vmatpush.msra.mxu0 0.0
    %257 = vmatpush.msra.mxu0 0.0
    %258 = vmatpush.msra.mxu0 0.0
    %259 = vmatpush.msra.mxu0 %v232
    %260 = vmatpush.msra.mxu0 %v231
    %261 = vmatmul.f32.gmra.mxu0 %v234
    %v262 = vpop.f32.mrf.mxu0
    %v263 = vadd.f32 0.0, %v262
    %264 = vmatmul.f32.gmra.mxu0 %v237
    %v265 = vpop.f32.mrf.mxu0
    %v266 = vadd.f32 0.0, %v265
    %267 = vmatmul.f32.gmra.mxu0 %v240
    %v268 = vpop.f32.mrf.mxu0
    %v269 = vadd.f32 0.0, %v268
    %270 = vmatmul.f32.gmra.mxu0 %v243
    %v271 = vpop.f32.mrf.mxu0
    %v272 = vadd.f32 0.0, %v271
    %273 = vdwg.mxu0
    %v274 = vld [vmem:[%s5] sm:$0xff]
    %v275 = vld [vmem:[%s5 + $0x8] sm:$0xff]
    %v276 = vld [vmem:[%s5 + $0x10] sm:$0xff]
    %v277 = vld [vmem:[%s5 + $0x18] sm:$0xff]
    %v278 = vperm.slane %v36, 1
    %v280 = vsel %vm95, %v263, 0
    %v283 = vsel %vm95, %v266, 0
    %v286 = vsel %vm95, %v269, 0
    %v289 = vsel %vm95, %v272, 0
    %291 = vmatpush.msra.mxu0 0.0
    %292 = vmatpush.msra.mxu0 0.0
    %293 = vmatpush.msra.mxu0 0.0
    %294 = vmatpush.msra.mxu0 0.0
    %295 = vmatpush.msra.mxu0 0.0
    %296 = vmatpush.msra.mxu0 0.0
    %297 = vmatpush.msra.mxu0 0.0
    %298 = vmatpush.msra.mxu0 0.0
    %299 = vmatpush.msra.mxu0 0.0
    %300 = vmatpush.msra.mxu0 0.0
    %301 = vmatpush.msra.mxu0 0.0
    %302 = vmatpush.msra.mxu0 0.0
    %303 = vmatpush.msra.mxu0 %v277
    %304 = vmatpush.msra.mxu0 %v276
    %305 = vmatpush.msra.mxu0 %v275
    %306 = vmatpush.msra.mxu0 %v274
    %307 = vmatmul.f32.gmra.mxu0 %v280
    %v308 = vpop.f32.mrf.mxu0
    %v309 = vadd.f32 %v278, %v308
    %310 = vmatmul.f32.gmra.mxu0 %v283
    %v311 = vpop.f32.mrf.mxu0
    %v312 = vadd.f32 %v278, %v311
    %313 = vmatmul.f32.gmra.mxu0 %v286
    %v314 = vpop.f32.mrf.mxu0
    %v315 = vadd.f32 %v278, %v314
    %316 = vmatmul.f32.gmra.mxu0 %v289
    %v317 = vpop.f32.mrf.mxu0
    %v318 = vadd.f32 %v278, %v317
    %319 = vdwg.mxu0
    %vm320 = vcmp.gt.f32.partialorder %v309, 0.0
    %vm321 = vcmp.gt.f32.partialorder %v312, 0.0
    %vm322 = vcmp.gt.f32.partialorder %v315, 0.0
    %vm323 = vcmp.gt.f32.partialorder %v318, 0.0
    %v324 = vmul.f32 %v309, 0.1
    %v325 = vmul.f32 %v312, 0.1
    %v326 = vmul.f32 %v315, 0.1
    %v327 = vmul.f32 %v318, 0.1
    %v328 = vsel %vm320, %v309, %v324
    %v329 = vsel %vm321, %v312, %v325
    %v330 = vsel %vm322, %v315, %v326
    %v331 = vsel %vm323, %v318, %v327
    %s332 = scalar_lea.vmem %s5, 32
    %v333 = vld [vmem:[%s332] sm:$0xff]
    %v334 = vld [vmem:[%s332 + $0x8] sm:$0xff]
    %v335 = vld [vmem:[%s332 + $0x10] sm:$0xff]
    %v336 = vld [vmem:[%s332 + $0x18] sm:$0xff]
    %v337 = vperm.slane %v36, 2
    %338 = vmatpush.msra.mxu0 0.0
    %339 = vmatpush.msra.mxu0 0.0
    %340 = vmatpush.msra.mxu0 0.0
    %341 = vmatpush.msra.mxu0 0.0
    %342 = vmatpush.msra.mxu0 0.0
    %343 = vmatpush.msra.mxu0 0.0
    %344 = vmatpush.msra.mxu0 0.0
    %345 = vmatpush.msra.mxu0 0.0
    %346 = vmatpush.msra.mxu0 0.0
    %347 = vmatpush.msra.mxu0 0.0
    %348 = vmatpush.msra.mxu0 0.0
    %349 = vmatpush.msra.mxu0 0.0
    %350 = vmatpush.msra.mxu0 %v336
    %351 = vmatpush.msra.mxu0 %v335
    %352 = vmatpush.msra.mxu0 %v334
    %353 = vmatpush.msra.mxu0 %v333
    %354 = vmatmul.f32.gmra.mxu0 %v280
    %v355 = vpop.f32.mrf.mxu0
    %v356 = vadd.f32 %v337, %v355
    %357 = vmatmul.f32.gmra.mxu0 %v283
    %v358 = vpop.f32.mrf.mxu0
    %v359 = vadd.f32 %v337, %v358
    %360 = vmatmul.f32.gmra.mxu0 %v286
    %v361 = vpop.f32.mrf.mxu0
    %v362 = vadd.f32 %v337, %v361
    %363 = vmatmul.f32.gmra.mxu0 %v289
    %v364 = vpop.f32.mrf.mxu0
    %v365 = vadd.f32 %v337, %v364
    %366 = vdwg.mxu0
    %vm367 = vcmp.gt.f32.partialorder %v356, 0.0
    %vm368 = vcmp.gt.f32.partialorder %v359, 0.0
    %vm369 = vcmp.gt.f32.partialorder %v362, 0.0
    %vm370 = vcmp.gt.f32.partialorder %v365, 0.0
    %v371 = vmul.f32 %v356, 0.1
    %v372 = vmul.f32 %v359, 0.1
    %v373 = vmul.f32 %v362, 0.1
    %v374 = vmul.f32 %v365, 0.1
    %v375 = vsel %vm367, %v356, %v371
    %v376 = vsel %vm368, %v359, %v372
    %v377 = vsel %vm369, %v362, %v373
    %v378 = vsel %vm370, %v365, %v374
    %v379 = vlaneseq
    %v380 = vshrl.u32 %v379, 7
    %v381 = vadd.s32 %v380, 8
    %v382 = vadd.s32 %v380, 16
    %v383 = vadd.s32 %v380, 24
    %v384 = vadd.s32 %v380, 32
    %v385 = vadd.s32 %v380, 40
    %v386 = vadd.s32 %v380, 48
    %v387 = vadd.s32 %v380, 56
    %v388 = vshra.s32 %v380, 1
    %v389 = vshra.s32 %v381, 1
    %v390 = vshra.s32 %v382, 1
    %v391 = vshra.s32 %v383, 1
    %v392 = vshra.s32 %v384, 1
    %v393 = vshra.s32 %v385, 1
    %v394 = vshra.s32 %v386, 1
    %v395 = vshra.s32 %v387, 1
    %vm396 = vcmp.eq.s32.totalorder %v150, %v388
    %vm397 = vcmp.eq.s32.totalorder %v150, %v389
    %vm398 = vcmp.eq.s32.totalorder %v150, %v390
    %vm399 = vcmp.eq.s32.totalorder %v150, %v391
    %vm400 = vcmp.eq.s32.totalorder %v150, %v392
    %vm401 = vcmp.eq.s32.totalorder %v150, %v393
    %vm402 = vcmp.eq.s32.totalorder %v150, %v394
    %vm403 = vcmp.eq.s32.totalorder %v150, %v395
    %v404 = vand.u32 %v380, 1
    %v405 = vand.u32 %v381, 1
    %v406 = vand.u32 %v382, 1
    %v407 = vand.u32 %v383, 1
    %v408 = vand.u32 %v384, 1
    %v409 = vand.u32 %v385, 1
    %v410 = vand.u32 %v386, 1
    %v411 = vand.u32 %v387, 1
    %vm412 = vcmp.eq.s32.totalorder %v404, 0
    %vm413 = vcmp.eq.s32.totalorder %v405, 0
    %vm414 = vcmp.eq.s32.totalorder %v406, 0
    %vm415 = vcmp.eq.s32.totalorder %v407, 0
    %vm416 = vcmp.eq.s32.totalorder %v408, 0
    %vm417 = vcmp.eq.s32.totalorder %v409, 0
    %vm418 = vcmp.eq.s32.totalorder %v410, 0
    %vm419 = vcmp.eq.s32.totalorder %v411, 0
    %vm420 = vmand %vm396, %vm412
    %vm421 = vmand %vm397, %vm413
    %vm422 = vmand %vm398, %vm414
    %vm423 = vmand %vm399, %vm415
    %vm424 = vmand %vm400, %vm416
    %vm425 = vmand %vm401, %vm417
    %vm426 = vmand %vm402, %vm418
    %vm427 = vmand %vm403, %vm419
    %v428 = vsel %vm420, 1, 0
    %v429 = vsel %vm421, 1, 0
    %v430 = vsel %vm422, 1, 0
    %v431 = vsel %vm423, 1, 0
    %v432 = vsel %vm424, 1, 0
    %v433 = vsel %vm425, 1, 0
    %v434 = vsel %vm426, 1, 0
    %v435 = vsel %vm427, 1, 0
    %v436 = vcvt.s32.f32 %v428
    %v437 = vcvt.s32.f32 %v429
    %v438 = vcvt.s32.f32 %v430
    %v439 = vcvt.s32.f32 %v431
    %v440 = vcvt.s32.f32 %v432
    %v441 = vcvt.s32.f32 %v433
    %v442 = vcvt.s32.f32 %v434
    %v443 = vcvt.s32.f32 %v435
    %vm444 = vcmp.eq.s32.totalorder %v404, 1
    %vm445 = vcmp.eq.s32.totalorder %v405, 1
    %vm446 = vcmp.eq.s32.totalorder %v406, 1
    %vm447 = vcmp.eq.s32.totalorder %v407, 1
    %vm448 = vcmp.eq.s32.totalorder %v408, 1
    %vm449 = vcmp.eq.s32.totalorder %v409, 1
    %vm450 = vcmp.eq.s32.totalorder %v410, 1
    %vm451 = vcmp.eq.s32.totalorder %v411, 1
    %vm452 = vmand %vm396, %vm444
    %vm453 = vmand %vm397, %vm445
    %vm454 = vmand %vm398, %vm446
    %vm455 = vmand %vm399, %vm447
    %vm456 = vmand %vm400, %vm448
    %vm457 = vmand %vm401, %vm449
    %vm458 = vmand %vm402, %vm450
    %vm459 = vmand %vm403, %vm451
    %v460 = vsel %vm452, 1, 0
    %v461 = vsel %vm453, 1, 0
    %v462 = vsel %vm454, 1, 0
    %v463 = vsel %vm455, 1, 0
    %v464 = vsel %vm456, 1, 0
    %v465 = vsel %vm457, 1, 0
    %v466 = vsel %vm458, 1, 0
    %v467 = vsel %vm459, 1, 0
    %v468 = vcvt.s32.f32 %v460
    %v469 = vcvt.s32.f32 %v461
    %v470 = vcvt.s32.f32 %v462
    %v471 = vcvt.s32.f32 %v463
    %v472 = vcvt.s32.f32 %v464
    %v473 = vcvt.s32.f32 %v465
    %v474 = vcvt.s32.f32 %v466
    %v475 = vcvt.s32.f32 %v467
    %v477 = vsel %vm95, %v468, 0
    %v480 = vsel %vm95, %v469, 0
    %v483 = vsel %vm95, %v470, 0
    %v486 = vsel %vm95, %v471, 0
    %v489 = vsel %vm95, %v472, 0
    %v492 = vsel %vm95, %v473, 0
    %v495 = vsel %vm95, %v474, 0
    %v498 = vsel %vm95, %v475, 0
    %500 = vmatpush.msra.mxu0 0.0
    %501 = vmatpush.msra.mxu0 0.0
    %502 = vmatpush.msra.mxu0 0.0
    %503 = vmatpush.msra.mxu0 0.0
    %504 = vmatpush.msra.mxu0 0.0
    %505 = vmatpush.msra.mxu0 0.0
    %506 = vmatpush.msra.mxu0 0.0
    %507 = vmatpush.msra.mxu0 0.0
    %508 = vmatpush.msra.mxu0 0.0
    %509 = vmatpush.msra.mxu0 0.0
    %510 = vmatpush.msra.mxu0 0.0
    %511 = vmatpush.msra.mxu0 0.0
    %512 = vmatpush.msra.mxu0 %v378
    %513 = vmatpush.msra.mxu0 %v377
    %514 = vmatpush.msra.mxu0 %v376
    %515 = vmatpush.msra.mxu0 %v375
    %516 = vmatmul.f32.gmra.mxu0 %v477
    %v517 = vpop.f32.mrf.mxu0
    %v518 = vadd.f32 0.0, %v517
    %519 = vmatmul.f32.gmra.mxu0 %v480
    %v520 = vpop.f32.mrf.mxu0
    %v521 = vadd.f32 0.0, %v520
    %522 = vmatmul.f32.gmra.mxu0 %v483
    %v523 = vpop.f32.mrf.mxu0
    %v524 = vadd.f32 0.0, %v523
    %525 = vmatmul.f32.gmra.mxu0 %v486
    %v526 = vpop.f32.mrf.mxu0
    %v527 = vadd.f32 0.0, %v526
    %528 = vmatmul.f32.gmra.mxu0 %v489
    %v529 = vpop.f32.mrf.mxu0
    %v530 = vadd.f32 0.0, %v529
    %531 = vmatmul.f32.gmra.mxu0 %v492
    %v532 = vpop.f32.mrf.mxu0
    %v533 = vadd.f32 0.0, %v532
    %534 = vmatmul.f32.gmra.mxu0 %v495
    %v535 = vpop.f32.mrf.mxu0
    %v536 = vadd.f32 0.0, %v535
    %537 = vmatmul.f32.gmra.mxu0 %v498
    %v538 = vpop.f32.mrf.mxu0
    %v539 = vadd.f32 0.0, %v538
    %540 = vdwg.mxu0
    %v542 = vsel %vm95, %v436, 0
    %v545 = vsel %vm95, %v437, 0
    %v548 = vsel %vm95, %v438, 0
    %v551 = vsel %vm95, %v439, 0
    %v554 = vsel %vm95, %v440, 0
    %v557 = vsel %vm95, %v441, 0
    %v560 = vsel %vm95, %v442, 0
    %v563 = vsel %vm95, %v443, 0
    %565 = vmatpush.msra.mxu0 0.0
    %566 = vmatpush.msra.mxu0 0.0
    %567 = vmatpush.msra.mxu0 0.0
    %568 = vmatpush.msra.mxu0 0.0
    %569 = vmatpush.msra.mxu0 0.0
    %570 = vmatpush.msra.mxu0 0.0
    %571 = vmatpush.msra.mxu0 0.0
    %572 = vmatpush.msra.mxu0 0.0
    %573 = vmatpush.msra.mxu0 0.0
    %574 = vmatpush.msra.mxu0 0.0
    %575 = vmatpush.msra.mxu0 0.0
    %576 = vmatpush.msra.mxu0 0.0
    %577 = vmatpush.msra.mxu0 %v331
    %578 = vmatpush.msra.mxu0 %v330
    %579 = vmatpush.msra.mxu0 %v329
    %580 = vmatpush.msra.mxu0 %v328
    %581 = vmatmul.f32.gmra.mxu0 %v542
    %v582 = vpop.f32.mrf.mxu0
    %v583 = vadd.f32 %v518, %v582
    %584 = vmatmul.f32.gmra.mxu0 %v545
    %v585 = vpop.f32.mrf.mxu0
    %v586 = vadd.f32 %v521, %v585
    %587 = vmatmul.f32.gmra.mxu0 %v548
    %v588 = vpop.f32.mrf.mxu0
    %v589 = vadd.f32 %v524, %v588
    %590 = vmatmul.f32.gmra.mxu0 %v551
    %v591 = vpop.f32.mrf.mxu0
    %v592 = vadd.f32 %v527, %v591
    %593 = vmatmul.f32.gmra.mxu0 %v554
    %v594 = vpop.f32.mrf.mxu0
    %v595 = vadd.f32 %v530, %v594
    %596 = vmatmul.f32.gmra.mxu0 %v557
    %v597 = vpop.f32.mrf.mxu0
    %v598 = vadd.f32 %v533, %v597
    %599 = vmatmul.f32.gmra.mxu0 %v560
    %v600 = vpop.f32.mrf.mxu0
    %v601 = vadd.f32 %v536, %v600
    %602 = vmatmul.f32.gmra.mxu0 %v563
    %v603 = vpop.f32.mrf.mxu0
    %v604 = vadd.f32 %v539, %v603
    %605 = vdwg.mxu0
    %v606 = vsub.s32 %v380, 1
    %v607 = vsub.s32 %v381, 1
    %v608 = vsub.s32 %v382, 1
    %v609 = vsub.s32 %v383, 1
    %v610 = vsub.s32 %v384, 1
    %v611 = vsub.s32 %v385, 1
    %v612 = vsub.s32 %v386, 1
    %v613 = vsub.s32 %v387, 1
    %vm614 = vcmp.eq.s32.totalorder %v150, %v606
    %vm615 = vcmp.eq.s32.totalorder %v150, %v607
    %vm616 = vcmp.eq.s32.totalorder %v150, %v608
    %vm617 = vcmp.eq.s32.totalorder %v150, %v609
    %vm618 = vcmp.eq.s32.totalorder %v150, %v610
    %vm619 = vcmp.eq.s32.totalorder %v150, %v611
    %vm620 = vcmp.eq.s32.totalorder %v150, %v612
    %vm621 = vcmp.eq.s32.totalorder %v150, %v613
    %v622 = vand.u32 %v380, 31
    %v623 = vand.u32 %v381, 31
    %v624 = vand.u32 %v382, 31
    %v625 = vand.u32 %v383, 31
    %v626 = vand.u32 %v384, 31
    %v627 = vand.u32 %v385, 31
    %v628 = vand.u32 %v386, 31
    %v629 = vand.u32 %v387, 31
    %vm630 = vcmp.ne.s32.totalorder %v622, 0
    %vm631 = vcmp.ne.s32.totalorder %v623, 0
    %vm632 = vcmp.ne.s32.totalorder %v624, 0
    %vm633 = vcmp.ne.s32.totalorder %v625, 0
    %vm634 = vcmp.ne.s32.totalorder %v626, 0
    %vm635 = vcmp.ne.s32.totalorder %v627, 0
    %vm636 = vcmp.ne.s32.totalorder %v628, 0
    %vm637 = vcmp.ne.s32.totalorder %v629, 0
    %vm638 = vmand %vm614, %vm630
    %vm639 = vmand %vm615, %vm631
    %vm640 = vmand %vm616, %vm632
    %vm641 = vmand %vm617, %vm633
    %vm642 = vmand %vm618, %vm634
    %vm643 = vmand %vm619, %vm635
    %vm644 = vmand %vm620, %vm636
    %vm645 = vmand %vm621, %vm637
    %v646 = vsel %vm638, 1, 0
    %v647 = vsel %vm639, 1, 0
    %v648 = vsel %vm640, 1, 0
    %v649 = vsel %vm641, 1, 0
    %v650 = vsel %vm642, 1, 0
    %v651 = vsel %vm643, 1, 0
    %v652 = vsel %vm644, 1, 0
    %v653 = vsel %vm645, 1, 0
    %v654 = vcvt.s32.f32 %v646
    %v655 = vcvt.s32.f32 %v647
    %v656 = vcvt.s32.f32 %v648
    %v657 = vcvt.s32.f32 %v649
    %v658 = vcvt.s32.f32 %v650
    %v659 = vcvt.s32.f32 %v651
    %v660 = vcvt.s32.f32 %v652
    %v661 = vcvt.s32.f32 %v653
    %v662 = vadd.s32 %v380, 1
    %v663 = vadd.s32 %v381, 1
    %v664 = vadd.s32 %v382, 1
    %v665 = vadd.s32 %v383, 1
    %v666 = vadd.s32 %v384, 1
    %v667 = vadd.s32 %v385, 1
    %v668 = vadd.s32 %v386, 1
    %v669 = vadd.s32 %v387, 1
    %vm670 = vcmp.eq.s32.totalorder %v150, %v662
    %vm671 = vcmp.eq.s32.totalorder %v150, %v663
    %vm672 = vcmp.eq.s32.totalorder %v150, %v664
    %vm673 = vcmp.eq.s32.totalorder %v150, %v665
    %vm674 = vcmp.eq.s32.totalorder %v150, %v666
    %vm675 = vcmp.eq.s32.totalorder %v150, %v667
    %vm676 = vcmp.eq.s32.totalorder %v150, %v668
    %vm677 = vcmp.eq.s32.totalorder %v150, %v669
    %vm678 = vcmp.ne.s32.totalorder %v622, 31
    %vm679 = vcmp.ne.s32.totalorder %v623, 31
    %vm680 = vcmp.ne.s32.totalorder %v624, 31
    %vm681 = vcmp.ne.s32.totalorder %v625, 31
    %vm682 = vcmp.ne.s32.totalorder %v626, 31
    %vm683 = vcmp.ne.s32.totalorder %v627, 31
    %vm684 = vcmp.ne.s32.totalorder %v628, 31
    %vm685 = vcmp.ne.s32.totalorder %v629, 31
    %vm686 = vmand %vm670, %vm678
    %vm687 = vmand %vm671, %vm679
    %vm688 = vmand %vm672, %vm680
    %vm689 = vmand %vm673, %vm681
    %vm690 = vmand %vm674, %vm682
    %vm691 = vmand %vm675, %vm683
    %vm692 = vmand %vm676, %vm684
    %vm693 = vmand %vm677, %vm685
    %v694 = vsel %vm686, 1, 0
    %v695 = vsel %vm687, 1, 0
    %v696 = vsel %vm688, 1, 0
    %v697 = vsel %vm689, 1, 0
    %v698 = vsel %vm690, 1, 0
    %v699 = vsel %vm691, 1, 0
    %v700 = vsel %vm692, 1, 0
    %v701 = vsel %vm693, 1, 0
    %v702 = vcvt.s32.f32 %v694
    %v703 = vcvt.s32.f32 %v695
    %v704 = vcvt.s32.f32 %v696
    %v705 = vcvt.s32.f32 %v697
    %v706 = vcvt.s32.f32 %v698
    %v707 = vcvt.s32.f32 %v699
    %v708 = vcvt.s32.f32 %v700
    %v709 = vcvt.s32.f32 %v701
    %vm710 = vcmask 523264
    %v712 = vsel %vm710, %v654, 0
    %v715 = vsel %vm710, %v655, 0
    %v718 = vsel %vm710, %v656, 0
    %v721 = vsel %vm710, %v657, 0
    %v724 = vsel %vm710, %v658, 0
    %v727 = vsel %vm710, %v659, 0
    %v730 = vsel %vm710, %v660, 0
    %v733 = vsel %vm710, %v661, 0
    %735 = vmatpush.msra.mxu0 0.0
    %736 = vmatpush.msra.mxu0 0.0
    %737 = vmatpush.msra.mxu0 0.0
    %738 = vmatpush.msra.mxu0 0.0
    %739 = vmatpush.msra.mxu0 0.0
    %740 = vmatpush.msra.mxu0 0.0
    %741 = vmatpush.msra.mxu0 0.0
    %742 = vmatpush.msra.mxu0 0.0
    %743 = vmatpush.msra.mxu0 %v604
    %744 = vmatpush.msra.mxu0 %v601
    %745 = vmatpush.msra.mxu0 %v598
    %746 = vmatpush.msra.mxu0 %v595
    %747 = vmatpush.msra.mxu0 %v592
    %748 = vmatpush.msra.mxu0 %v589
    %749 = vmatpush.msra.mxu0 %v586
    %750 = vmatpush.msra.mxu0 %v583
    %751 = vmatmul.f32.gmra.mxu0 %v712
    %v752 = vpop.f32.mrf.mxu0
    %v753 = vadd.f32 0.0, %v752
    %754 = vmatmul.f32.gmra.mxu0 %v715
    %v755 = vpop.f32.mrf.mxu0
    %v756 = vadd.f32 0.0, %v755
    %757 = vmatmul.f32.gmra.mxu0 %v718
    %v758 = vpop.f32.mrf.mxu0
    %v759 = vadd.f32 0.0, %v758
    %760 = vmatmul.f32.gmra.mxu0 %v721
    %v761 = vpop.f32.mrf.mxu0
    %v762 = vadd.f32 0.0, %v761
    %763 = vmatmul.f32.gmra.mxu0 %v724
    %v764 = vpop.f32.mrf.mxu0
    %v765 = vadd.f32 0.0, %v764
    %766 = vmatmul.f32.gmra.mxu0 %v727
    %v767 = vpop.f32.mrf.mxu0
    %v768 = vadd.f32 0.0, %v767
    %769 = vmatmul.f32.gmra.mxu0 %v730
    %v770 = vpop.f32.mrf.mxu0
    %v771 = vadd.f32 0.0, %v770
    %772 = vmatmul.f32.gmra.mxu0 %v733
    %v773 = vpop.f32.mrf.mxu0
    %v774 = vadd.f32 0.0, %v773
    %775 = vdwg.mxu0
    %v777 = vsel %vm710, %v702, 0
    %v780 = vsel %vm710, %v703, 0
    %v783 = vsel %vm710, %v704, 0
    %v786 = vsel %vm710, %v705, 0
    %v789 = vsel %vm710, %v706, 0
    %v792 = vsel %vm710, %v707, 0
    %v795 = vsel %vm710, %v708, 0
    %v798 = vsel %vm710, %v709, 0
    %800 = vmatpush.msra.mxu0 0.0
    %801 = vmatpush.msra.mxu0 0.0
    %802 = vmatpush.msra.mxu0 0.0
    %803 = vmatpush.msra.mxu0 0.0
    %804 = vmatpush.msra.mxu0 0.0
    %805 = vmatpush.msra.mxu0 0.0
    %806 = vmatpush.msra.mxu0 0.0
    %807 = vmatpush.msra.mxu0 0.0
    %808 = vmatpush.msra.mxu0 %v604
    %809 = vmatpush.msra.mxu0 %v601
    %810 = vmatpush.msra.mxu0 %v598
    %811 = vmatpush.msra.mxu0 %v595
    %812 = vmatpush.msra.mxu0 %v592
    %813 = vmatpush.msra.mxu0 %v589
    %814 = vmatpush.msra.mxu0 %v586
    %815 = vmatpush.msra.mxu0 %v583
    %816 = vmatmul.f32.gmra.mxu0 %v777
    %v817 = vpop.f32.mrf.mxu0
    %v818 = vadd.f32 0.0, %v817
    %819 = vmatmul.f32.gmra.mxu0 %v780
    %v820 = vpop.f32.mrf.mxu0
    %v821 = vadd.f32 0.0, %v820
    %822 = vmatmul.f32.gmra.mxu0 %v783
    %v823 = vpop.f32.mrf.mxu0
    %v824 = vadd.f32 0.0, %v823
    %825 = vmatmul.f32.gmra.mxu0 %v786
    %v826 = vpop.f32.mrf.mxu0
    %v827 = vadd.f32 0.0, %v826
    %828 = vmatmul.f32.gmra.mxu0 %v789
    %v829 = vpop.f32.mrf.mxu0
    %v830 = vadd.f32 0.0, %v829
    %831 = vmatmul.f32.gmra.mxu0 %v792
    %v832 = vpop.f32.mrf.mxu0
    %v833 = vadd.f32 0.0, %v832
    %834 = vmatmul.f32.gmra.mxu0 %v795
    %v835 = vpop.f32.mrf.mxu0
    %v836 = vadd.f32 0.0, %v835
    %837 = vmatmul.f32.gmra.mxu0 %v798
    %v838 = vpop.f32.mrf.mxu0
    %v839 = vadd.f32 0.0, %v838
    %840 = vdwg.mxu0
    %v841 = vld [vmem:[%s6] sm:$0xff]
    %v842 = vld [vmem:[%s6 + $0x8] sm:$0xff]
    %s843 = scalar_lea.vmem %s6, 16
    %v844 = vld [vmem:[%s843] sm:$0xff]
    %v845 = vld [vmem:[%s843 + $0x8] sm:$0xff]
    %v847 = vsel %vm48, %v583, 0
    %v850 = vsel %vm48, %v586, 0
    %v853 = vsel %vm48, %v589, 0
    %v856 = vsel %vm48, %v592, 0
    %v859 = vsel %vm48, %v595, 0
    %v862 = vsel %vm48, %v598, 0
    %v865 = vsel %vm48, %v601, 0
    %v868 = vsel %vm48, %v604, 0
    %870 = vmatpush.msra.mxu0 0.0
    %871 = vmatpush.msra.mxu0 0.0
    %872 = vmatpush.msra.mxu0 0.0
    %873 = vmatpush.msra.mxu0 0.0
    %874 = vmatpush.msra.mxu0 0.0
    %875 = vmatpush.msra.mxu0 0.0
    %876 = vmatpush.msra.mxu0 0.0
    %877 = vmatpush.msra.mxu0 0.0
    %878 = vmatpush.msra.mxu0 0.0
    %879 = vmatpush.msra.mxu0 0.0
    %880 = vmatpush.msra.mxu0 0.0
    %881 = vmatpush.msra.mxu0 0.0
    %882 = vmatpush.msra.mxu0 0.0
    %883 = vmatpush.msra.mxu0 0.0
    %884 = vmatpush.msra.mxu0 %v845
    %885 = vmatpush.msra.mxu0 %v844
    %886 = vmatmul.f32.gmra.mxu0 %v847
    %v887 = vpop.f32.mrf.mxu0
    %v888 = vadd.f32 0.0, %v887
    %889 = vmatmul.f32.gmra.mxu0 %v850
    %v890 = vpop.f32.mrf.mxu0
    %v891 = vadd.f32 0.0, %v890
    %892 = vmatmul.f32.gmra.mxu0 %v853
    %v893 = vpop.f32.mrf.mxu0
    %v894 = vadd.f32 0.0, %v893
    %895 = vmatmul.f32.gmra.mxu0 %v856
    %v896 = vpop.f32.mrf.mxu0
    %v897 = vadd.f32 0.0, %v896
    %898 = vmatmul.f32.gmra.mxu0 %v859
    %v899 = vpop.f32.mrf.mxu0
    %v900 = vadd.f32 0.0, %v899
    %901 = vmatmul.f32.gmra.mxu0 %v862
    %v902 = vpop.f32.mrf.mxu0
    %v903 = vadd.f32 0.0, %v902
    %904 = vmatmul.f32.gmra.mxu0 %v865
    %v905 = vpop.f32.mrf.mxu0
    %v906 = vadd.f32 0.0, %v905
    %907 = vmatmul.f32.gmra.mxu0 %v868
    %v908 = vpop.f32.mrf.mxu0
    %v909 = vadd.f32 0.0, %v908
    %910 = vdwg.mxu0
    %v912 = vsel %vm48, %v753, 0
    %v915 = vsel %vm48, %v756, 0
    %v918 = vsel %vm48, %v759, 0
    %v921 = vsel %vm48, %v762, 0
    %v924 = vsel %vm48, %v765, 0
    %v927 = vsel %vm48, %v768, 0
    %v930 = vsel %vm48, %v771, 0
    %v933 = vsel %vm48, %v774, 0
    %935 = vmatpush.msra.mxu0 0.0
    %936 = vmatpush.msra.mxu0 0.0
    %937 = vmatpush.msra.mxu0 0.0
    %938 = vmatpush.msra.mxu0 0.0
    %939 = vmatpush.msra.mxu0 0.0
    %940 = vmatpush.msra.mxu0 0.0
    %941 = vmatpush.msra.mxu0 0.0
    %942 = vmatpush.msra.mxu0 0.0
    %943 = vmatpush.msra.mxu0 0.0
    %944 = vmatpush.msra.mxu0 0.0
    %945 = vmatpush.msra.mxu0 0.0
    %946 = vmatpush.msra.mxu0 0.0
    %947 = vmatpush.msra.mxu0 0.0
    %948 = vmatpush.msra.mxu0 0.0
    %949 = vmatpush.msra.mxu0 %v842
    %950 = vmatpush.msra.mxu0 %v841
    %951 = vmatmul.f32.gmra.mxu0 %v912
    %v952 = vpop.f32.mrf.mxu0
    %v953 = vadd.f32 %v888, %v952
    %954 = vmatmul.f32.gmra.mxu0 %v915
    %v955 = vpop.f32.mrf.mxu0
    %v956 = vadd.f32 %v891, %v955
    %957 = vmatmul.f32.gmra.mxu0 %v918
    %v958 = vpop.f32.mrf.mxu0
    %v959 = vadd.f32 %v894, %v958
    %960 = vmatmul.f32.gmra.mxu0 %v921
    %v961 = vpop.f32.mrf.mxu0
    %v962 = vadd.f32 %v897, %v961
    %963 = vmatmul.f32.gmra.mxu0 %v924
    %v964 = vpop.f32.mrf.mxu0
    %v965 = vadd.f32 %v900, %v964
    %966 = vmatmul.f32.gmra.mxu0 %v927
    %v967 = vpop.f32.mrf.mxu0
    %v968 = vadd.f32 %v903, %v967
    %969 = vmatmul.f32.gmra.mxu0 %v930
    %v970 = vpop.f32.mrf.mxu0
    %v971 = vadd.f32 %v906, %v970
    %972 = vmatmul.f32.gmra.mxu0 %v933
    %v973 = vpop.f32.mrf.mxu0
    %v974 = vadd.f32 %v909, %v973
    %975 = vdwg.mxu0
    %s976 = scalar_lea.vmem %s6, 32
    %v977 = vld [vmem:[%s976] sm:$0xff]
    %v978 = vld [vmem:[%s976 + $0x8] sm:$0xff]
    %v980 = vsel %vm48, %v818, 0
    %v983 = vsel %vm48, %v821, 0
    %v986 = vsel %vm48, %v824, 0
    %v989 = vsel %vm48, %v827, 0
    %v992 = vsel %vm48, %v830, 0
    %v995 = vsel %vm48, %v833, 0
    %v998 = vsel %vm48, %v836, 0
    %v1001 = vsel %vm48, %v839, 0
    %1003 = vmatpush.msra.mxu0 0.0
    %1004 = vmatpush.msra.mxu0 0.0
    %1005 = vmatpush.msra.mxu0 0.0
    %1006 = vmatpush.msra.mxu0 0.0
    %1007 = vmatpush.msra.mxu0 0.0
    %1008 = vmatpush.msra.mxu0 0.0
    %1009 = vmatpush.msra.mxu0 0.0
    %1010 = vmatpush.msra.mxu0 0.0
    %1011 = vmatpush.msra.mxu0 0.0
    %1012 = vmatpush.msra.mxu0 0.0
    %1013 = vmatpush.msra.mxu0 0.0
    %1014 = vmatpush.msra.mxu0 0.0
    %1015 = vmatpush.msra.mxu0 0.0
    %1016 = vmatpush.msra.mxu0 0.0
    %1017 = vmatpush.msra.mxu0 %v978
    %1018 = vmatpush.msra.mxu0 %v977
    %1019 = vmatmul.f32.gmra.mxu0 %v980
    %v1020 = vpop.f32.mrf.mxu0
    %v1021 = vadd.f32 0.0, %v1020
    %1022 = vmatmul.f32.gmra.mxu0 %v983
    %v1023 = vpop.f32.mrf.mxu0
    %v1024 = vadd.f32 0.0, %v1023
    %1025 = vmatmul.f32.gmra.mxu0 %v986
    %v1026 = vpop.f32.mrf.mxu0
    %v1027 = vadd.f32 0.0, %v1026
    %1028 = vmatmul.f32.gmra.mxu0 %v989
    %v1029 = vpop.f32.mrf.mxu0
    %v1030 = vadd.f32 0.0, %v1029
    %1031 = vmatmul.f32.gmra.mxu0 %v992
    %v1032 = vpop.f32.mrf.mxu0
    %v1033 = vadd.f32 0.0, %v1032
    %1034 = vmatmul.f32.gmra.mxu0 %v995
    %v1035 = vpop.f32.mrf.mxu0
    %v1036 = vadd.f32 0.0, %v1035
    %1037 = vmatmul.f32.gmra.mxu0 %v998
    %v1038 = vpop.f32.mrf.mxu0
    %v1039 = vadd.f32 0.0, %v1038
    %1040 = vmatmul.f32.gmra.mxu0 %v1001
    %v1041 = vpop.f32.mrf.mxu0
    %v1042 = vadd.f32 0.0, %v1041
    %1043 = vdwg.mxu0
    %v1044 = vadd.f32 %v953, %v1021
    %v1045 = vadd.f32 %v956, %v1024
    %v1046 = vadd.f32 %v959, %v1027
    %v1047 = vadd.f32 %v962, %v1030
    %v1048 = vadd.f32 %v965, %v1033
    %v1049 = vadd.f32 %v968, %v1036
    %v1050 = vadd.f32 %v971, %v1039
    %v1051 = vadd.f32 %v974, %v1042
    %v1052 = vperm.slane %v36, 3
    %v1053 = vadd.f32 %v1044, %v1052
    %v1054 = vadd.f32 %v1045, %v1052
    %v1055 = vadd.f32 %v1046, %v1052
    %v1056 = vadd.f32 %v1047, %v1052
    %v1057 = vadd.f32 %v1048, %v1052
    %v1058 = vadd.f32 %v1049, %v1052
    %v1059 = vadd.f32 %v1050, %v1052
    %v1060 = vadd.f32 %v1051, %v1052
    %vm1061 = vcmp.gt.f32.partialorder %v1053, 0.0
    %vm1062 = vcmp.gt.f32.partialorder %v1054, 0.0
    %vm1063 = vcmp.gt.f32.partialorder %v1055, 0.0
    %vm1064 = vcmp.gt.f32.partialorder %v1056, 0.0
    %vm1065 = vcmp.gt.f32.partialorder %v1057, 0.0
    %vm1066 = vcmp.gt.f32.partialorder %v1058, 0.0
    %vm1067 = vcmp.gt.f32.partialorder %v1059, 0.0
    %vm1068 = vcmp.gt.f32.partialorder %v1060, 0.0
    %v1069 = vmul.f32 %v1053, 0.1
    %v1070 = vmul.f32 %v1054, 0.1
    %v1071 = vmul.f32 %v1055, 0.1
    %v1072 = vmul.f32 %v1056, 0.1
    %v1073 = vmul.f32 %v1057, 0.1
    %v1074 = vmul.f32 %v1058, 0.1
    %v1075 = vmul.f32 %v1059, 0.1
    %v1076 = vmul.f32 %v1060, 0.1
    %v1077 = vsel %vm1061, %v1053, %v1069
    %v1078 = vsel %vm1062, %v1054, %v1070
    %v1079 = vsel %vm1063, %v1055, %v1071
    %v1080 = vsel %vm1064, %v1056, %v1072
    %v1081 = vsel %vm1065, %v1057, %v1073
    %v1082 = vsel %vm1066, %v1058, %v1074
    %v1083 = vsel %vm1067, %v1059, %v1075
    %v1084 = vsel %vm1068, %v1060, %v1076
    %v1085 = vld [vmem:[%s7] sm:$0xff]
    %v1086 = vld [vmem:[%s7 + $0x8] sm:$0xff]
    %v1087 = vld [vmem:[%s7 + $0x10] sm:$0xff]
    %v1088 = vld [vmem:[%s7 + $0x18] sm:$0xff]
    %v1089 = vperm.slane %v36, 4
    %v1091 = vsel %vm95, %v1077, 0
    %v1094 = vsel %vm95, %v1078, 0
    %v1097 = vsel %vm95, %v1079, 0
    %v1100 = vsel %vm95, %v1080, 0
    %v1103 = vsel %vm95, %v1081, 0
    %v1106 = vsel %vm95, %v1082, 0
    %v1109 = vsel %vm95, %v1083, 0
    %v1112 = vsel %vm95, %v1084, 0
    %1114 = vmatpush.msra.mxu0 0.0
    %1115 = vmatpush.msra.mxu0 0.0
    %1116 = vmatpush.msra.mxu0 0.0
    %1117 = vmatpush.msra.mxu0 0.0
    %1118 = vmatpush.msra.mxu0 0.0
    %1119 = vmatpush.msra.mxu0 0.0
    %1120 = vmatpush.msra.mxu0 0.0
    %1121 = vmatpush.msra.mxu0 0.0
    %1122 = vmatpush.msra.mxu0 0.0
    %1123 = vmatpush.msra.mxu0 0.0
    %1124 = vmatpush.msra.mxu0 0.0
    %1125 = vmatpush.msra.mxu0 0.0
    %1126 = vmatpush.msra.mxu0 %v1088
    %1127 = vmatpush.msra.mxu0 %v1087
    %1128 = vmatpush.msra.mxu0 %v1086
    %1129 = vmatpush.msra.mxu0 %v1085
    %1130 = vmatmul.f32.gmra.mxu0 %v1091
    %v1131 = vpop.f32.mrf.mxu0
    %v1132 = vadd.f32 %v1089, %v1131
    %1133 = vmatmul.f32.gmra.mxu0 %v1094
    %v1134 = vpop.f32.mrf.mxu0
    %v1135 = vadd.f32 %v1089, %v1134
    %1136 = vmatmul.f32.gmra.mxu0 %v1097
    %v1137 = vpop.f32.mrf.mxu0
    %v1138 = vadd.f32 %v1089, %v1137
    %1139 = vmatmul.f32.gmra.mxu0 %v1100
    %v1140 = vpop.f32.mrf.mxu0
    %v1141 = vadd.f32 %v1089, %v1140
    %1142 = vmatmul.f32.gmra.mxu0 %v1103
    %v1143 = vpop.f32.mrf.mxu0
    %v1144 = vadd.f32 %v1089, %v1143
    %1145 = vmatmul.f32.gmra.mxu0 %v1106
    %v1146 = vpop.f32.mrf.mxu0
    %v1147 = vadd.f32 %v1089, %v1146
    %1148 = vmatmul.f32.gmra.mxu0 %v1109
    %v1149 = vpop.f32.mrf.mxu0
    %v1150 = vadd.f32 %v1089, %v1149
    %1151 = vmatmul.f32.gmra.mxu0 %v1112
    %v1152 = vpop.f32.mrf.mxu0
    %v1153 = vadd.f32 %v1089, %v1152
    %1154 = vdwg.mxu0
    %vm1155 = vcmp.gt.f32.partialorder %v1132, 0.0
    %vm1156 = vcmp.gt.f32.partialorder %v1135, 0.0
    %vm1157 = vcmp.gt.f32.partialorder %v1138, 0.0
    %vm1158 = vcmp.gt.f32.partialorder %v1141, 0.0
    %vm1159 = vcmp.gt.f32.partialorder %v1144, 0.0
    %vm1160 = vcmp.gt.f32.partialorder %v1147, 0.0
    %vm1161 = vcmp.gt.f32.partialorder %v1150, 0.0
    %vm1162 = vcmp.gt.f32.partialorder %v1153, 0.0
    %v1163 = vmul.f32 %v1132, 0.1
    %v1164 = vmul.f32 %v1135, 0.1
    %v1165 = vmul.f32 %v1138, 0.1
    %v1166 = vmul.f32 %v1141, 0.1
    %v1167 = vmul.f32 %v1144, 0.1
    %v1168 = vmul.f32 %v1147, 0.1
    %v1169 = vmul.f32 %v1150, 0.1
    %v1170 = vmul.f32 %v1153, 0.1
    %v1171 = vsel %vm1155, %v1132, %v1163
    %v1172 = vsel %vm1156, %v1135, %v1164
    %v1173 = vsel %vm1157, %v1138, %v1165
    %v1174 = vsel %vm1158, %v1141, %v1166
    %v1175 = vsel %vm1159, %v1144, %v1167
    %v1176 = vsel %vm1160, %v1147, %v1168
    %v1177 = vsel %vm1161, %v1150, %v1169
    %v1178 = vsel %vm1162, %v1153, %v1170
    %s1179 = scalar_lea.vmem %s7, 32
    %v1180 = vld [vmem:[%s1179] sm:$0xff]
    %v1181 = vld [vmem:[%s1179 + $0x8] sm:$0xff]
    %v1182 = vld [vmem:[%s1179 + $0x10] sm:$0xff]
    %v1183 = vld [vmem:[%s1179 + $0x18] sm:$0xff]
    %v1184 = vperm.slane %v36, 5
    %1185 = vmatpush.msra.mxu0 0.0
    %1186 = vmatpush.msra.mxu0 0.0
    %1187 = vmatpush.msra.mxu0 0.0
    %1188 = vmatpush.msra.mxu0 0.0
    %1189 = vmatpush.msra.mxu0 0.0
    %1190 = vmatpush.msra.mxu0 0.0
    %1191 = vmatpush.msra.mxu0 0.0
    %1192 = vmatpush.msra.mxu0 0.0
    %1193 = vmatpush.msra.mxu0 0.0
    %1194 = vmatpush.msra.mxu0 0.0
    %1195 = vmatpush.msra.mxu0 0.0
    %1196 = vmatpush.msra.mxu0 0.0
    %1197 = vmatpush.msra.mxu0 %v1183
    %1198 = vmatpush.msra.mxu0 %v1182
    %1199 = vmatpush.msra.mxu0 %v1181
    %1200 = vmatpush.msra.mxu0 %v1180
    %1201 = vmatmul.f32.gmra.mxu0 %v1091
    %v1202 = vpop.f32.mrf.mxu0
    %v1203 = vadd.f32 %v1184, %v1202
    %1204 = vmatmul.f32.gmra.mxu0 %v1094
    %v1205 = vpop.f32.mrf.mxu0
    %v1206 = vadd.f32 %v1184, %v1205
    %1207 = vmatmul.f32.gmra.mxu0 %v1097
    %v1208 = vpop.f32.mrf.mxu0
    %v1209 = vadd.f32 %v1184, %v1208
    %1210 = vmatmul.f32.gmra.mxu0 %v1100
    %v1211 = vpop.f32.mrf.mxu0
    %v1212 = vadd.f32 %v1184, %v1211
    %1213 = vmatmul.f32.gmra.mxu0 %v1103
    %v1214 = vpop.f32.mrf.mxu0
    %v1215 = vadd.f32 %v1184, %v1214
    %1216 = vmatmul.f32.gmra.mxu0 %v1106
    %v1217 = vpop.f32.mrf.mxu0
    %v1218 = vadd.f32 %v1184, %v1217
    %1219 = vmatmul.f32.gmra.mxu0 %v1109
    %v1220 = vpop.f32.mrf.mxu0
    %v1221 = vadd.f32 %v1184, %v1220
    %1222 = vmatmul.f32.gmra.mxu0 %v1112
    %v1223 = vpop.f32.mrf.mxu0
    %v1224 = vadd.f32 %v1184, %v1223
    %1225 = vdwg.mxu0
    %vm1226 = vcmp.gt.f32.partialorder %v1203, 0.0
    %vm1227 = vcmp.gt.f32.partialorder %v1206, 0.0
    %vm1228 = vcmp.gt.f32.partialorder %v1209, 0.0
    %vm1229 = vcmp.gt.f32.partialorder %v1212, 0.0
    %vm1230 = vcmp.gt.f32.partialorder %v1215, 0.0
    %vm1231 = vcmp.gt.f32.partialorder %v1218, 0.0
    %vm1232 = vcmp.gt.f32.partialorder %v1221, 0.0
    %vm1233 = vcmp.gt.f32.partialorder %v1224, 0.0
    %v1234 = vmul.f32 %v1203, 0.1
    %v1235 = vmul.f32 %v1206, 0.1
    %v1236 = vmul.f32 %v1209, 0.1
    %v1237 = vmul.f32 %v1212, 0.1
    %v1238 = vmul.f32 %v1215, 0.1
    %v1239 = vmul.f32 %v1218, 0.1
    %v1240 = vmul.f32 %v1221, 0.1
    %v1241 = vmul.f32 %v1224, 0.1
    %v1242 = vsel %vm1226, %v1203, %v1234
    %v1243 = vsel %vm1227, %v1206, %v1235
    %v1244 = vsel %vm1228, %v1209, %v1236
    %v1245 = vsel %vm1229, %v1212, %v1237
    %v1246 = vsel %vm1230, %v1215, %v1238
    %v1247 = vsel %vm1231, %v1218, %v1239
    %v1248 = vsel %vm1232, %v1221, %v1240
    %v1249 = vsel %vm1233, %v1224, %v1241
    %s1250 = scalar_lea.vmem %s7, 64
    %v1251 = vld [vmem:[%s1250] sm:$0xff]
    %v1252 = vld [vmem:[%s1250 + $0x8] sm:$0xff]
    %v1253 = vld [vmem:[%s1250 + $0x10] sm:$0xff]
    %v1254 = vld [vmem:[%s1250 + $0x18] sm:$0xff]
    %v1255 = vperm.slane %v36, 6
    %1256 = vmatpush.msra.mxu0 0.0
    %1257 = vmatpush.msra.mxu0 0.0
    %1258 = vmatpush.msra.mxu0 0.0
    %1259 = vmatpush.msra.mxu0 0.0
    %1260 = vmatpush.msra.mxu0 0.0
    %1261 = vmatpush.msra.mxu0 0.0
    %1262 = vmatpush.msra.mxu0 0.0
    %1263 = vmatpush.msra.mxu0 0.0
    %1264 = vmatpush.msra.mxu0 0.0
    %1265 = vmatpush.msra.mxu0 0.0
    %1266 = vmatpush.msra.mxu0 0.0
    %1267 = vmatpush.msra.mxu0 0.0
    %1268 = vmatpush.msra.mxu0 %v1254
    %1269 = vmatpush.msra.mxu0 %v1253
    %1270 = vmatpush.msra.mxu0 %v1252
    %1271 = vmatpush.msra.mxu0 %v1251
    %1272 = vmatmul.f32.gmra.mxu0 %v1091
    %v1273 = vpop.f32.mrf.mxu0
    %v1274 = vadd.f32 %v1255, %v1273
    %1275 = vmatmul.f32.gmra.mxu0 %v1094
    %v1276 = vpop.f32.mrf.mxu0
    %v1277 = vadd.f32 %v1255, %v1276
    %1278 = vmatmul.f32.gmra.mxu0 %v1097
    %v1279 = vpop.f32.mrf.mxu0
    %v1280 = vadd.f32 %v1255, %v1279
    %1281 = vmatmul.f32.gmra.mxu0 %v1100
    %v1282 = vpop.f32.mrf.mxu0
    %v1283 = vadd.f32 %v1255, %v1282
    %1284 = vmatmul.f32.gmra.mxu0 %v1103
    %v1285 = vpop.f32.mrf.mxu0
    %v1286 = vadd.f32 %v1255, %v1285
    %1287 = vmatmul.f32.gmra.mxu0 %v1106
    %v1288 = vpop.f32.mrf.mxu0
    %v1289 = vadd.f32 %v1255, %v1288
    %1290 = vmatmul.f32.gmra.mxu0 %v1109
    %v1291 = vpop.f32.mrf.mxu0
    %v1292 = vadd.f32 %v1255, %v1291
    %1293 = vmatmul.f32.gmra.mxu0 %v1112
    %v1294 = vpop.f32.mrf.mxu0
    %v1295 = vadd.f32 %v1255, %v1294
    %1296 = vdwg.mxu0
    %vm1297 = vcmp.gt.f32.partialorder %v1274, 0.0
    %vm1298 = vcmp.gt.f32.partialorder %v1277, 0.0
    %vm1299 = vcmp.gt.f32.partialorder %v1280, 0.0
    %vm1300 = vcmp.gt.f32.partialorder %v1283, 0.0
    %vm1301 = vcmp.gt.f32.partialorder %v1286, 0.0
    %vm1302 = vcmp.gt.f32.partialorder %v1289, 0.0
    %vm1303 = vcmp.gt.f32.partialorder %v1292, 0.0
    %vm1304 = vcmp.gt.f32.partialorder %v1295, 0.0
    %v1305 = vmul.f32 %v1274, 0.1
    %v1306 = vmul.f32 %v1277, 0.1
    %v1307 = vmul.f32 %v1280, 0.1
    %v1308 = vmul.f32 %v1283, 0.1
    %v1309 = vmul.f32 %v1286, 0.1
    %v1310 = vmul.f32 %v1289, 0.1
    %v1311 = vmul.f32 %v1292, 0.1
    %v1312 = vmul.f32 %v1295, 0.1
    %v1313 = vsel %vm1297, %v1274, %v1305
    %v1314 = vsel %vm1298, %v1277, %v1306
    %v1315 = vsel %vm1299, %v1280, %v1307
    %v1316 = vsel %vm1300, %v1283, %v1308
    %v1317 = vsel %vm1301, %v1286, %v1309
    %v1318 = vsel %vm1302, %v1289, %v1310
    %v1319 = vsel %vm1303, %v1292, %v1311
    %v1320 = vsel %vm1304, %v1295, %v1312
    %s1321 = scalar_lea.vmem %s7, 96
    %v1322 = vld [vmem:[%s1321] sm:$0xff]
    %v1323 = vld [vmem:[%s1321 + $0x8] sm:$0xff]
    %v1324 = vld [vmem:[%s1321 + $0x10] sm:$0xff]
    %v1325 = vld [vmem:[%s1321 + $0x18] sm:$0xff]
    %v1326 = vperm.slane %v36, 7
    %1327 = vmatpush.msra.mxu0 0.0
    %1328 = vmatpush.msra.mxu0 0.0
    %1329 = vmatpush.msra.mxu0 0.0
    %1330 = vmatpush.msra.mxu0 0.0
    %1331 = vmatpush.msra.mxu0 0.0
    %1332 = vmatpush.msra.mxu0 0.0
    %1333 = vmatpush.msra.mxu0 0.0
    %1334 = vmatpush.msra.mxu0 0.0
    %1335 = vmatpush.msra.mxu0 0.0
    %1336 = vmatpush.msra.mxu0 0.0
    %1337 = vmatpush.msra.mxu0 0.0
    %1338 = vmatpush.msra.mxu0 0.0
    %1339 = vmatpush.msra.mxu0 %v1325
    %1340 = vmatpush.msra.mxu0 %v1324
    %1341 = vmatpush.msra.mxu0 %v1323
    %1342 = vmatpush.msra.mxu0 %v1322
    %1343 = vmatmul.f32.gmra.mxu0 %v1091
    %v1344 = vpop.f32.mrf.mxu0
    %v1345 = vadd.f32 %v1326, %v1344
    %1346 = vmatmul.f32.gmra.mxu0 %v1094
    %v1347 = vpop.f32.mrf.mxu0
    %v1348 = vadd.f32 %v1326, %v1347
    %1349 = vmatmul.f32.gmra.mxu0 %v1097
    %v1350 = vpop.f32.mrf.mxu0
    %v1351 = vadd.f32 %v1326, %v1350
    %1352 = vmatmul.f32.gmra.mxu0 %v1100
    %v1353 = vpop.f32.mrf.mxu0
    %v1354 = vadd.f32 %v1326, %v1353
    %1355 = vmatmul.f32.gmra.mxu0 %v1103
    %v1356 = vpop.f32.mrf.mxu0
    %v1357 = vadd.f32 %v1326, %v1356
    %1358 = vmatmul.f32.gmra.mxu0 %v1106
    %v1359 = vpop.f32.mrf.mxu0
    %v1360 = vadd.f32 %v1326, %v1359
    %1361 = vmatmul.f32.gmra.mxu0 %v1109
    %v1362 = vpop.f32.mrf.mxu0
    %v1363 = vadd.f32 %v1326, %v1362
    %1364 = vmatmul.f32.gmra.mxu0 %v1112
    %v1365 = vpop.f32.mrf.mxu0
    %v1366 = vadd.f32 %v1326, %v1365
    %1367 = vdwg.mxu0
    %vm1368 = vcmp.gt.f32.partialorder %v1345, 0.0
    %vm1369 = vcmp.gt.f32.partialorder %v1348, 0.0
    %vm1370 = vcmp.gt.f32.partialorder %v1351, 0.0
    %vm1371 = vcmp.gt.f32.partialorder %v1354, 0.0
    %vm1372 = vcmp.gt.f32.partialorder %v1357, 0.0
    %vm1373 = vcmp.gt.f32.partialorder %v1360, 0.0
    %vm1374 = vcmp.gt.f32.partialorder %v1363, 0.0
    %vm1375 = vcmp.gt.f32.partialorder %v1366, 0.0
    %v1376 = vmul.f32 %v1345, 0.1
    %v1377 = vmul.f32 %v1348, 0.1
    %v1378 = vmul.f32 %v1351, 0.1
    %v1379 = vmul.f32 %v1354, 0.1
    %v1380 = vmul.f32 %v1357, 0.1
    %v1381 = vmul.f32 %v1360, 0.1
    %v1382 = vmul.f32 %v1363, 0.1
    %v1383 = vmul.f32 %v1366, 0.1
    %v1384 = vsel %vm1368, %v1345, %v1376
    %v1385 = vsel %vm1369, %v1348, %v1377
    %v1386 = vsel %vm1370, %v1351, %v1378
    %v1387 = vsel %vm1371, %v1354, %v1379
    %v1388 = vsel %vm1372, %v1357, %v1380
    %v1389 = vsel %vm1373, %v1360, %v1381
    %v1390 = vsel %vm1374, %v1363, %v1382
    %v1391 = vsel %vm1375, %v1366, %v1383
    %v1392 = vadd.s32 %v380, 64
    %v1393 = vadd.s32 %v380, 72
    %v1394 = vadd.s32 %v380, 80
    %v1395 = vadd.s32 %v380, 88
    %v1396 = vadd.s32 %v380, 96
    %v1397 = vadd.s32 %v380, 104
    %v1398 = vadd.s32 %v380, 112
    %v1399 = vadd.s32 %v380, 120
    %v1400 = vadd.s32 %v380, 128
    %v1401 = vadd.s32 %v380, 136
    %v1402 = vadd.s32 %v380, 144
    %v1403 = vadd.s32 %v380, 152
    %v1404 = vadd.s32 %v380, 160
    %v1405 = vadd.s32 %v380, 168
    %v1406 = vadd.s32 %v380, 176
    %v1407 = vadd.s32 %v380, 184
    %v1408 = vadd.s32 %v380, 192
    %v1409 = vadd.s32 %v380, 200
    %v1410 = vadd.s32 %v380, 208
    %v1411 = vadd.s32 %v380, 216
    %v1412 = vadd.s32 %v380, 224
    %v1413 = vadd.s32 %v380, 232
    %v1414 = vadd.s32 %v380, 240
    %v1415 = vadd.s32 %v380, 248
    %v1416 = vshra.s32 %v380, 2
    %v1417 = vshra.s32 %v381, 2
    %v1418 = vshra.s32 %v382, 2
    %v1419 = vshra.s32 %v383, 2
    %v1420 = vshra.s32 %v384, 2
    %v1421 = vshra.s32 %v385, 2
    %v1422 = vshra.s32 %v386, 2
    %v1423 = vshra.s32 %v387, 2
    %v1424 = vshra.s32 %v1392, 2
    %v1425 = vshra.s32 %v1393, 2
    %v1426 = vshra.s32 %v1394, 2
    %v1427 = vshra.s32 %v1395, 2
    %v1428 = vshra.s32 %v1396, 2
    %v1429 = vshra.s32 %v1397, 2
    %v1430 = vshra.s32 %v1398, 2
    %v1431 = vshra.s32 %v1399, 2
    %v1432 = vshra.s32 %v1400, 2
    %v1433 = vshra.s32 %v1401, 2
    %v1434 = vshra.s32 %v1402, 2
    %v1435 = vshra.s32 %v1403, 2
    %v1436 = vshra.s32 %v1404, 2
    %v1437 = vshra.s32 %v1405, 2
    %v1438 = vshra.s32 %v1406, 2
    %v1439 = vshra.s32 %v1407, 2
    %v1440 = vshra.s32 %v1408, 2
    %v1441 = vshra.s32 %v1409, 2
    %v1442 = vshra.s32 %v1410, 2
    %v1443 = vshra.s32 %v1411, 2
    %v1444 = vshra.s32 %v1412, 2
    %v1445 = vshra.s32 %v1413, 2
    %v1446 = vshra.s32 %v1414, 2
    %v1447 = vshra.s32 %v1415, 2
    %vm1448 = vcmp.eq.s32.totalorder %v150, %v1416
    %vm1449 = vcmp.eq.s32.totalorder %v150, %v1417
    %vm1450 = vcmp.eq.s32.totalorder %v150, %v1418
    %vm1451 = vcmp.eq.s32.totalorder %v150, %v1419
    %vm1452 = vcmp.eq.s32.totalorder %v150, %v1420
    %vm1453 = vcmp.eq.s32.totalorder %v150, %v1421
    %vm1454 = vcmp.eq.s32.totalorder %v150, %v1422
    %vm1455 = vcmp.eq.s32.totalorder %v150, %v1423
    %vm1456 = vcmp.eq.s32.totalorder %v150, %v1424
    %vm1457 = vcmp.eq.s32.totalorder %v150, %v1425
    %vm1458 = vcmp.eq.s32.totalorder %v150, %v1426
    %vm1459 = vcmp.eq.s32.totalorder %v150, %v1427
    %vm1460 = vcmp.eq.s32.totalorder %v150, %v1428
    %vm1461 = vcmp.eq.s32.totalorder %v150, %v1429
    %vm1462 = vcmp.eq.s32.totalorder %v150, %v1430
    %vm1463 = vcmp.eq.s32.totalorder %v150, %v1431
    %vm1464 = vcmp.eq.s32.totalorder %v150, %v1432
    %vm1465 = vcmp.eq.s32.totalorder %v150, %v1433
    %vm1466 = vcmp.eq.s32.totalorder %v150, %v1434
    %vm1467 = vcmp.eq.s32.totalorder %v150, %v1435
    %vm1468 = vcmp.eq.s32.totalorder %v150, %v1436
    %vm1469 = vcmp.eq.s32.totalorder %v150, %v1437
    %vm1470 = vcmp.eq.s32.totalorder %v150, %v1438
    %vm1471 = vcmp.eq.s32.totalorder %v150, %v1439
    %vm1472 = vcmp.eq.s32.totalorder %v150, %v1440
    %vm1473 = vcmp.eq.s32.totalorder %v150, %v1441
    %vm1474 = vcmp.eq.s32.totalorder %v150, %v1442
    %vm1475 = vcmp.eq.s32.totalorder %v150, %v1443
    %vm1476 = vcmp.eq.s32.totalorder %v150, %v1444
    %vm1477 = vcmp.eq.s32.totalorder %v150, %v1445
    %vm1478 = vcmp.eq.s32.totalorder %v150, %v1446
    %vm1479 = vcmp.eq.s32.totalorder %v150, %v1447
    %v1480 = vand.u32 %v380, 3
    %v1481 = vand.u32 %v381, 3
    %v1482 = vand.u32 %v382, 3
    %v1483 = vand.u32 %v383, 3
    %v1484 = vand.u32 %v384, 3
    %v1485 = vand.u32 %v385, 3
    %v1486 = vand.u32 %v386, 3
    %v1487 = vand.u32 %v387, 3
    %v1488 = vand.u32 %v1392, 3
    %v1489 = vand.u32 %v1393, 3
    %v1490 = vand.u32 %v1394, 3
    %v1491 = vand.u32 %v1395, 3
    %v1492 = vand.u32 %v1396, 3
    %v1493 = vand.u32 %v1397, 3
    %v1494 = vand.u32 %v1398, 3
    %v1495 = vand.u32 %v1399, 3
    %v1496 = vand.u32 %v1400, 3
    %v1497 = vand.u32 %v1401, 3
    %v1498 = vand.u32 %v1402, 3
    %v1499 = vand.u32 %v1403, 3
    %v1500 = vand.u32 %v1404, 3
    %v1501 = vand.u32 %v1405, 3
    %v1502 = vand.u32 %v1406, 3
    %v1503 = vand.u32 %v1407, 3
    %v1504 = vand.u32 %v1408, 3
    %v1505 = vand.u32 %v1409, 3
    %v1506 = vand.u32 %v1410, 3
    %v1507 = vand.u32 %v1411, 3
    %v1508 = vand.u32 %v1412, 3
    %v1509 = vand.u32 %v1413, 3
    %v1510 = vand.u32 %v1414, 3
    %v1511 = vand.u32 %v1415, 3
    %vm1512 = vcmp.eq.s32.totalorder %v1480, 0
    %vm1513 = vcmp.eq.s32.totalorder %v1481, 0
    %vm1514 = vcmp.eq.s32.totalorder %v1482, 0
    %vm1515 = vcmp.eq.s32.totalorder %v1483, 0
    %vm1516 = vcmp.eq.s32.totalorder %v1484, 0
    %vm1517 = vcmp.eq.s32.totalorder %v1485, 0
    %vm1518 = vcmp.eq.s32.totalorder %v1486, 0
    %vm1519 = vcmp.eq.s32.totalorder %v1487, 0
    %vm1520 = vcmp.eq.s32.totalorder %v1488, 0
    %vm1521 = vcmp.eq.s32.totalorder %v1489, 0
    %vm1522 = vcmp.eq.s32.totalorder %v1490, 0
    %vm1523 = vcmp.eq.s32.totalorder %v1491, 0
    %vm1524 = vcmp.eq.s32.totalorder %v1492, 0
    %vm1525 = vcmp.eq.s32.totalorder %v1493, 0
    %vm1526 = vcmp.eq.s32.totalorder %v1494, 0
    %vm1527 = vcmp.eq.s32.totalorder %v1495, 0
    %vm1528 = vcmp.eq.s32.totalorder %v1496, 0
    %vm1529 = vcmp.eq.s32.totalorder %v1497, 0
    %vm1530 = vcmp.eq.s32.totalorder %v1498, 0
    %vm1531 = vcmp.eq.s32.totalorder %v1499, 0
    %vm1532 = vcmp.eq.s32.totalorder %v1500, 0
    %vm1533 = vcmp.eq.s32.totalorder %v1501, 0
    %vm1534 = vcmp.eq.s32.totalorder %v1502, 0
    %vm1535 = vcmp.eq.s32.totalorder %v1503, 0
    %vm1536 = vcmp.eq.s32.totalorder %v1504, 0
    %vm1537 = vcmp.eq.s32.totalorder %v1505, 0
    %vm1538 = vcmp.eq.s32.totalorder %v1506, 0
    %vm1539 = vcmp.eq.s32.totalorder %v1507, 0
    %vm1540 = vcmp.eq.s32.totalorder %v1508, 0
    %vm1541 = vcmp.eq.s32.totalorder %v1509, 0
    %vm1542 = vcmp.eq.s32.totalorder %v1510, 0
    %vm1543 = vcmp.eq.s32.totalorder %v1511, 0
    %vm1544 = vmand %vm1448, %vm1512
    %vm1545 = vmand %vm1449, %vm1513
    %vm1546 = vmand %vm1450, %vm1514
    %vm1547 = vmand %vm1451, %vm1515
    %vm1548 = vmand %vm1452, %vm1516
    %vm1549 = vmand %vm1453, %vm1517
    %vm1550 = vmand %vm1454, %vm1518
    %vm1551 = vmand %vm1455, %vm1519
    %vm1552 = vmand %vm1456, %vm1520
    %vm1553 = vmand %vm1457, %vm1521
    %vm1554 = vmand %vm1458, %vm1522
    %vm1555 = vmand %vm1459, %vm1523
    %vm1556 = vmand %vm1460, %vm1524
    %vm1557 = vmand %vm1461, %vm1525
    %vm1558 = vmand %vm1462, %vm1526
    %vm1559 = vmand %vm1463, %vm1527
    %vm1560 = vmand %vm1464, %vm1528
    %vm1561 = vmand %vm1465, %vm1529
    %vm1562 = vmand %vm1466, %vm1530
    %vm1563 = vmand %vm1467, %vm1531
    %vm1564 = vmand %vm1468, %vm1532
    %vm1565 = vmand %vm1469, %vm1533
    %vm1566 = vmand %vm1470, %vm1534
    %vm1567 = vmand %vm1471, %vm1535
    %vm1568 = vmand %vm1472, %vm1536
    %vm1569 = vmand %vm1473, %vm1537
    %vm1570 = vmand %vm1474, %vm1538
    %vm1571 = vmand %vm1475, %vm1539
    %vm1572 = vmand %vm1476, %vm1540
    %vm1573 = vmand %vm1477, %vm1541
    %vm1574 = vmand %vm1478, %vm1542
    %vm1575 = vmand %vm1479, %vm1543
    %v1576 = vsel %vm1544, 1, 0
    %v1577 = vsel %vm1545, 1, 0
    %v1578 = vsel %vm1546, 1, 0
    %v1579 = vsel %vm1547, 1, 0
    %v1580 = vsel %vm1548, 1, 0
    %v1581 = vsel %vm1549, 1, 0
    %v1582 = vsel %vm1550, 1, 0
    %v1583 = vsel %vm1551, 1, 0
    %v1584 = vsel %vm1552, 1, 0
    %v1585 = vsel %vm1553, 1, 0
    %v1586 = vsel %vm1554, 1, 0
    %v1587 = vsel %vm1555, 1, 0
    %v1588 = vsel %vm1556, 1, 0
    %v1589 = vsel %vm1557, 1, 0
    %v1590 = vsel %vm1558, 1, 0
    %v1591 = vsel %vm1559, 1, 0
    %v1592 = vsel %vm1560, 1, 0
    %v1593 = vsel %vm1561, 1, 0
    %v1594 = vsel %vm1562, 1, 0
    %v1595 = vsel %vm1563, 1, 0
    %v1596 = vsel %vm1564, 1, 0
    %v1597 = vsel %vm1565, 1, 0
    %v1598 = vsel %vm1566, 1, 0
    %v1599 = vsel %vm1567, 1, 0
    %v1600 = vsel %vm1568, 1, 0
    %v1601 = vsel %vm1569, 1, 0
    %v1602 = vsel %vm1570, 1, 0
    %v1603 = vsel %vm1571, 1, 0
    %v1604 = vsel %vm1572, 1, 0
    %v1605 = vsel %vm1573, 1, 0
    %v1606 = vsel %vm1574, 1, 0
    %v1607 = vsel %vm1575, 1, 0
    %v1608 = vcvt.s32.f32 %v1576
    %v1609 = vcvt.s32.f32 %v1577
    %v1610 = vcvt.s32.f32 %v1578
    %v1611 = vcvt.s32.f32 %v1579
    %v1612 = vcvt.s32.f32 %v1580
    %v1613 = vcvt.s32.f32 %v1581
    %v1614 = vcvt.s32.f32 %v1582
    %v1615 = vcvt.s32.f32 %v1583
    %v1616 = vcvt.s32.f32 %v1584
    %v1617 = vcvt.s32.f32 %v1585
    %v1618 = vcvt.s32.f32 %v1586
    %v1619 = vcvt.s32.f32 %v1587
    %v1620 = vcvt.s32.f32 %v1588
    %v1621 = vcvt.s32.f32 %v1589
    %v1622 = vcvt.s32.f32 %v1590
    %v1623 = vcvt.s32.f32 %v1591
    %v1624 = vcvt.s32.f32 %v1592
    %v1625 = vcvt.s32.f32 %v1593
    %v1626 = vcvt.s32.f32 %v1594
    %v1627 = vcvt.s32.f32 %v1595
    %v1628 = vcvt.s32.f32 %v1596
    %v1629 = vcvt.s32.f32 %v1597
    %v1630 = vcvt.s32.f32 %v1598
    %v1631 = vcvt.s32.f32 %v1599
    %v1632 = vcvt.s32.f32 %v1600
    %v1633 = vcvt.s32.f32 %v1601
    %v1634 = vcvt.s32.f32 %v1602
    %v1635 = vcvt.s32.f32 %v1603
    %v1636 = vcvt.s32.f32 %v1604
    %v1637 = vcvt.s32.f32 %v1605
    %v1638 = vcvt.s32.f32 %v1606
    %v1639 = vcvt.s32.f32 %v1607
    %vm1640 = vcmp.eq.s32.totalorder %v1480, 1
    %vm1641 = vcmp.eq.s32.totalorder %v1481, 1
    %vm1642 = vcmp.eq.s32.totalorder %v1482, 1
    %vm1643 = vcmp.eq.s32.totalorder %v1483, 1
    %vm1644 = vcmp.eq.s32.totalorder %v1484, 1
    %vm1645 = vcmp.eq.s32.totalorder %v1485, 1
    %vm1646 = vcmp.eq.s32.totalorder %v1486, 1
    %vm1647 = vcmp.eq.s32.totalorder %v1487, 1
    %vm1648 = vcmp.eq.s32.totalorder %v1488, 1
    %vm1649 = vcmp.eq.s32.totalorder %v1489, 1
    %vm1650 = vcmp.eq.s32.totalorder %v1490, 1
    %vm1651 = vcmp.eq.s32.totalorder %v1491, 1
    %vm1652 = vcmp.eq.s32.totalorder %v1492, 1
    %vm1653 = vcmp.eq.s32.totalorder %v1493, 1
    %vm1654 = vcmp.eq.s32.totalorder %v1494, 1
    %vm1655 = vcmp.eq.s32.totalorder %v1495, 1
    %vm1656 = vcmp.eq.s32.totalorder %v1496, 1
    %vm1657 = vcmp.eq.s32.totalorder %v1497, 1
    %vm1658 = vcmp.eq.s32.totalorder %v1498, 1
    %vm1659 = vcmp.eq.s32.totalorder %v1499, 1
    %vm1660 = vcmp.eq.s32.totalorder %v1500, 1
    %vm1661 = vcmp.eq.s32.totalorder %v1501, 1
    %vm1662 = vcmp.eq.s32.totalorder %v1502, 1
    %vm1663 = vcmp.eq.s32.totalorder %v1503, 1
    %vm1664 = vcmp.eq.s32.totalorder %v1504, 1
    %vm1665 = vcmp.eq.s32.totalorder %v1505, 1
    %vm1666 = vcmp.eq.s32.totalorder %v1506, 1
    %vm1667 = vcmp.eq.s32.totalorder %v1507, 1
    %vm1668 = vcmp.eq.s32.totalorder %v1508, 1
    %vm1669 = vcmp.eq.s32.totalorder %v1509, 1
    %vm1670 = vcmp.eq.s32.totalorder %v1510, 1
    %vm1671 = vcmp.eq.s32.totalorder %v1511, 1
    %vm1672 = vmand %vm1448, %vm1640
    %vm1673 = vmand %vm1449, %vm1641
    %vm1674 = vmand %vm1450, %vm1642
    %vm1675 = vmand %vm1451, %vm1643
    %vm1676 = vmand %vm1452, %vm1644
    %vm1677 = vmand %vm1453, %vm1645
    %vm1678 = vmand %vm1454, %vm1646
    %vm1679 = vmand %vm1455, %vm1647
    %vm1680 = vmand %vm1456, %vm1648
    %vm1681 = vmand %vm1457, %vm1649
    %vm1682 = vmand %vm1458, %vm1650
    %vm1683 = vmand %vm1459, %vm1651
    %vm1684 = vmand %vm1460, %vm1652
    %vm1685 = vmand %vm1461, %vm1653
    %vm1686 = vmand %vm1462, %vm1654
    %vm1687 = vmand %vm1463, %vm1655
    %vm1688 = vmand %vm1464, %vm1656
    %vm1689 = vmand %vm1465, %vm1657
    %vm1690 = vmand %vm1466, %vm1658
    %vm1691 = vmand %vm1467, %vm1659
    %vm1692 = vmand %vm1468, %vm1660
    %vm1693 = vmand %vm1469, %vm1661
    %vm1694 = vmand %vm1470, %vm1662
    %vm1695 = vmand %vm1471, %vm1663
    %vm1696 = vmand %vm1472, %vm1664
    %vm1697 = vmand %vm1473, %vm1665
    %vm1698 = vmand %vm1474, %vm1666
    %vm1699 = vmand %vm1475, %vm1667
    %vm1700 = vmand %vm1476, %vm1668
    %vm1701 = vmand %vm1477, %vm1669
    %vm1702 = vmand %vm1478, %vm1670
    %vm1703 = vmand %vm1479, %vm1671
    %v1704 = vsel %vm1672, 1, 0
    %v1705 = vsel %vm1673, 1, 0
    %v1706 = vsel %vm1674, 1, 0
    %v1707 = vsel %vm1675, 1, 0
    %v1708 = vsel %vm1676, 1, 0
    %v1709 = vsel %vm1677, 1, 0
    %v1710 = vsel %vm1678, 1, 0
    %v1711 = vsel %vm1679, 1, 0
    %v1712 = vsel %vm1680, 1, 0
    %v1713 = vsel %vm1681, 1, 0
    %v1714 = vsel %vm1682, 1, 0
    %v1715 = vsel %vm1683, 1, 0
    %v1716 = vsel %vm1684, 1, 0
    %v1717 = vsel %vm1685, 1, 0
    %v1718 = vsel %vm1686, 1, 0
    %v1719 = vsel %vm1687, 1, 0
    %v1720 = vsel %vm1688, 1, 0
    %v1721 = vsel %vm1689, 1, 0
    %v1722 = vsel %vm1690, 1, 0
    %v1723 = vsel %vm1691, 1, 0
    %v1724 = vsel %vm1692, 1, 0
    %v1725 = vsel %vm1693, 1, 0
    %v1726 = vsel %vm1694, 1, 0
    %v1727 = vsel %vm1695, 1, 0
    %v1728 = vsel %vm1696, 1, 0
    %v1729 = vsel %vm1697, 1, 0
    %v1730 = vsel %vm1698, 1, 0
    %v1731 = vsel %vm1699, 1, 0
    %v1732 = vsel %vm1700, 1, 0
    %v1733 = vsel %vm1701, 1, 0
    %v1734 = vsel %vm1702, 1, 0
    %v1735 = vsel %vm1703, 1, 0
    %v1736 = vcvt.s32.f32 %v1704
    %v1737 = vcvt.s32.f32 %v1705
    %v1738 = vcvt.s32.f32 %v1706
    %v1739 = vcvt.s32.f32 %v1707
    %v1740 = vcvt.s32.f32 %v1708
    %v1741 = vcvt.s32.f32 %v1709
    %v1742 = vcvt.s32.f32 %v1710
    %v1743 = vcvt.s32.f32 %v1711
    %v1744 = vcvt.s32.f32 %v1712
    %v1745 = vcvt.s32.f32 %v1713
    %v1746 = vcvt.s32.f32 %v1714
    %v1747 = vcvt.s32.f32 %v1715
    %v1748 = vcvt.s32.f32 %v1716
    %v1749 = vcvt.s32.f32 %v1717
    %v1750 = vcvt.s32.f32 %v1718
    %v1751 = vcvt.s32.f32 %v1719
    %v1752 = vcvt.s32.f32 %v1720
    %v1753 = vcvt.s32.f32 %v1721
    %v1754 = vcvt.s32.f32 %v1722
    %v1755 = vcvt.s32.f32 %v1723
    %v1756 = vcvt.s32.f32 %v1724
    %v1757 = vcvt.s32.f32 %v1725
    %v1758 = vcvt.s32.f32 %v1726
    %v1759 = vcvt.s32.f32 %v1727
    %v1760 = vcvt.s32.f32 %v1728
    %v1761 = vcvt.s32.f32 %v1729
    %v1762 = vcvt.s32.f32 %v1730
    %v1763 = vcvt.s32.f32 %v1731
    %v1764 = vcvt.s32.f32 %v1732
    %v1765 = vcvt.s32.f32 %v1733
    %v1766 = vcvt.s32.f32 %v1734
    %v1767 = vcvt.s32.f32 %v1735
    %v1769 = vsel %vm710, %v1736, 0
    %v1772 = vsel %vm710, %v1737, 0
    %v1775 = vsel %vm710, %v1738, 0
    %v1778 = vsel %vm710, %v1739, 0
    %v1781 = vsel %vm710, %v1740, 0
    %v1784 = vsel %vm710, %v1741, 0
    %v1787 = vsel %vm710, %v1742, 0
    %v1790 = vsel %vm710, %v1743, 0
    %v1793 = vsel %vm710, %v1744, 0
    %v1796 = vsel %vm710, %v1745, 0
    %v1799 = vsel %vm710, %v1746, 0
    %v1802 = vsel %vm710, %v1747, 0
    %v1805 = vsel %vm710, %v1748, 0
    %v1808 = vsel %vm710, %v1749, 0
    %v1811 = vsel %vm710, %v1750, 0
    %v1814 = vsel %vm710, %v1751, 0
    %v1817 = vsel %vm710, %v1752, 0
    %v1820 = vsel %vm710, %v1753, 0
    %v1823 = vsel %vm710, %v1754, 0
    %v1826 = vsel %vm710, %v1755, 0
    %v1829 = vsel %vm710, %v1756, 0
    %v1832 = vsel %vm710, %v1757, 0
    %v1835 = vsel %vm710, %v1758, 0
    %v1838 = vsel %vm710, %v1759, 0
    %v1841 = vsel %vm710, %v1760, 0
    %v1844 = vsel %vm710, %v1761, 0
    %v1847 = vsel %vm710, %v1762, 0
    %v1850 = vsel %vm710, %v1763, 0
    %v1853 = vsel %vm710, %v1764, 0
    %v1856 = vsel %vm710, %v1765, 0
    %v1859 = vsel %vm710, %v1766, 0
    %v1862 = vsel %vm710, %v1767, 0
    %1864 = vmatpush.msra.mxu0 0.0
    %1865 = vmatpush.msra.mxu0 0.0
    %1866 = vmatpush.msra.mxu0 0.0
    %1867 = vmatpush.msra.mxu0 0.0
    %1868 = vmatpush.msra.mxu0 0.0
    %1869 = vmatpush.msra.mxu0 0.0
    %1870 = vmatpush.msra.mxu0 0.0
    %1871 = vmatpush.msra.mxu0 0.0
    %1872 = vmatpush.msra.mxu0 %v1249
    %1873 = vmatpush.msra.mxu0 %v1248
    %1874 = vmatpush.msra.mxu0 %v1247
    %1875 = vmatpush.msra.mxu0 %v1246
    %1876 = vmatpush.msra.mxu0 %v1245
    %1877 = vmatpush.msra.mxu0 %v1244
    %1878 = vmatpush.msra.mxu0 %v1243
    %1879 = vmatpush.msra.mxu0 %v1242
    %1880 = vmatmul.f32.gmra.mxu0 %v1769
    %v1881 = vpop.f32.mrf.mxu0
    %v1882 = vadd.f32 0.0, %v1881
    %1883 = vmatmul.f32.gmra.mxu0 %v1772
    %v1884 = vpop.f32.mrf.mxu0
    %v1885 = vadd.f32 0.0, %v1884
    %1886 = vmatmul.f32.gmra.mxu0 %v1775
    %v1887 = vpop.f32.mrf.mxu0
    %v1888 = vadd.f32 0.0, %v1887
    %1889 = vmatmul.f32.gmra.mxu0 %v1778
    %v1890 = vpop.f32.mrf.mxu0
    %v1891 = vadd.f32 0.0, %v1890
    %1892 = vmatmul.f32.gmra.mxu0 %v1781
    %v1893 = vpop.f32.mrf.mxu0
    %v1894 = vadd.f32 0.0, %v1893
    %1895 = vmatmul.f32.gmra.mxu0 %v1784
    %v1896 = vpop.f32.mrf.mxu0
    %v1897 = vadd.f32 0.0, %v1896
    %1898 = vmatmul.f32.gmra.mxu0 %v1787
    %v1899 = vpop.f32.mrf.mxu0
    %v1900 = vadd.f32 0.0, %v1899
    %1901 = vmatmul.f32.gmra.mxu0 %v1790
    %v1902 = vpop.f32.mrf.mxu0
    %v1903 = vadd.f32 0.0, %v1902
    %1904 = vmatmul.f32.gmra.mxu0 %v1793
    %v1905 = vpop.f32.mrf.mxu0
    %v1906 = vadd.f32 0.0, %v1905
    %1907 = vmatmul.f32.gmra.mxu0 %v1796
    %v1908 = vpop.f32.mrf.mxu0
    %v1909 = vadd.f32 0.0, %v1908
    %1910 = vmatmul.f32.gmra.mxu0 %v1799
    %v1911 = vpop.f32.mrf.mxu0
    %v1912 = vadd.f32 0.0, %v1911
    %1913 = vmatmul.f32.gmra.mxu0 %v1802
    %v1914 = vpop.f32.mrf.mxu0
    %v1915 = vadd.f32 0.0, %v1914
    %1916 = vmatmul.f32.gmra.mxu0 %v1805
    %v1917 = vpop.f32.mrf.mxu0
    %v1918 = vadd.f32 0.0, %v1917
    %1919 = vmatmul.f32.gmra.mxu0 %v1808
    %v1920 = vpop.f32.mrf.mxu0
    %v1921 = vadd.f32 0.0, %v1920
    %1922 = vmatmul.f32.gmra.mxu0 %v1811
    %v1923 = vpop.f32.mrf.mxu0
    %v1924 = vadd.f32 0.0, %v1923
    %1925 = vmatmul.f32.gmra.mxu0 %v1814
    %v1926 = vpop.f32.mrf.mxu0
    %v1927 = vadd.f32 0.0, %v1926
    %1928 = vmatmul.f32.gmra.mxu0 %v1817
    %v1929 = vpop.f32.mrf.mxu0
    %v1930 = vadd.f32 0.0, %v1929
    %1931 = vmatmul.f32.gmra.mxu0 %v1820
    %v1932 = vpop.f32.mrf.mxu0
    %v1933 = vadd.f32 0.0, %v1932
    %1934 = vmatmul.f32.gmra.mxu0 %v1823
    %v1935 = vpop.f32.mrf.mxu0
    %v1936 = vadd.f32 0.0, %v1935
    %1937 = vmatmul.f32.gmra.mxu0 %v1826
    %v1938 = vpop.f32.mrf.mxu0
    %v1939 = vadd.f32 0.0, %v1938
    %1940 = vmatmul.f32.gmra.mxu0 %v1829
    %v1941 = vpop.f32.mrf.mxu0
    %v1942 = vadd.f32 0.0, %v1941
    %1943 = vmatmul.f32.gmra.mxu0 %v1832
    %v1944 = vpop.f32.mrf.mxu0
    %v1945 = vadd.f32 0.0, %v1944
    %1946 = vmatmul.f32.gmra.mxu0 %v1835
    %v1947 = vpop.f32.mrf.mxu0
    %v1948 = vadd.f32 0.0, %v1947
    %1949 = vmatmul.f32.gmra.mxu0 %v1838
    %v1950 = vpop.f32.mrf.mxu0
    %v1951 = vadd.f32 0.0, %v1950
    %1952 = vmatmul.f32.gmra.mxu0 %v1841
    %v1953 = vpop.f32.mrf.mxu0
    %v1954 = vadd.f32 0.0, %v1953
    %1955 = vmatmul.f32.gmra.mxu0 %v1844
    %v1956 = vpop.f32.mrf.mxu0
    %v1957 = vadd.f32 0.0, %v1956
    %1958 = vmatmul.f32.gmra.mxu0 %v1847
    %v1959 = vpop.f32.mrf.mxu0
    %v1960 = vadd.f32 0.0, %v1959
    %1961 = vmatmul.f32.gmra.mxu0 %v1850
    %v1962 = vpop.f32.mrf.mxu0
    %v1963 = vadd.f32 0.0, %v1962
    %1964 = vmatmul.f32.gmra.mxu0 %v1853
    %v1965 = vpop.f32.mrf.mxu0
    %v1966 = vadd.f32 0.0, %v1965
    %1967 = vmatmul.f32.gmra.mxu0 %v1856
    %v1968 = vpop.f32.mrf.mxu0
    %v1969 = vadd.f32 0.0, %v1968
    %1970 = vmatmul.f32.gmra.mxu0 %v1859
    %v1971 = vpop.f32.mrf.mxu0
    %v1972 = vadd.f32 0.0, %v1971
    %1973 = vmatmul.f32.gmra.mxu0 %v1862
    %v1974 = vpop.f32.mrf.mxu0
    %v1975 = vadd.f32 0.0, %v1974
    %1976 = vdwg.mxu0
    %v1978 = vsel %vm710, %v1608, 0
    %v1981 = vsel %vm710, %v1609, 0
    %v1984 = vsel %vm710, %v1610, 0
    %v1987 = vsel %vm710, %v1611, 0
    %v1990 = vsel %vm710, %v1612, 0
    %v1993 = vsel %vm710, %v1613, 0
    %v1996 = vsel %vm710, %v1614, 0
    %v1999 = vsel %vm710, %v1615, 0
    %v2002 = vsel %vm710, %v1616, 0
    %v2005 = vsel %vm710, %v1617, 0
    %v2008 = vsel %vm710, %v1618, 0
    %v2011 = vsel %vm710, %v1619, 0
    %v2014 = vsel %vm710, %v1620, 0
    %v2017 = vsel %vm710, %v1621, 0
    %v2020 = vsel %vm710, %v1622, 0
    %v2023 = vsel %vm710, %v1623, 0
    %v2026 = vsel %vm710, %v1624, 0
    %v2029 = vsel %vm710, %v1625, 0
    %v2032 = vsel %vm710, %v1626, 0
    %v2035 = vsel %vm710, %v1627, 0
    %v2038 = vsel %vm710, %v1628, 0
    %v2041 = vsel %vm710, %v1629, 0
    %v2044 = vsel %vm710, %v1630, 0
    %v2047 = vsel %vm710, %v1631, 0
    %v2050 = vsel %vm710, %v1632, 0
    %v2053 = vsel %vm710, %v1633, 0
    %v2056 = vsel %vm710, %v1634, 0
    %v2059 = vsel %vm710, %v1635, 0
    %v2062 = vsel %vm710, %v1636, 0
    %v2065 = vsel %vm710, %v1637, 0
    %v2068 = vsel %vm710, %v1638, 0
    %v2071 = vsel %vm710, %v1639, 0
    %2073 = vmatpush.msra.mxu0 0.0
    %2074 = vmatpush.msra.mxu0 0.0
    %2075 = vmatpush.msra.mxu0 0.0
    %2076 = vmatpush.msra.mxu0 0.0
    %2077 = vmatpush.msra.mxu0 0.0
    %2078 = vmatpush.msra.mxu0 0.0
    %2079 = vmatpush.msra.mxu0 0.0
    %2080 = vmatpush.msra.mxu0 0.0
    %2081 = vmatpush.msra.mxu0 %v1178
    %2082 = vmatpush.msra.mxu0 %v1177
    %2083 = vmatpush.msra.mxu0 %v1176
    %2084 = vmatpush.msra.mxu0 %v1175
    %2085 = vmatpush.msra.mxu0 %v1174
    %2086 = vmatpush.msra.mxu0 %v1173
    %2087 = vmatpush.msra.mxu0 %v1172
    %2088 = vmatpush.msra.mxu0 %v1171
    %2089 = vmatmul.f32.gmra.mxu0 %v1978
    %v2090 = vpop.f32.mrf.mxu0
    %v2091 = vadd.f32 %v1882, %v2090
    %2092 = vmatmul.f32.gmra.mxu0 %v1981
    %v2093 = vpop.f32.mrf.mxu0
    %v2094 = vadd.f32 %v1885, %v2093
    %2095 = vmatmul.f32.gmra.mxu0 %v1984
    %v2096 = vpop.f32.mrf.mxu0
    %v2097 = vadd.f32 %v1888, %v2096
    %2098 = vmatmul.f32.gmra.mxu0 %v1987
    %v2099 = vpop.f32.mrf.mxu0
    %v2100 = vadd.f32 %v1891, %v2099
    %2101 = vmatmul.f32.gmra.mxu0 %v1990
    %v2102 = vpop.f32.mrf.mxu0
    %v2103 = vadd.f32 %v1894, %v2102
    %2104 = vmatmul.f32.gmra.mxu0 %v1993
    %v2105 = vpop.f32.mrf.mxu0
    %v2106 = vadd.f32 %v1897, %v2105
    %2107 = vmatmul.f32.gmra.mxu0 %v1996
    %v2108 = vpop.f32.mrf.mxu0
    %v2109 = vadd.f32 %v1900, %v2108
    %2110 = vmatmul.f32.gmra.mxu0 %v1999
    %v2111 = vpop.f32.mrf.mxu0
    %v2112 = vadd.f32 %v1903, %v2111
    %2113 = vmatmul.f32.gmra.mxu0 %v2002
    %v2114 = vpop.f32.mrf.mxu0
    %v2115 = vadd.f32 %v1906, %v2114
    %2116 = vmatmul.f32.gmra.mxu0 %v2005
    %v2117 = vpop.f32.mrf.mxu0
    %v2118 = vadd.f32 %v1909, %v2117
    %2119 = vmatmul.f32.gmra.mxu0 %v2008
    %v2120 = vpop.f32.mrf.mxu0
    %v2121 = vadd.f32 %v1912, %v2120
    %2122 = vmatmul.f32.gmra.mxu0 %v2011
    %v2123 = vpop.f32.mrf.mxu0
    %v2124 = vadd.f32 %v1915, %v2123
    %2125 = vmatmul.f32.gmra.mxu0 %v2014
    %v2126 = vpop.f32.mrf.mxu0
    %v2127 = vadd.f32 %v1918, %v2126
    %2128 = vmatmul.f32.gmra.mxu0 %v2017
    %v2129 = vpop.f32.mrf.mxu0
    %v2130 = vadd.f32 %v1921, %v2129
    %2131 = vmatmul.f32.gmra.mxu0 %v2020
    %v2132 = vpop.f32.mrf.mxu0
    %v2133 = vadd.f32 %v1924, %v2132
    %2134 = vmatmul.f32.gmra.mxu0 %v2023
    %v2135 = vpop.f32.mrf.mxu0
    %v2136 = vadd.f32 %v1927, %v2135
    %2137 = vmatmul.f32.gmra.mxu0 %v2026
    %v2138 = vpop.f32.mrf.mxu0
    %v2139 = vadd.f32 %v1930, %v2138
    %2140 = vmatmul.f32.gmra.mxu0 %v2029
    %v2141 = vpop.f32.mrf.mxu0
    %v2142 = vadd.f32 %v1933, %v2141
    %2143 = vmatmul.f32.gmra.mxu0 %v2032
    %v2144 = vpop.f32.mrf.mxu0
    %v2145 = vadd.f32 %v1936, %v2144
    %2146 = vmatmul.f32.gmra.mxu0 %v2035
    %v2147 = vpop.f32.mrf.mxu0
    %v2148 = vadd.f32 %v1939, %v2147
    %2149 = vmatmul.f32.gmra.mxu0 %v2038
    %v2150 = vpop.f32.mrf.mxu0
    %v2151 = vadd.f32 %v1942, %v2150
    %2152 = vmatmul.f32.gmra.mxu0 %v2041
    %v2153 = vpop.f32.mrf.mxu0
    %v2154 = vadd.f32 %v1945, %v2153
    %2155 = vmatmul.f32.gmra.mxu0 %v2044
    %v2156 = vpop.f32.mrf.mxu0
    %v2157 = vadd.f32 %v1948, %v2156
    %2158 = vmatmul.f32.gmra.mxu0 %v2047
    %v2159 = vpop.f32.mrf.mxu0
    %v2160 = vadd.f32 %v1951, %v2159
    %2161 = vmatmul.f32.gmra.mxu0 %v2050
    %v2162 = vpop.f32.mrf.mxu0
    %v2163 = vadd.f32 %v1954, %v2162
    %2164 = vmatmul.f32.gmra.mxu0 %v2053
    %v2165 = vpop.f32.mrf.mxu0
    %v2166 = vadd.f32 %v1957, %v2165
    %2167 = vmatmul.f32.gmra.mxu0 %v2056
    %v2168 = vpop.f32.mrf.mxu0
    %v2169 = vadd.f32 %v1960, %v2168
    %2170 = vmatmul.f32.gmra.mxu0 %v2059
    %v2171 = vpop.f32.mrf.mxu0
    %v2172 = vadd.f32 %v1963, %v2171
    %2173 = vmatmul.f32.gmra.mxu0 %v2062
    %v2174 = vpop.f32.mrf.mxu0
    %v2175 = vadd.f32 %v1966, %v2174
    %2176 = vmatmul.f32.gmra.mxu0 %v2065
    %v2177 = vpop.f32.mrf.mxu0
    %v2178 = vadd.f32 %v1969, %v2177
    %2179 = vmatmul.f32.gmra.mxu0 %v2068
    %v2180 = vpop.f32.mrf.mxu0
    %v2181 = vadd.f32 %v1972, %v2180
    %2182 = vmatmul.f32.gmra.mxu0 %v2071
    %v2183 = vpop.f32.mrf.mxu0
    %v2184 = vadd.f32 %v1975, %v2183
    %2185 = vdwg.mxu0
    %vm2186 = vcmp.eq.s32.totalorder %v1480, 2
    %vm2187 = vcmp.eq.s32.totalorder %v1481, 2
    %vm2188 = vcmp.eq.s32.totalorder %v1482, 2
    %vm2189 = vcmp.eq.s32.totalorder %v1483, 2
    %vm2190 = vcmp.eq.s32.totalorder %v1484, 2
    %vm2191 = vcmp.eq.s32.totalorder %v1485, 2
    %vm2192 = vcmp.eq.s32.totalorder %v1486, 2
    %vm2193 = vcmp.eq.s32.totalorder %v1487, 2
    %vm2194 = vcmp.eq.s32.totalorder %v1488, 2
    %vm2195 = vcmp.eq.s32.totalorder %v1489, 2
    %vm2196 = vcmp.eq.s32.totalorder %v1490, 2
    %vm2197 = vcmp.eq.s32.totalorder %v1491, 2
    %vm2198 = vcmp.eq.s32.totalorder %v1492, 2
    %vm2199 = vcmp.eq.s32.totalorder %v1493, 2
    %vm2200 = vcmp.eq.s32.totalorder %v1494, 2
    %vm2201 = vcmp.eq.s32.totalorder %v1495, 2
    %vm2202 = vcmp.eq.s32.totalorder %v1496, 2
    %vm2203 = vcmp.eq.s32.totalorder %v1497, 2
    %vm2204 = vcmp.eq.s32.totalorder %v1498, 2
    %vm2205 = vcmp.eq.s32.totalorder %v1499, 2
    %vm2206 = vcmp.eq.s32.totalorder %v1500, 2
    %vm2207 = vcmp.eq.s32.totalorder %v1501, 2
    %vm2208 = vcmp.eq.s32.totalorder %v1502, 2
    %vm2209 = vcmp.eq.s32.totalorder %v1503, 2
    %vm2210 = vcmp.eq.s32.totalorder %v1504, 2
    %vm2211 = vcmp.eq.s32.totalorder %v1505, 2
    %vm2212 = vcmp.eq.s32.totalorder %v1506, 2
    %vm2213 = vcmp.eq.s32.totalorder %v1507, 2
    %vm2214 = vcmp.eq.s32.totalorder %v1508, 2
    %vm2215 = vcmp.eq.s32.totalorder %v1509, 2
    %vm2216 = vcmp.eq.s32.totalorder %v1510, 2
    %vm2217 = vcmp.eq.s32.totalorder %v1511, 2
    %vm2218 = vmand %vm1448, %vm2186
    %vm2219 = vmand %vm1449, %vm2187
    %vm2220 = vmand %vm1450, %vm2188
    %vm2221 = vmand %vm1451, %vm2189
    %vm2222 = vmand %vm1452, %vm2190
    %vm2223 = vmand %vm1453, %vm2191
    %vm2224 = vmand %vm1454, %vm2192
    %vm2225 = vmand %vm1455, %vm2193
    %vm2226 = vmand %vm1456, %vm2194
    %vm2227 = vmand %vm1457, %vm2195
    %vm2228 = vmand %vm1458, %vm2196
    %vm2229 = vmand %vm1459, %vm2197
    %vm2230 = vmand %vm1460, %vm2198
    %vm2231 = vmand %vm1461, %vm2199
    %vm2232 = vmand %vm1462, %vm2200
    %vm2233 = vmand %vm1463, %vm2201
    %vm2234 = vmand %vm1464, %vm2202
    %vm2235 = vmand %vm1465, %vm2203
    %vm2236 = vmand %vm1466, %vm2204
    %vm2237 = vmand %vm1467, %vm2205
    %vm2238 = vmand %vm1468, %vm2206
    %vm2239 = vmand %vm1469, %vm2207
    %vm2240 = vmand %vm1470, %vm2208
    %vm2241 = vmand %vm1471, %vm2209
    %vm2242 = vmand %vm1472, %vm2210
    %vm2243 = vmand %vm1473, %vm2211
    %vm2244 = vmand %vm1474, %vm2212
    %vm2245 = vmand %vm1475, %vm2213
    %vm2246 = vmand %vm1476, %vm2214
    %vm2247 = vmand %vm1477, %vm2215
    %vm2248 = vmand %vm1478, %vm2216
    %vm2249 = vmand %vm1479, %vm2217
    %v2250 = vsel %vm2218, 1, 0
    %v2251 = vsel %vm2219, 1, 0
    %v2252 = vsel %vm2220, 1, 0
    %v2253 = vsel %vm2221, 1, 0
    %v2254 = vsel %vm2222, 1, 0
    %v2255 = vsel %vm2223, 1, 0
    %v2256 = vsel %vm2224, 1, 0
    %v2257 = vsel %vm2225, 1, 0
    %v2258 = vsel %vm2226, 1, 0
    %v2259 = vsel %vm2227, 1, 0
    %v2260 = vsel %vm2228, 1, 0
    %v2261 = vsel %vm2229, 1, 0
    %v2262 = vsel %vm2230, 1, 0
    %v2263 = vsel %vm2231, 1, 0
    %v2264 = vsel %vm2232, 1, 0
    %v2265 = vsel %vm2233, 1, 0
    %v2266 = vsel %vm2234, 1, 0
    %v2267 = vsel %vm2235, 1, 0
    %v2268 = vsel %vm2236, 1, 0
    %v2269 = vsel %vm2237, 1, 0
    %v2270 = vsel %vm2238, 1, 0
    %v2271 = vsel %vm2239, 1, 0
    %v2272 = vsel %vm2240, 1, 0
    %v2273 = vsel %vm2241, 1, 0
    %v2274 = vsel %vm2242, 1, 0
    %v2275 = vsel %vm2243, 1, 0
    %v2276 = vsel %vm2244, 1, 0
    %v2277 = vsel %vm2245, 1, 0
    %v2278 = vsel %vm2246, 1, 0
    %v2279 = vsel %vm2247, 1, 0
    %v2280 = vsel %vm2248, 1, 0
    %v2281 = vsel %vm2249, 1, 0
    %v2282 = vcvt.s32.f32 %v2250
    %v2283 = vcvt.s32.f32 %v2251
    %v2284 = vcvt.s32.f32 %v2252
    %v2285 = vcvt.s32.f32 %v2253
    %v2286 = vcvt.s32.f32 %v2254
    %v2287 = vcvt.s32.f32 %v2255
    %v2288 = vcvt.s32.f32 %v2256
    %v2289 = vcvt.s32.f32 %v2257
    %v2290 = vcvt.s32.f32 %v2258
    %v2291 = vcvt.s32.f32 %v2259
    %v2292 = vcvt.s32.f32 %v2260
    %v2293 = vcvt.s32.f32 %v2261
    %v2294 = vcvt.s32.f32 %v2262
    %v2295 = vcvt.s32.f32 %v2263
    %v2296 = vcvt.s32.f32 %v2264
    %v2297 = vcvt.s32.f32 %v2265
    %v2298 = vcvt.s32.f32 %v2266
    %v2299 = vcvt.s32.f32 %v2267
    %v2300 = vcvt.s32.f32 %v2268
    %v2301 = vcvt.s32.f32 %v2269
    %v2302 = vcvt.s32.f32 %v2270
    %v2303 = vcvt.s32.f32 %v2271
    %v2304 = vcvt.s32.f32 %v2272
    %v2305 = vcvt.s32.f32 %v2273
    %v2306 = vcvt.s32.f32 %v2274
    %v2307 = vcvt.s32.f32 %v2275
    %v2308 = vcvt.s32.f32 %v2276
    %v2309 = vcvt.s32.f32 %v2277
    %v2310 = vcvt.s32.f32 %v2278
    %v2311 = vcvt.s32.f32 %v2279
    %v2312 = vcvt.s32.f32 %v2280
    %v2313 = vcvt.s32.f32 %v2281
    %v2315 = vsel %vm710, %v2282, 0
    %v2318 = vsel %vm710, %v2283, 0
    %v2321 = vsel %vm710, %v2284, 0
    %v2324 = vsel %vm710, %v2285, 0
    %v2327 = vsel %vm710, %v2286, 0
    %v2330 = vsel %vm710, %v2287, 0
    %v2333 = vsel %vm710, %v2288, 0
    %v2336 = vsel %vm710, %v2289, 0
    %v2339 = vsel %vm710, %v2290, 0
    %v2342 = vsel %vm710, %v2291, 0
    %v2345 = vsel %vm710, %v2292, 0
    %v2348 = vsel %vm710, %v2293, 0
    %v2351 = vsel %vm710, %v2294, 0
    %v2354 = vsel %vm710, %v2295, 0
    %v2357 = vsel %vm710, %v2296, 0
    %v2360 = vsel %vm710, %v2297, 0
    %v2363 = vsel %vm710, %v2298, 0
    %v2366 = vsel %vm710, %v2299, 0
    %v2369 = vsel %vm710, %v2300, 0
    %v2372 = vsel %vm710, %v2301, 0
    %v2375 = vsel %vm710, %v2302, 0
    %v2378 = vsel %vm710, %v2303, 0
    %v2381 = vsel %vm710, %v2304, 0
    %v2384 = vsel %vm710, %v2305, 0
    %v2387 = vsel %vm710, %v2306, 0
    %v2390 = vsel %vm710, %v2307, 0
    %v2393 = vsel %vm710, %v2308, 0
    %v2396 = vsel %vm710, %v2309, 0
    %v2399 = vsel %vm710, %v2310, 0
    %v2402 = vsel %vm710, %v2311, 0
    %v2405 = vsel %vm710, %v2312, 0
    %v2408 = vsel %vm710, %v2313, 0
    %2410 = vmatpush.msra.mxu0 0.0
    %2411 = vmatpush.msra.mxu0 0.0
    %2412 = vmatpush.msra.mxu0 0.0
    %2413 = vmatpush.msra.mxu0 0.0
    %2414 = vmatpush.msra.mxu0 0.0
    %2415 = vmatpush.msra.mxu0 0.0
    %2416 = vmatpush.msra.mxu0 0.0
    %2417 = vmatpush.msra.mxu0 0.0
    %2418 = vmatpush.msra.mxu0 %v1320
    %2419 = vmatpush.msra.mxu0 %v1319
    %2420 = vmatpush.msra.mxu0 %v1318
    %2421 = vmatpush.msra.mxu0 %v1317
    %2422 = vmatpush.msra.mxu0 %v1316
    %2423 = vmatpush.msra.mxu0 %v1315
    %2424 = vmatpush.msra.mxu0 %v1314
    %2425 = vmatpush.msra.mxu0 %v1313
    %2426 = vmatmul.f32.gmra.mxu0 %v2315
    %v2427 = vpop.f32.mrf.mxu0
    %v2428 = vadd.f32 0.0, %v2427
    %2429 = vmatmul.f32.gmra.mxu0 %v2318
    %v2430 = vpop.f32.mrf.mxu0
    %v2431 = vadd.f32 0.0, %v2430
    %2432 = vmatmul.f32.gmra.mxu0 %v2321
    %v2433 = vpop.f32.mrf.mxu0
    %v2434 = vadd.f32 0.0, %v2433
    %2435 = vmatmul.f32.gmra.mxu0 %v2324
    %v2436 = vpop.f32.mrf.mxu0
    %v2437 = vadd.f32 0.0, %v2436
    %2438 = vmatmul.f32.gmra.mxu0 %v2327
    %v2439 = vpop.f32.mrf.mxu0
    %v2440 = vadd.f32 0.0, %v2439
    %2441 = vmatmul.f32.gmra.mxu0 %v2330
    %v2442 = vpop.f32.mrf.mxu0
    %v2443 = vadd.f32 0.0, %v2442
    %2444 = vmatmul.f32.gmra.mxu0 %v2333
    %v2445 = vpop.f32.mrf.mxu0
    %v2446 = vadd.f32 0.0, %v2445
    %2447 = vmatmul.f32.gmra.mxu0 %v2336
    %v2448 = vpop.f32.mrf.mxu0
    %v2449 = vadd.f32 0.0, %v2448
    %2450 = vmatmul.f32.gmra.mxu0 %v2339
    %v2451 = vpop.f32.mrf.mxu0
    %v2452 = vadd.f32 0.0, %v2451
    %2453 = vmatmul.f32.gmra.mxu0 %v2342
    %v2454 = vpop.f32.mrf.mxu0
    %v2455 = vadd.f32 0.0, %v2454
    %2456 = vmatmul.f32.gmra.mxu0 %v2345
    %v2457 = vpop.f32.mrf.mxu0
    %v2458 = vadd.f32 0.0, %v2457
    %2459 = vmatmul.f32.gmra.mxu0 %v2348
    %v2460 = vpop.f32.mrf.mxu0
    %v2461 = vadd.f32 0.0, %v2460
    %2462 = vmatmul.f32.gmra.mxu0 %v2351
    %v2463 = vpop.f32.mrf.mxu0
    %v2464 = vadd.f32 0.0, %v2463
    %2465 = vmatmul.f32.gmra.mxu0 %v2354
    %v2466 = vpop.f32.mrf.mxu0
    %v2467 = vadd.f32 0.0, %v2466
    %2468 = vmatmul.f32.gmra.mxu0 %v2357
    %v2469 = vpop.f32.mrf.mxu0
    %v2470 = vadd.f32 0.0, %v2469
    %2471 = vmatmul.f32.gmra.mxu0 %v2360
    %v2472 = vpop.f32.mrf.mxu0
    %v2473 = vadd.f32 0.0, %v2472
    %2474 = vmatmul.f32.gmra.mxu0 %v2363
    %v2475 = vpop.f32.mrf.mxu0
    %v2476 = vadd.f32 0.0, %v2475
    %2477 = vmatmul.f32.gmra.mxu0 %v2366
    %v2478 = vpop.f32.mrf.mxu0
    %v2479 = vadd.f32 0.0, %v2478
    %2480 = vmatmul.f32.gmra.mxu0 %v2369
    %v2481 = vpop.f32.mrf.mxu0
    %v2482 = vadd.f32 0.0, %v2481
    %2483 = vmatmul.f32.gmra.mxu0 %v2372
    %v2484 = vpop.f32.mrf.mxu0
    %v2485 = vadd.f32 0.0, %v2484
    %2486 = vmatmul.f32.gmra.mxu0 %v2375
    %v2487 = vpop.f32.mrf.mxu0
    %v2488 = vadd.f32 0.0, %v2487
    %2489 = vmatmul.f32.gmra.mxu0 %v2378
    %v2490 = vpop.f32.mrf.mxu0
    %v2491 = vadd.f32 0.0, %v2490
    %2492 = vmatmul.f32.gmra.mxu0 %v2381
    %v2493 = vpop.f32.mrf.mxu0
    %v2494 = vadd.f32 0.0, %v2493
    %2495 = vmatmul.f32.gmra.mxu0 %v2384
    %v2496 = vpop.f32.mrf.mxu0
    %v2497 = vadd.f32 0.0, %v2496
    %2498 = vmatmul.f32.gmra.mxu0 %v2387
    %v2499 = vpop.f32.mrf.mxu0
    %v2500 = vadd.f32 0.0, %v2499
    %2501 = vmatmul.f32.gmra.mxu0 %v2390
    %v2502 = vpop.f32.mrf.mxu0
    %v2503 = vadd.f32 0.0, %v2502
    %2504 = vmatmul.f32.gmra.mxu0 %v2393
    %v2505 = vpop.f32.mrf.mxu0
    %v2506 = vadd.f32 0.0, %v2505
    %2507 = vmatmul.f32.gmra.mxu0 %v2396
    %v2508 = vpop.f32.mrf.mxu0
    %v2509 = vadd.f32 0.0, %v2508
    %2510 = vmatmul.f32.gmra.mxu0 %v2399
    %v2511 = vpop.f32.mrf.mxu0
    %v2512 = vadd.f32 0.0, %v2511
    %2513 = vmatmul.f32.gmra.mxu0 %v2402
    %v2514 = vpop.f32.mrf.mxu0
    %v2515 = vadd.f32 0.0, %v2514
    %2516 = vmatmul.f32.gmra.mxu0 %v2405
    %v2517 = vpop.f32.mrf.mxu0
    %v2518 = vadd.f32 0.0, %v2517
    %2519 = vmatmul.f32.gmra.mxu0 %v2408
    %v2520 = vpop.f32.mrf.mxu0
    %v2521 = vadd.f32 0.0, %v2520
    %2522 = vdwg.mxu0
    %v2523 = vadd.f32 %v2091, %v2428
    %v2524 = vadd.f32 %v2094, %v2431
    %v2525 = vadd.f32 %v2097, %v2434
    %v2526 = vadd.f32 %v2100, %v2437
    %v2527 = vadd.f32 %v2103, %v2440
    %v2528 = vadd.f32 %v2106, %v2443
    %v2529 = vadd.f32 %v2109, %v2446
    %v2530 = vadd.f32 %v2112, %v2449
    %v2531 = vadd.f32 %v2115, %v2452
    %v2532 = vadd.f32 %v2118, %v2455
    %v2533 = vadd.f32 %v2121, %v2458
    %v2534 = vadd.f32 %v2124, %v2461
    %v2535 = vadd.f32 %v2127, %v2464
    %v2536 = vadd.f32 %v2130, %v2467
    %v2537 = vadd.f32 %v2133, %v2470
    %v2538 = vadd.f32 %v2136, %v2473
    %v2539 = vadd.f32 %v2139, %v2476
    %v2540 = vadd.f32 %v2142, %v2479
    %v2541 = vadd.f32 %v2145, %v2482
    %v2542 = vadd.f32 %v2148, %v2485
    %v2543 = vadd.f32 %v2151, %v2488
    %v2544 = vadd.f32 %v2154, %v2491
    %v2545 = vadd.f32 %v2157, %v2494
    %v2546 = vadd.f32 %v2160, %v2497
    %v2547 = vadd.f32 %v2163, %v2500
    %v2548 = vadd.f32 %v2166, %v2503
    %v2549 = vadd.f32 %v2169, %v2506
    %v2550 = vadd.f32 %v2172, %v2509
    %v2551 = vadd.f32 %v2175, %v2512
    %v2552 = vadd.f32 %v2178, %v2515
    %v2553 = vadd.f32 %v2181, %v2518
    %v2554 = vadd.f32 %v2184, %v2521
    %vm2555 = vcmp.eq.s32.totalorder %v1480, 3
    %vm2556 = vcmp.eq.s32.totalorder %v1481, 3
    %vm2557 = vcmp.eq.s32.totalorder %v1482, 3
    %vm2558 = vcmp.eq.s32.totalorder %v1483, 3
    %vm2559 = vcmp.eq.s32.totalorder %v1484, 3
    %vm2560 = vcmp.eq.s32.totalorder %v1485, 3
    %vm2561 = vcmp.eq.s32.totalorder %v1486, 3
    %vm2562 = vcmp.eq.s32.totalorder %v1487, 3
    %vm2563 = vcmp.eq.s32.totalorder %v1488, 3
    %vm2564 = vcmp.eq.s32.totalorder %v1489, 3
    %vm2565 = vcmp.eq.s32.totalorder %v1490, 3
    %vm2566 = vcmp.eq.s32.totalorder %v1491, 3
    %vm2567 = vcmp.eq.s32.totalorder %v1492, 3
    %vm2568 = vcmp.eq.s32.totalorder %v1493, 3
    %vm2569 = vcmp.eq.s32.totalorder %v1494, 3
    %vm2570 = vcmp.eq.s32.totalorder %v1495, 3
    %vm2571 = vcmp.eq.s32.totalorder %v1496, 3
    %vm2572 = vcmp.eq.s32.totalorder %v1497, 3
    %vm2573 = vcmp.eq.s32.totalorder %v1498, 3
    %vm2574 = vcmp.eq.s32.totalorder %v1499, 3
    %vm2575 = vcmp.eq.s32.totalorder %v1500, 3
    %vm2576 = vcmp.eq.s32.totalorder %v1501, 3
    %vm2577 = vcmp.eq.s32.totalorder %v1502, 3
    %vm2578 = vcmp.eq.s32.totalorder %v1503, 3
    %vm2579 = vcmp.eq.s32.totalorder %v1504, 3
    %vm2580 = vcmp.eq.s32.totalorder %v1505, 3
    %vm2581 = vcmp.eq.s32.totalorder %v1506, 3
    %vm2582 = vcmp.eq.s32.totalorder %v1507, 3
    %vm2583 = vcmp.eq.s32.totalorder %v1508, 3
    %vm2584 = vcmp.eq.s32.totalorder %v1509, 3
    %vm2585 = vcmp.eq.s32.totalorder %v1510, 3
    %vm2586 = vcmp.eq.s32.totalorder %v1511, 3
    %vm2587 = vmand %vm1448, %vm2555
    %vm2588 = vmand %vm1449, %vm2556
    %vm2589 = vmand %vm1450, %vm2557
    %vm2590 = vmand %vm1451, %vm2558
    %vm2591 = vmand %vm1452, %vm2559
    %vm2592 = vmand %vm1453, %vm2560
    %vm2593 = vmand %vm1454, %vm2561
    %vm2594 = vmand %vm1455, %vm2562
    %vm2595 = vmand %vm1456, %vm2563
    %vm2596 = vmand %vm1457, %vm2564
    %vm2597 = vmand %vm1458, %vm2565
    %vm2598 = vmand %vm1459, %vm2566
    %vm2599 = vmand %vm1460, %vm2567
    %vm2600 = vmand %vm1461, %vm2568
    %vm2601 = vmand %vm1462, %vm2569
    %vm2602 = vmand %vm1463, %vm2570
    %vm2603 = vmand %vm1464, %vm2571
    %vm2604 = vmand %vm1465, %vm2572
    %vm2605 = vmand %vm1466, %vm2573
    %vm2606 = vmand %vm1467, %vm2574
    %vm2607 = vmand %vm1468, %vm2575
    %vm2608 = vmand %vm1469, %vm2576
    %vm2609 = vmand %vm1470, %vm2577
    %vm2610 = vmand %vm1471, %vm2578
    %vm2611 = vmand %vm1472, %vm2579
    %vm2612 = vmand %vm1473, %vm2580
    %vm2613 = vmand %vm1474, %vm2581
    %vm2614 = vmand %vm1475, %vm2582
    %vm2615 = vmand %vm1476, %vm2583
    %vm2616 = vmand %vm1477, %vm2584
    %vm2617 = vmand %vm1478, %vm2585
    %vm2618 = vmand %vm1479, %vm2586
    %v2619 = vsel %vm2587, 1, 0
    %v2620 = vsel %vm2588, 1, 0
    %v2621 = vsel %vm2589, 1, 0
    %v2622 = vsel %vm2590, 1, 0
    %v2623 = vsel %vm2591, 1, 0
    %v2624 = vsel %vm2592, 1, 0
    %v2625 = vsel %vm2593, 1, 0
    %v2626 = vsel %vm2594, 1, 0
    %v2627 = vsel %vm2595, 1, 0
    %v2628 = vsel %vm2596, 1, 0
    %v2629 = vsel %vm2597, 1, 0
    %v2630 = vsel %vm2598, 1, 0
    %v2631 = vsel %vm2599, 1, 0
    %v2632 = vsel %vm2600, 1, 0
    %v2633 = vsel %vm2601, 1, 0
    %v2634 = vsel %vm2602, 1, 0
    %v2635 = vsel %vm2603, 1, 0
    %v2636 = vsel %vm2604, 1, 0
    %v2637 = vsel %vm2605, 1, 0
    %v2638 = vsel %vm2606, 1, 0
    %v2639 = vsel %vm2607, 1, 0
    %v2640 = vsel %vm2608, 1, 0
    %v2641 = vsel %vm2609, 1, 0
    %v2642 = vsel %vm2610, 1, 0
    %v2643 = vsel %vm2611, 1, 0
    %v2644 = vsel %vm2612, 1, 0
    %v2645 = vsel %vm2613, 1, 0
    %v2646 = vsel %vm2614, 1, 0
    %v2647 = vsel %vm2615, 1, 0
    %v2648 = vsel %vm2616, 1, 0
    %v2649 = vsel %vm2617, 1, 0
    %v2650 = vsel %vm2618, 1, 0
    %v2651 = vcvt.s32.f32 %v2619
    %v2652 = vcvt.s32.f32 %v2620
    %v2653 = vcvt.s32.f32 %v2621
    %v2654 = vcvt.s32.f32 %v2622
    %v2655 = vcvt.s32.f32 %v2623
    %v2656 = vcvt.s32.f32 %v2624
    %v2657 = vcvt.s32.f32 %v2625
    %v2658 = vcvt.s32.f32 %v2626
    %v2659 = vcvt.s32.f32 %v2627
    %v2660 = vcvt.s32.f32 %v2628
    %v2661 = vcvt.s32.f32 %v2629
    %v2662 = vcvt.s32.f32 %v2630
    %v2663 = vcvt.s32.f32 %v2631
    %v2664 = vcvt.s32.f32 %v2632
    %v2665 = vcvt.s32.f32 %v2633
    %v2666 = vcvt.s32.f32 %v2634
    %v2667 = vcvt.s32.f32 %v2635
    %v2668 = vcvt.s32.f32 %v2636
    %v2669 = vcvt.s32.f32 %v2637
    %v2670 = vcvt.s32.f32 %v2638
    %v2671 = vcvt.s32.f32 %v2639
    %v2672 = vcvt.s32.f32 %v2640
    %v2673 = vcvt.s32.f32 %v2641
    %v2674 = vcvt.s32.f32 %v2642
    %v2675 = vcvt.s32.f32 %v2643
    %v2676 = vcvt.s32.f32 %v2644
    %v2677 = vcvt.s32.f32 %v2645
    %v2678 = vcvt.s32.f32 %v2646
    %v2679 = vcvt.s32.f32 %v2647
    %v2680 = vcvt.s32.f32 %v2648
    %v2681 = vcvt.s32.f32 %v2649
    %v2682 = vcvt.s32.f32 %v2650
    %v2684 = vsel %vm710, %v2651, 0
    %v2687 = vsel %vm710, %v2652, 0
    %v2690 = vsel %vm710, %v2653, 0
    %v2693 = vsel %vm710, %v2654, 0
    %v2696 = vsel %vm710, %v2655, 0
    %v2699 = vsel %vm710, %v2656, 0
    %v2702 = vsel %vm710, %v2657, 0
    %v2705 = vsel %vm710, %v2658, 0
    %v2708 = vsel %vm710, %v2659, 0
    %v2711 = vsel %vm710, %v2660, 0
    %v2714 = vsel %vm710, %v2661, 0
    %v2717 = vsel %vm710, %v2662, 0
    %v2720 = vsel %vm710, %v2663, 0
    %v2723 = vsel %vm710, %v2664, 0
    %v2726 = vsel %vm710, %v2665, 0
    %v2729 = vsel %vm710, %v2666, 0
    %v2732 = vsel %vm710, %v2667, 0
    %v2735 = vsel %vm710, %v2668, 0
    %v2738 = vsel %vm710, %v2669, 0
    %v2741 = vsel %vm710, %v2670, 0
    %v2744 = vsel %vm710, %v2671, 0
    %v2747 = vsel %vm710, %v2672, 0
    %v2750 = vsel %vm710, %v2673, 0
    %v2753 = vsel %vm710, %v2674, 0
    %v2756 = vsel %vm710, %v2675, 0
    %v2759 = vsel %vm710, %v2676, 0
    %v2762 = vsel %vm710, %v2677, 0
    %v2765 = vsel %vm710, %v2678, 0
    %v2768 = vsel %vm710, %v2679, 0
    %v2771 = vsel %vm710, %v2680, 0
    %v2774 = vsel %vm710, %v2681, 0
    %v2777 = vsel %vm710, %v2682, 0
    %2779 = vmatpush.msra.mxu0 0.0
    %2780 = vmatpush.msra.mxu0 0.0
    %2781 = vmatpush.msra.mxu0 0.0
    %2782 = vmatpush.msra.mxu0 0.0
    %2783 = vmatpush.msra.mxu0 0.0
    %2784 = vmatpush.msra.mxu0 0.0
    %2785 = vmatpush.msra.mxu0 0.0
    %2786 = vmatpush.msra.mxu0 0.0
    %2787 = vmatpush.msra.mxu0 %v1391
    %2788 = vmatpush.msra.mxu0 %v1390
    %2789 = vmatpush.msra.mxu0 %v1389
    %2790 = vmatpush.msra.mxu0 %v1388
    %2791 = vmatpush.msra.mxu0 %v1387
    %2792 = vmatpush.msra.mxu0 %v1386
    %2793 = vmatpush.msra.mxu0 %v1385
    %2794 = vmatpush.msra.mxu0 %v1384
    %2795 = vmatmul.f32.gmra.mxu0 %v2684
    %v2796 = vpop.f32.mrf.mxu0
    %v2797 = vadd.f32 0.0, %v2796
    %2798 = vmatmul.f32.gmra.mxu0 %v2687
    %v2799 = vpop.f32.mrf.mxu0
    %v2800 = vadd.f32 0.0, %v2799
    %2801 = vmatmul.f32.gmra.mxu0 %v2690
    %v2802 = vpop.f32.mrf.mxu0
    %v2803 = vadd.f32 0.0, %v2802
    %2804 = vmatmul.f32.gmra.mxu0 %v2693
    %v2805 = vpop.f32.mrf.mxu0
    %v2806 = vadd.f32 0.0, %v2805
    %2807 = vmatmul.f32.gmra.mxu0 %v2696
    %v2808 = vpop.f32.mrf.mxu0
    %v2809 = vadd.f32 0.0, %v2808
    %2810 = vmatmul.f32.gmra.mxu0 %v2699
    %v2811 = vpop.f32.mrf.mxu0
    %v2812 = vadd.f32 0.0, %v2811
    %2813 = vmatmul.f32.gmra.mxu0 %v2702
    %v2814 = vpop.f32.mrf.mxu0
    %v2815 = vadd.f32 0.0, %v2814
    %2816 = vmatmul.f32.gmra.mxu0 %v2705
    %v2817 = vpop.f32.mrf.mxu0
    %v2818 = vadd.f32 0.0, %v2817
    %2819 = vmatmul.f32.gmra.mxu0 %v2708
    %v2820 = vpop.f32.mrf.mxu0
    %v2821 = vadd.f32 0.0, %v2820
    %2822 = vmatmul.f32.gmra.mxu0 %v2711
    %v2823 = vpop.f32.mrf.mxu0
    %v2824 = vadd.f32 0.0, %v2823
    %2825 = vmatmul.f32.gmra.mxu0 %v2714
    %v2826 = vpop.f32.mrf.mxu0
    %v2827 = vadd.f32 0.0, %v2826
    %2828 = vmatmul.f32.gmra.mxu0 %v2717
    %v2829 = vpop.f32.mrf.mxu0
    %v2830 = vadd.f32 0.0, %v2829
    %2831 = vmatmul.f32.gmra.mxu0 %v2720
    %v2832 = vpop.f32.mrf.mxu0
    %v2833 = vadd.f32 0.0, %v2832
    %2834 = vmatmul.f32.gmra.mxu0 %v2723
    %v2835 = vpop.f32.mrf.mxu0
    %v2836 = vadd.f32 0.0, %v2835
    %2837 = vmatmul.f32.gmra.mxu0 %v2726
    %v2838 = vpop.f32.mrf.mxu0
    %v2839 = vadd.f32 0.0, %v2838
    %2840 = vmatmul.f32.gmra.mxu0 %v2729
    %v2841 = vpop.f32.mrf.mxu0
    %v2842 = vadd.f32 0.0, %v2841
    %2843 = vmatmul.f32.gmra.mxu0 %v2732
    %v2844 = vpop.f32.mrf.mxu0
    %v2845 = vadd.f32 0.0, %v2844
    %2846 = vmatmul.f32.gmra.mxu0 %v2735
    %v2847 = vpop.f32.mrf.mxu0
    %v2848 = vadd.f32 0.0, %v2847
    %2849 = vmatmul.f32.gmra.mxu0 %v2738
    %v2850 = vpop.f32.mrf.mxu0
    %v2851 = vadd.f32 0.0, %v2850
    %2852 = vmatmul.f32.gmra.mxu0 %v2741
    %v2853 = vpop.f32.mrf.mxu0
    %v2854 = vadd.f32 0.0, %v2853
    %2855 = vmatmul.f32.gmra.mxu0 %v2744
    %v2856 = vpop.f32.mrf.mxu0
    %v2857 = vadd.f32 0.0, %v2856
    %2858 = vmatmul.f32.gmra.mxu0 %v2747
    %v2859 = vpop.f32.mrf.mxu0
    %v2860 = vadd.f32 0.0, %v2859
    %2861 = vmatmul.f32.gmra.mxu0 %v2750
    %v2862 = vpop.f32.mrf.mxu0
    %v2863 = vadd.f32 0.0, %v2862
    %2864 = vmatmul.f32.gmra.mxu0 %v2753
    %v2865 = vpop.f32.mrf.mxu0
    %v2866 = vadd.f32 0.0, %v2865
    %2867 = vmatmul.f32.gmra.mxu0 %v2756
    %v2868 = vpop.f32.mrf.mxu0
    %v2869 = vadd.f32 0.0, %v2868
    %2870 = vmatmul.f32.gmra.mxu0 %v2759
    %v2871 = vpop.f32.mrf.mxu0
    %v2872 = vadd.f32 0.0, %v2871
    %2873 = vmatmul.f32.gmra.mxu0 %v2762
    %v2874 = vpop.f32.mrf.mxu0
    %v2875 = vadd.f32 0.0, %v2874
    %2876 = vmatmul.f32.gmra.mxu0 %v2765
    %v2877 = vpop.f32.mrf.mxu0
    %v2878 = vadd.f32 0.0, %v2877
    %2879 = vmatmul.f32.gmra.mxu0 %v2768
    %v2880 = vpop.f32.mrf.mxu0
    %v2881 = vadd.f32 0.0, %v2880
    %2882 = vmatmul.f32.gmra.mxu0 %v2771
    %v2883 = vpop.f32.mrf.mxu0
    %v2884 = vadd.f32 0.0, %v2883
    %2885 = vmatmul.f32.gmra.mxu0 %v2774
    %v2886 = vpop.f32.mrf.mxu0
    %v2887 = vadd.f32 0.0, %v2886
    %2888 = vmatmul.f32.gmra.mxu0 %v2777
    %v2889 = vpop.f32.mrf.mxu0
    %v2890 = vadd.f32 0.0, %v2889
    %2891 = vdwg.mxu0
    %v2892 = vadd.f32 %v2523, %v2797
    %v2893 = vadd.f32 %v2524, %v2800
    %v2894 = vadd.f32 %v2525, %v2803
    %v2895 = vadd.f32 %v2526, %v2806
    %v2896 = vadd.f32 %v2527, %v2809
    %v2897 = vadd.f32 %v2528, %v2812
    %v2898 = vadd.f32 %v2529, %v2815
    %v2899 = vadd.f32 %v2530, %v2818
    %v2900 = vadd.f32 %v2531, %v2821
    %v2901 = vadd.f32 %v2532, %v2824
    %v2902 = vadd.f32 %v2533, %v2827
    %v2903 = vadd.f32 %v2534, %v2830
    %v2904 = vadd.f32 %v2535, %v2833
    %v2905 = vadd.f32 %v2536, %v2836
    %v2906 = vadd.f32 %v2537, %v2839
    %v2907 = vadd.f32 %v2538, %v2842
    %v2908 = vadd.f32 %v2539, %v2845
    %v2909 = vadd.f32 %v2540, %v2848
    %v2910 = vadd.f32 %v2541, %v2851
    %v2911 = vadd.f32 %v2542, %v2854
    %v2912 = vadd.f32 %v2543, %v2857
    %v2913 = vadd.f32 %v2544, %v2860
    %v2914 = vadd.f32 %v2545, %v2863
    %v2915 = vadd.f32 %v2546, %v2866
    %v2916 = vadd.f32 %v2547, %v2869
    %v2917 = vadd.f32 %v2548, %v2872
    %v2918 = vadd.f32 %v2549, %v2875
    %v2919 = vadd.f32 %v2550, %v2878
    %v2920 = vadd.f32 %v2551, %v2881
    %v2921 = vadd.f32 %v2552, %v2884
    %v2922 = vadd.f32 %v2553, %v2887
    %v2923 = vadd.f32 %v2554, %v2890
    %v2924 = vadd.s32 %v150, 128
    %v2925 = vsub.s32 %v1392, 1
    %v2926 = vsub.s32 %v1393, 1
    %v2927 = vsub.s32 %v1394, 1
    %v2928 = vsub.s32 %v1395, 1
    %v2929 = vsub.s32 %v1396, 1
    %v2930 = vsub.s32 %v1397, 1
    %v2931 = vsub.s32 %v1398, 1
    %v2932 = vsub.s32 %v1399, 1
    %v2933 = vsub.s32 %v1400, 1
    %v2934 = vsub.s32 %v1401, 1
    %v2935 = vsub.s32 %v1402, 1
    %v2936 = vsub.s32 %v1403, 1
    %v2937 = vsub.s32 %v1404, 1
    %v2938 = vsub.s32 %v1405, 1
    %v2939 = vsub.s32 %v1406, 1
    %v2940 = vsub.s32 %v1407, 1
    %v2941 = vsub.s32 %v1408, 1
    %v2942 = vsub.s32 %v1409, 1
    %v2943 = vsub.s32 %v1410, 1
    %v2944 = vsub.s32 %v1411, 1
    %v2945 = vsub.s32 %v1412, 1
    %v2946 = vsub.s32 %v1413, 1
    %v2947 = vsub.s32 %v1414, 1
    %v2948 = vsub.s32 %v1415, 1
    %vm2949 = vcmp.eq.s32.totalorder %v2924, %v606
    %vm2950 = vcmp.eq.s32.totalorder %v2924, %v607
    %vm2951 = vcmp.eq.s32.totalorder %v2924, %v608
    %vm2952 = vcmp.eq.s32.totalorder %v2924, %v609
    %vm2953 = vcmp.eq.s32.totalorder %v2924, %v610
    %vm2954 = vcmp.eq.s32.totalorder %v2924, %v611
    %vm2955 = vcmp.eq.s32.totalorder %v2924, %v612
    %vm2956 = vcmp.eq.s32.totalorder %v2924, %v613
    %vm2957 = vcmp.eq.s32.totalorder %v150, %v2925
    %vm2958 = vcmp.eq.s32.totalorder %v2924, %v2925
    %vm2959 = vcmp.eq.s32.totalorder %v150, %v2926
    %vm2960 = vcmp.eq.s32.totalorder %v2924, %v2926
    %vm2961 = vcmp.eq.s32.totalorder %v150, %v2927
    %vm2962 = vcmp.eq.s32.totalorder %v2924, %v2927
    %vm2963 = vcmp.eq.s32.totalorder %v150, %v2928
    %vm2964 = vcmp.eq.s32.totalorder %v2924, %v2928
    %vm2965 = vcmp.eq.s32.totalorder %v150, %v2929
    %vm2966 = vcmp.eq.s32.totalorder %v2924, %v2929
    %vm2967 = vcmp.eq.s32.totalorder %v150, %v2930
    %vm2968 = vcmp.eq.s32.totalorder %v2924, %v2930
    %vm2969 = vcmp.eq.s32.totalorder %v150, %v2931
    %vm2970 = vcmp.eq.s32.totalorder %v2924, %v2931
    %vm2971 = vcmp.eq.s32.totalorder %v150, %v2932
    %vm2972 = vcmp.eq.s32.totalorder %v2924, %v2932
    %vm2973 = vcmp.eq.s32.totalorder %v150, %v2933
    %vm2974 = vcmp.eq.s32.totalorder %v2924, %v2933
    %vm2975 = vcmp.eq.s32.totalorder %v150, %v2934
    %vm2976 = vcmp.eq.s32.totalorder %v2924, %v2934
    %vm2977 = vcmp.eq.s32.totalorder %v150, %v2935
    %vm2978 = vcmp.eq.s32.totalorder %v2924, %v2935
    %vm2979 = vcmp.eq.s32.totalorder %v150, %v2936
    %vm2980 = vcmp.eq.s32.totalorder %v2924, %v2936
    %vm2981 = vcmp.eq.s32.totalorder %v150, %v2937
    %vm2982 = vcmp.eq.s32.totalorder %v2924, %v2937
    %vm2983 = vcmp.eq.s32.totalorder %v150, %v2938
    %vm2984 = vcmp.eq.s32.totalorder %v2924, %v2938
    %vm2985 = vcmp.eq.s32.totalorder %v150, %v2939
    %vm2986 = vcmp.eq.s32.totalorder %v2924, %v2939
    %vm2987 = vcmp.eq.s32.totalorder %v150, %v2940
    %vm2988 = vcmp.eq.s32.totalorder %v2924, %v2940
    %vm2989 = vcmp.eq.s32.totalorder %v150, %v2941
    %vm2990 = vcmp.eq.s32.totalorder %v2924, %v2941
    %vm2991 = vcmp.eq.s32.totalorder %v150, %v2942
    %vm2992 = vcmp.eq.s32.totalorder %v2924, %v2942
    %vm2993 = vcmp.eq.s32.totalorder %v150, %v2943
    %vm2994 = vcmp.eq.s32.totalorder %v2924, %v2943
    %vm2995 = vcmp.eq.s32.totalorder %v150, %v2944
    %vm2996 = vcmp.eq.s32.totalorder %v2924, %v2944
    %vm2997 = vcmp.eq.s32.totalorder %v150, %v2945
    %vm2998 = vcmp.eq.s32.totalorder %v2924, %v2945
    %vm2999 = vcmp.eq.s32.totalorder %v150, %v2946
    %vm3000 = vcmp.eq.s32.totalorder %v2924, %v2946
    %vm3001 = vcmp.eq.s32.totalorder %v150, %v2947
    %vm3002 = vcmp.eq.s32.totalorder %v2924, %v2947
    %vm3003 = vcmp.eq.s32.totalorder %v150, %v2948
    %vm3004 = vcmp.eq.s32.totalorder %v2924, %v2948
    %v3005 = vand.u32 %v380, 127
    %v3006 = vand.u32 %v381, 127
    %v3007 = vand.u32 %v382, 127
    %v3008 = vand.u32 %v383, 127
    %v3009 = vand.u32 %v384, 127
    %v3010 = vand.u32 %v385, 127
    %v3011 = vand.u32 %v386, 127
    %v3012 = vand.u32 %v387, 127
    %v3013 = vand.u32 %v1392, 127
    %v3014 = vand.u32 %v1393, 127
    %v3015 = vand.u32 %v1394, 127
    %v3016 = vand.u32 %v1395, 127
    %v3017 = vand.u32 %v1396, 127
    %v3018 = vand.u32 %v1397, 127
    %v3019 = vand.u32 %v1398, 127
    %v3020 = vand.u32 %v1399, 127
    %v3021 = vand.u32 %v1400, 127
    %v3022 = vand.u32 %v1401, 127
    %v3023 = vand.u32 %v1402, 127
    %v3024 = vand.u32 %v1403, 127
    %v3025 = vand.u32 %v1404, 127
    %v3026 = vand.u32 %v1405, 127
    %v3027 = vand.u32 %v1406, 127
    %v3028 = vand.u32 %v1407, 127
    %v3029 = vand.u32 %v1408, 127
    %v3030 = vand.u32 %v1409, 127
    %v3031 = vand.u32 %v1410, 127
    %v3032 = vand.u32 %v1411, 127
    %v3033 = vand.u32 %v1412, 127
    %v3034 = vand.u32 %v1413, 127
    %v3035 = vand.u32 %v1414, 127
    %v3036 = vand.u32 %v1415, 127
    %vm3037 = vcmp.ne.s32.totalorder %v3005, 0
    %vm3038 = vcmp.ne.s32.totalorder %v3006, 0
    %vm3039 = vcmp.ne.s32.totalorder %v3007, 0
    %vm3040 = vcmp.ne.s32.totalorder %v3008, 0
    %vm3041 = vcmp.ne.s32.totalorder %v3009, 0
    %vm3042 = vcmp.ne.s32.totalorder %v3010, 0
    %vm3043 = vcmp.ne.s32.totalorder %v3011, 0
    %vm3044 = vcmp.ne.s32.totalorder %v3012, 0
    %vm3045 = vcmp.ne.s32.totalorder %v3013, 0
    %vm3046 = vcmp.ne.s32.totalorder %v3014, 0
    %vm3047 = vcmp.ne.s32.totalorder %v3015, 0
    %vm3048 = vcmp.ne.s32.totalorder %v3016, 0
    %vm3049 = vcmp.ne.s32.totalorder %v3017, 0
    %vm3050 = vcmp.ne.s32.totalorder %v3018, 0
    %vm3051 = vcmp.ne.s32.totalorder %v3019, 0
    %vm3052 = vcmp.ne.s32.totalorder %v3020, 0
    %vm3053 = vcmp.ne.s32.totalorder %v3021, 0
    %vm3054 = vcmp.ne.s32.totalorder %v3022, 0
    %vm3055 = vcmp.ne.s32.totalorder %v3023, 0
    %vm3056 = vcmp.ne.s32.totalorder %v3024, 0
    %vm3057 = vcmp.ne.s32.totalorder %v3025, 0
    %vm3058 = vcmp.ne.s32.totalorder %v3026, 0
    %vm3059 = vcmp.ne.s32.totalorder %v3027, 0
    %vm3060 = vcmp.ne.s32.totalorder %v3028, 0
    %vm3061 = vcmp.ne.s32.totalorder %v3029, 0
    %vm3062 = vcmp.ne.s32.totalorder %v3030, 0
    %vm3063 = vcmp.ne.s32.totalorder %v3031, 0
    %vm3064 = vcmp.ne.s32.totalorder %v3032, 0
    %vm3065 = vcmp.ne.s32.totalorder %v3033, 0
    %vm3066 = vcmp.ne.s32.totalorder %v3034, 0
    %vm3067 = vcmp.ne.s32.totalorder %v3035, 0
    %vm3068 = vcmp.ne.s32.totalorder %v3036, 0
    %vm3069 = vmand %vm614, %vm3037
    %vm3070 = vmand %vm2949, %vm3037
    %vm3071 = vmand %vm615, %vm3038
    %vm3072 = vmand %vm2950, %vm3038
    %vm3073 = vmand %vm616, %vm3039
    %vm3074 = vmand %vm2951, %vm3039
    %vm3075 = vmand %vm617, %vm3040
    %vm3076 = vmand %vm2952, %vm3040
    %vm3077 = vmand %vm618, %vm3041
    %vm3078 = vmand %vm2953, %vm3041
    %vm3079 = vmand %vm619, %vm3042
    %vm3080 = vmand %vm2954, %vm3042
    %vm3081 = vmand %vm620, %vm3043
    %vm3082 = vmand %vm2955, %vm3043
    %vm3083 = vmand %vm621, %vm3044
    %vm3084 = vmand %vm2956, %vm3044
    %vm3085 = vmand %vm2957, %vm3045
    %vm3086 = vmand %vm2958, %vm3045
    %vm3087 = vmand %vm2959, %vm3046
    %vm3088 = vmand %vm2960, %vm3046
    %vm3089 = vmand %vm2961, %vm3047
    %vm3090 = vmand %vm2962, %vm3047
    %vm3091 = vmand %vm2963, %vm3048
    %vm3092 = vmand %vm2964, %vm3048
    %vm3093 = vmand %vm2965, %vm3049
    %vm3094 = vmand %vm2966, %vm3049
    %vm3095 = vmand %vm2967, %vm3050
    %vm3096 = vmand %vm2968, %vm3050
    %vm3097 = vmand %vm2969, %vm3051
    %vm3098 = vmand %vm2970, %vm3051
    %vm3099 = vmand %vm2971, %vm3052
    %vm3100 = vmand %vm2972, %vm3052
    %vm3101 = vmand %vm2973, %vm3053
    %vm3102 = vmand %vm2974, %vm3053
    %vm3103 = vmand %vm2975, %vm3054
    %vm3104 = vmand %vm2976, %vm3054
    %vm3105 = vmand %vm2977, %vm3055
    %vm3106 = vmand %vm2978, %vm3055
    %vm3107 = vmand %vm2979, %vm3056
    %vm3108 = vmand %vm2980, %vm3056
    %vm3109 = vmand %vm2981, %vm3057
    %vm3110 = vmand %vm2982, %vm3057
    %vm3111 = vmand %vm2983, %vm3058
    %vm3112 = vmand %vm2984, %vm3058
    %vm3113 = vmand %vm2985, %vm3059
    %vm3114 = vmand %vm2986, %vm3059
    %vm3115 = vmand %vm2987, %vm3060
    %vm3116 = vmand %vm2988, %vm3060
    %vm3117 = vmand %vm2989, %vm3061
    %vm3118 = vmand %vm2990, %vm3061
    %vm3119 = vmand %vm2991, %vm3062
    %vm3120 = vmand %vm2992, %vm3062
    %vm3121 = vmand %vm2993, %vm3063
    %vm3122 = vmand %vm2994, %vm3063
    %vm3123 = vmand %vm2995, %vm3064
    %vm3124 = vmand %vm2996, %vm3064
    %vm3125 = vmand %vm2997, %vm3065
    %vm3126 = vmand %vm2998, %vm3065
    %vm3127 = vmand %vm2999, %vm3066
    %vm3128 = vmand %vm3000, %vm3066
    %vm3129 = vmand %vm3001, %vm3067
    %vm3130 = vmand %vm3002, %vm3067
    %vm3131 = vmand %vm3003, %vm3068
    %vm3132 = vmand %vm3004, %vm3068
    %v3133 = vsel %vm3069, 1, 0
    %v3134 = vsel %vm3070, 1, 0
    %v3135 = vsel %vm3071, 1, 0
    %v3136 = vsel %vm3072, 1, 0
    %v3137 = vsel %vm3073, 1, 0
    %v3138 = vsel %vm3074, 1, 0
    %v3139 = vsel %vm3075, 1, 0
    %v3140 = vsel %vm3076, 1, 0
    %v3141 = vsel %vm3077, 1, 0
    %v3142 = vsel %vm3078, 1, 0
    %v3143 = vsel %vm3079, 1, 0
    %v3144 = vsel %vm3080, 1, 0
    %v3145 = vsel %vm3081, 1, 0
    %v3146 = vsel %vm3082, 1, 0
    %v3147 = vsel %vm3083, 1, 0
    %v3148 = vsel %vm3084, 1, 0
    %v3149 = vsel %vm3085, 1, 0
    %v3150 = vsel %vm3086, 1, 0
    %v3151 = vsel %vm3087, 1, 0
    %v3152 = vsel %vm3088, 1, 0
    %v3153 = vsel %vm3089, 1, 0
    %v3154 = vsel %vm3090, 1, 0
    %v3155 = vsel %vm3091, 1, 0
    %v3156 = vsel %vm3092, 1, 0
    %v3157 = vsel %vm3093, 1, 0
    %v3158 = vsel %vm3094, 1, 0
    %v3159 = vsel %vm3095, 1, 0
    %v3160 = vsel %vm3096, 1, 0
    %v3161 = vsel %vm3097, 1, 0
    %v3162 = vsel %vm3098, 1, 0
    %v3163 = vsel %vm3099, 1, 0
    %v3164 = vsel %vm3100, 1, 0
    %v3165 = vsel %vm3101, 1, 0
    %v3166 = vsel %vm3102, 1, 0
    %v3167 = vsel %vm3103, 1, 0
    %v3168 = vsel %vm3104, 1, 0
    %v3169 = vsel %vm3105, 1, 0
    %v3170 = vsel %vm3106, 1, 0
    %v3171 = vsel %vm3107, 1, 0
    %v3172 = vsel %vm3108, 1, 0
    %v3173 = vsel %vm3109, 1, 0
    %v3174 = vsel %vm3110, 1, 0
    %v3175 = vsel %vm3111, 1, 0
    %v3176 = vsel %vm3112, 1, 0
    %v3177 = vsel %vm3113, 1, 0
    %v3178 = vsel %vm3114, 1, 0
    %v3179 = vsel %vm3115, 1, 0
    %v3180 = vsel %vm3116, 1, 0
    %v3181 = vsel %vm3117, 1, 0
    %v3182 = vsel %vm3118, 1, 0
    %v3183 = vsel %vm3119, 1, 0
    %v3184 = vsel %vm3120, 1, 0
    %v3185 = vsel %vm3121, 1, 0
    %v3186 = vsel %vm3122, 1, 0
    %v3187 = vsel %vm3123, 1, 0
    %v3188 = vsel %vm3124, 1, 0
    %v3189 = vsel %vm3125, 1, 0
    %v3190 = vsel %vm3126, 1, 0
    %v3191 = vsel %vm3127, 1, 0
    %v3192 = vsel %vm3128, 1, 0
    %v3193 = vsel %vm3129, 1, 0
    %v3194 = vsel %vm3130, 1, 0
    %v3195 = vsel %vm3131, 1, 0
    %v3196 = vsel %vm3132, 1, 0
    %v3197 = vcvt.s32.f32 %v3133
    %v3198 = vcvt.s32.f32 %v3134
    %v3199 = vcvt.s32.f32 %v3135
    %v3200 = vcvt.s32.f32 %v3136
    %v3201 = vcvt.s32.f32 %v3137
    %v3202 = vcvt.s32.f32 %v3138
    %v3203 = vcvt.s32.f32 %v3139
    %v3204 = vcvt.s32.f32 %v3140
    %v3205 = vcvt.s32.f32 %v3141
    %v3206 = vcvt.s32.f32 %v3142
    %v3207 = vcvt.s32.f32 %v3143
    %v3208 = vcvt.s32.f32 %v3144
    %v3209 = vcvt.s32.f32 %v3145
    %v3210 = vcvt.s32.f32 %v3146
    %v3211 = vcvt.s32.f32 %v3147
    %v3212 = vcvt.s32.f32 %v3148
    %v3213 = vcvt.s32.f32 %v3149
    %v3214 = vcvt.s32.f32 %v3150
    %v3215 = vcvt.s32.f32 %v3151
    %v3216 = vcvt.s32.f32 %v3152
    %v3217 = vcvt.s32.f32 %v3153
    %v3218 = vcvt.s32.f32 %v3154
    %v3219 = vcvt.s32.f32 %v3155
    %v3220 = vcvt.s32.f32 %v3156
    %v3221 = vcvt.s32.f32 %v3157
    %v3222 = vcvt.s32.f32 %v3158
    %v3223 = vcvt.s32.f32 %v3159
    %v3224 = vcvt.s32.f32 %v3160
    %v3225 = vcvt.s32.f32 %v3161
    %v3226 = vcvt.s32.f32 %v3162
    %v3227 = vcvt.s32.f32 %v3163
    %v3228 = vcvt.s32.f32 %v3164
    %v3229 = vcvt.s32.f32 %v3165
    %v3230 = vcvt.s32.f32 %v3166
    %v3231 = vcvt.s32.f32 %v3167
    %v3232 = vcvt.s32.f32 %v3168
    %v3233 = vcvt.s32.f32 %v3169
    %v3234 = vcvt.s32.f32 %v3170
    %v3235 = vcvt.s32.f32 %v3171
    %v3236 = vcvt.s32.f32 %v3172
    %v3237 = vcvt.s32.f32 %v3173
    %v3238 = vcvt.s32.f32 %v3174
    %v3239 = vcvt.s32.f32 %v3175
    %v3240 = vcvt.s32.f32 %v3176
    %v3241 = vcvt.s32.f32 %v3177
    %v3242 = vcvt.s32.f32 %v3178
    %v3243 = vcvt.s32.f32 %v3179
    %v3244 = vcvt.s32.f32 %v3180
    %v3245 = vcvt.s32.f32 %v3181
    %v3246 = vcvt.s32.f32 %v3182
    %v3247 = vcvt.s32.f32 %v3183
    %v3248 = vcvt.s32.f32 %v3184
    %v3249 = vcvt.s32.f32 %v3185
    %v3250 = vcvt.s32.f32 %v3186
    %v3251 = vcvt.s32.f32 %v3187
    %v3252 = vcvt.s32.f32 %v3188
    %v3253 = vcvt.s32.f32 %v3189
    %v3254 = vcvt.s32.f32 %v3190
    %v3255 = vcvt.s32.f32 %v3191
    %v3256 = vcvt.s32.f32 %v3192
    %v3257 = vcvt.s32.f32 %v3193
    %v3258 = vcvt.s32.f32 %v3194
    %v3259 = vcvt.s32.f32 %v3195
    %v3260 = vcvt.s32.f32 %v3196
    %v3261 = vadd.s32 %v1392, 1
    %v3262 = vadd.s32 %v1393, 1
    %v3263 = vadd.s32 %v1394, 1
    %v3264 = vadd.s32 %v1395, 1
    %v3265 = vadd.s32 %v1396, 1
    %v3266 = vadd.s32 %v1397, 1
    %v3267 = vadd.s32 %v1398, 1
    %v3268 = vadd.s32 %v1399, 1
    %v3269 = vadd.s32 %v1400, 1
    %v3270 = vadd.s32 %v1401, 1
    %v3271 = vadd.s32 %v1402, 1
    %v3272 = vadd.s32 %v1403, 1
    %v3273 = vadd.s32 %v1404, 1
    %v3274 = vadd.s32 %v1405, 1
    %v3275 = vadd.s32 %v1406, 1
    %v3276 = vadd.s32 %v1407, 1
    %v3277 = vadd.s32 %v1408, 1
    %v3278 = vadd.s32 %v1409, 1
    %v3279 = vadd.s32 %v1410, 1
    %v3280 = vadd.s32 %v1411, 1
    %v3281 = vadd.s32 %v1412, 1
    %v3282 = vadd.s32 %v1413, 1
    %v3283 = vadd.s32 %v1414, 1
    %v3284 = vadd.s32 %v1415, 1
    %vm3285 = vcmp.eq.s32.totalorder %v2924, %v662
    %vm3286 = vcmp.eq.s32.totalorder %v2924, %v663
    %vm3287 = vcmp.eq.s32.totalorder %v2924, %v664
    %vm3288 = vcmp.eq.s32.totalorder %v2924, %v665
    %vm3289 = vcmp.eq.s32.totalorder %v2924, %v666
    %vm3290 = vcmp.eq.s32.totalorder %v2924, %v667
    %vm3291 = vcmp.eq.s32.totalorder %v2924, %v668
    %vm3292 = vcmp.eq.s32.totalorder %v2924, %v669
    %vm3293 = vcmp.eq.s32.totalorder %v150, %v3261
    %vm3294 = vcmp.eq.s32.totalorder %v2924, %v3261
    %vm3295 = vcmp.eq.s32.totalorder %v150, %v3262
    %vm3296 = vcmp.eq.s32.totalorder %v2924, %v3262
    %vm3297 = vcmp.eq.s32.totalorder %v150, %v3263
    %vm3298 = vcmp.eq.s32.totalorder %v2924, %v3263
    %vm3299 = vcmp.eq.s32.totalorder %v150, %v3264
    %vm3300 = vcmp.eq.s32.totalorder %v2924, %v3264
    %vm3301 = vcmp.eq.s32.totalorder %v150, %v3265
    %vm3302 = vcmp.eq.s32.totalorder %v2924, %v3265
    %vm3303 = vcmp.eq.s32.totalorder %v150, %v3266
    %vm3304 = vcmp.eq.s32.totalorder %v2924, %v3266
    %vm3305 = vcmp.eq.s32.totalorder %v150, %v3267
    %vm3306 = vcmp.eq.s32.totalorder %v2924, %v3267
    %vm3307 = vcmp.eq.s32.totalorder %v150, %v3268
    %vm3308 = vcmp.eq.s32.totalorder %v2924, %v3268
    %vm3309 = vcmp.eq.s32.totalorder %v150, %v3269
    %vm3310 = vcmp.eq.s32.totalorder %v2924, %v3269
    %vm3311 = vcmp.eq.s32.totalorder %v150, %v3270
    %vm3312 = vcmp.eq.s32.totalorder %v2924, %v3270
    %vm3313 = vcmp.eq.s32.totalorder %v150, %v3271
    %vm3314 = vcmp.eq.s32.totalorder %v2924, %v3271
    %vm3315 = vcmp.eq.s32.totalorder %v150, %v3272
    %vm3316 = vcmp.eq.s32.totalorder %v2924, %v3272
    %vm3317 = vcmp.eq.s32.totalorder %v150, %v3273
    %vm3318 = vcmp.eq.s32.totalorder %v2924, %v3273
    %vm3319 = vcmp.eq.s32.totalorder %v150, %v3274
    %vm3320 = vcmp.eq.s32.totalorder %v2924, %v3274
    %vm3321 = vcmp.eq.s32.totalorder %v150, %v3275
    %vm3322 = vcmp.eq.s32.totalorder %v2924, %v3275
    %vm3323 = vcmp.eq.s32.totalorder %v150, %v3276
    %vm3324 = vcmp.eq.s32.totalorder %v2924, %v3276
    %vm3325 = vcmp.eq.s32.totalorder %v150, %v3277
    %vm3326 = vcmp.eq.s32.totalorder %v2924, %v3277
    %vm3327 = vcmp.eq.s32.totalorder %v150, %v3278
    %vm3328 = vcmp.eq.s32.totalorder %v2924, %v3278
    %vm3329 = vcmp.eq.s32.totalorder %v150, %v3279
    %vm3330 = vcmp.eq.s32.totalorder %v2924, %v3279
    %vm3331 = vcmp.eq.s32.totalorder %v150, %v3280
    %vm3332 = vcmp.eq.s32.totalorder %v2924, %v3280
    %vm3333 = vcmp.eq.s32.totalorder %v150, %v3281
    %vm3334 = vcmp.eq.s32.totalorder %v2924, %v3281
    %vm3335 = vcmp.eq.s32.totalorder %v150, %v3282
    %vm3336 = vcmp.eq.s32.totalorder %v2924, %v3282
    %vm3337 = vcmp.eq.s32.totalorder %v150, %v3283
    %vm3338 = vcmp.eq.s32.totalorder %v2924, %v3283
    %vm3339 = vcmp.eq.s32.totalorder %v150, %v3284
    %vm3340 = vcmp.eq.s32.totalorder %v2924, %v3284
    %vm3341 = vcmp.ne.s32.totalorder %v3005, 127
    %vm3342 = vcmp.ne.s32.totalorder %v3006, 127
    %vm3343 = vcmp.ne.s32.totalorder %v3007, 127
    %vm3344 = vcmp.ne.s32.totalorder %v3008, 127
    %vm3345 = vcmp.ne.s32.totalorder %v3009, 127
    %vm3346 = vcmp.ne.s32.totalorder %v3010, 127
    %vm3347 = vcmp.ne.s32.totalorder %v3011, 127
    %vm3348 = vcmp.ne.s32.totalorder %v3012, 127
    %vm3349 = vcmp.ne.s32.totalorder %v3013, 127
    %vm3350 = vcmp.ne.s32.totalorder %v3014, 127
    %vm3351 = vcmp.ne.s32.totalorder %v3015, 127
    %vm3352 = vcmp.ne.s32.totalorder %v3016, 127
    %vm3353 = vcmp.ne.s32.totalorder %v3017, 127
    %vm3354 = vcmp.ne.s32.totalorder %v3018, 127
    %vm3355 = vcmp.ne.s32.totalorder %v3019, 127
    %vm3356 = vcmp.ne.s32.totalorder %v3020, 127
    %vm3357 = vcmp.ne.s32.totalorder %v3021, 127
    %vm3358 = vcmp.ne.s32.totalorder %v3022, 127
    %vm3359 = vcmp.ne.s32.totalorder %v3023, 127
    %vm3360 = vcmp.ne.s32.totalorder %v3024, 127
    %vm3361 = vcmp.ne.s32.totalorder %v3025, 127
    %vm3362 = vcmp.ne.s32.totalorder %v3026, 127
    %vm3363 = vcmp.ne.s32.totalorder %v3027, 127
    %vm3364 = vcmp.ne.s32.totalorder %v3028, 127
    %vm3365 = vcmp.ne.s32.totalorder %v3029, 127
    %vm3366 = vcmp.ne.s32.totalorder %v3030, 127
    %vm3367 = vcmp.ne.s32.totalorder %v3031, 127
    %vm3368 = vcmp.ne.s32.totalorder %v3032, 127
    %vm3369 = vcmp.ne.s32.totalorder %v3033, 127
    %vm3370 = vcmp.ne.s32.totalorder %v3034, 127
    %vm3371 = vcmp.ne.s32.totalorder %v3035, 127
    %vm3372 = vcmp.ne.s32.totalorder %v3036, 127
    %vm3373 = vmand %vm670, %vm3341
    %vm3374 = vmand %vm3285, %vm3341
    %vm3375 = vmand %vm671, %vm3342
    %vm3376 = vmand %vm3286, %vm3342
    %vm3377 = vmand %vm672, %vm3343
    %vm3378 = vmand %vm3287, %vm3343
    %vm3379 = vmand %vm673, %vm3344
    %vm3380 = vmand %vm3288, %vm3344
    %vm3381 = vmand %vm674, %vm3345
    %vm3382 = vmand %vm3289, %vm3345
    %vm3383 = vmand %vm675, %vm3346
    %vm3384 = vmand %vm3290, %vm3346
    %vm3385 = vmand %vm676, %vm3347
    %vm3386 = vmand %vm3291, %vm3347
    %vm3387 = vmand %vm677, %vm3348
    %vm3388 = vmand %vm3292, %vm3348
    %vm3389 = vmand %vm3293, %vm3349
    %vm3390 = vmand %vm3294, %vm3349
    %vm3391 = vmand %vm3295, %vm3350
    %vm3392 = vmand %vm3296, %vm3350
    %vm3393 = vmand %vm3297, %vm3351
    %vm3394 = vmand %vm3298, %vm3351
    %vm3395 = vmand %vm3299, %vm3352
    %vm3396 = vmand %vm3300, %vm3352
    %vm3397 = vmand %vm3301, %vm3353
    %vm3398 = vmand %vm3302, %vm3353
    %vm3399 = vmand %vm3303, %vm3354
    %vm3400 = vmand %vm3304, %vm3354
    %vm3401 = vmand %vm3305, %vm3355
    %vm3402 = vmand %vm3306, %vm3355
    %vm3403 = vmand %vm3307, %vm3356
    %vm3404 = vmand %vm3308, %vm3356
    %vm3405 = vmand %vm3309, %vm3357
    %vm3406 = vmand %vm3310, %vm3357
    %vm3407 = vmand %vm3311, %vm3358
    %vm3408 = vmand %vm3312, %vm3358
    %vm3409 = vmand %vm3313, %vm3359
    %vm3410 = vmand %vm3314, %vm3359
    %vm3411 = vmand %vm3315, %vm3360
    %vm3412 = vmand %vm3316, %vm3360
    %vm3413 = vmand %vm3317, %vm3361
    %vm3414 = vmand %vm3318, %vm3361
    %vm3415 = vmand %vm3319, %vm3362
    %vm3416 = vmand %vm3320, %vm3362
    %vm3417 = vmand %vm3321, %vm3363
    %vm3418 = vmand %vm3322, %vm3363
    %vm3419 = vmand %vm3323, %vm3364
    %vm3420 = vmand %vm3324, %vm3364
    %vm3421 = vmand %vm3325, %vm3365
    %vm3422 = vmand %vm3326, %vm3365
    %vm3423 = vmand %vm3327, %vm3366
    %vm3424 = vmand %vm3328, %vm3366
    %vm3425 = vmand %vm3329, %vm3367
    %vm3426 = vmand %vm3330, %vm3367
    %vm3427 = vmand %vm3331, %vm3368
    %vm3428 = vmand %vm3332, %vm3368
    %vm3429 = vmand %vm3333, %vm3369
    %vm3430 = vmand %vm3334, %vm3369
    %vm3431 = vmand %vm3335, %vm3370
    %vm3432 = vmand %vm3336, %vm3370
    %vm3433 = vmand %vm3337, %vm3371
    %vm3434 = vmand %vm3338, %vm3371
    %vm3435 = vmand %vm3339, %vm3372
    %vm3436 = vmand %vm3340, %vm3372
    %v3437 = vsel %vm3373, 1, 0
    %v3438 = vsel %vm3374, 1, 0
    %v3439 = vsel %vm3375, 1, 0
    %v3440 = vsel %vm3376, 1, 0
    %v3441 = vsel %vm3377, 1, 0
    %v3442 = vsel %vm3378, 1, 0
    %v3443 = vsel %vm3379, 1, 0
    %v3444 = vsel %vm3380, 1, 0
    %v3445 = vsel %vm3381, 1, 0
    %v3446 = vsel %vm3382, 1, 0
    %v3447 = vsel %vm3383, 1, 0
    %v3448 = vsel %vm3384, 1, 0
    %v3449 = vsel %vm3385, 1, 0
    %v3450 = vsel %vm3386, 1, 0
    %v3451 = vsel %vm3387, 1, 0
    %v3452 = vsel %vm3388, 1, 0
    %v3453 = vsel %vm3389, 1, 0
    %v3454 = vsel %vm3390, 1, 0
    %v3455 = vsel %vm3391, 1, 0
    %v3456 = vsel %vm3392, 1, 0
    %v3457 = vsel %vm3393, 1, 0
    %v3458 = vsel %vm3394, 1, 0
    %v3459 = vsel %vm3395, 1, 0
    %v3460 = vsel %vm3396, 1, 0
    %v3461 = vsel %vm3397, 1, 0
    %v3462 = vsel %vm3398, 1, 0
    %v3463 = vsel %vm3399, 1, 0
    %v3464 = vsel %vm3400, 1, 0
    %v3465 = vsel %vm3401, 1, 0
    %v3466 = vsel %vm3402, 1, 0
    %v3467 = vsel %vm3403, 1, 0
    %v3468 = vsel %vm3404, 1, 0
    %v3469 = vsel %vm3405, 1, 0
    %v3470 = vsel %vm3406, 1, 0
    %v3471 = vsel %vm3407, 1, 0
    %v3472 = vsel %vm3408, 1, 0
    %v3473 = vsel %vm3409, 1, 0
    %v3474 = vsel %vm3410, 1, 0
    %v3475 = vsel %vm3411, 1, 0
    %v3476 = vsel %vm3412, 1, 0
    %v3477 = vsel %vm3413, 1, 0
    %v3478 = vsel %vm3414, 1, 0
    %v3479 = vsel %vm3415, 1, 0
    %v3480 = vsel %vm3416, 1, 0
    %v3481 = vsel %vm3417, 1, 0
    %v3482 = vsel %vm3418, 1, 0
    %v3483 = vsel %vm3419, 1, 0
    %v3484 = vsel %vm3420, 1, 0
    %v3485 = vsel %vm3421, 1, 0
    %v3486 = vsel %vm3422, 1, 0
    %v3487 = vsel %vm3423, 1, 0
    %v3488 = vsel %vm3424, 1, 0
    %v3489 = vsel %vm3425, 1, 0
    %v3490 = vsel %vm3426, 1, 0
    %v3491 = vsel %vm3427, 1, 0
    %v3492 = vsel %vm3428, 1, 0
    %v3493 = vsel %vm3429, 1, 0
    %v3494 = vsel %vm3430, 1, 0
    %v3495 = vsel %vm3431, 1, 0
    %v3496 = vsel %vm3432, 1, 0
    %v3497 = vsel %vm3433, 1, 0
    %v3498 = vsel %vm3434, 1, 0
    %v3499 = vsel %vm3435, 1, 0
    %v3500 = vsel %vm3436, 1, 0
    %v3501 = vcvt.s32.f32 %v3437
    %v3502 = vcvt.s32.f32 %v3438
    %v3503 = vcvt.s32.f32 %v3439
    %v3504 = vcvt.s32.f32 %v3440
    %v3505 = vcvt.s32.f32 %v3441
    %v3506 = vcvt.s32.f32 %v3442
    %v3507 = vcvt.s32.f32 %v3443
    %v3508 = vcvt.s32.f32 %v3444
    %v3509 = vcvt.s32.f32 %v3445
    %v3510 = vcvt.s32.f32 %v3446
    %v3511 = vcvt.s32.f32 %v3447
    %v3512 = vcvt.s32.f32 %v3448
    %v3513 = vcvt.s32.f32 %v3449
    %v3514 = vcvt.s32.f32 %v3450
    %v3515 = vcvt.s32.f32 %v3451
    %v3516 = vcvt.s32.f32 %v3452
    %v3517 = vcvt.s32.f32 %v3453
    %v3518 = vcvt.s32.f32 %v3454
    %v3519 = vcvt.s32.f32 %v3455
    %v3520 = vcvt.s32.f32 %v3456
    %v3521 = vcvt.s32.f32 %v3457
    %v3522 = vcvt.s32.f32 %v3458
    %v3523 = vcvt.s32.f32 %v3459
    %v3524 = vcvt.s32.f32 %v3460
    %v3525 = vcvt.s32.f32 %v3461
    %v3526 = vcvt.s32.f32 %v3462
    %v3527 = vcvt.s32.f32 %v3463
    %v3528 = vcvt.s32.f32 %v3464
    %v3529 = vcvt.s32.f32 %v3465
    %v3530 = vcvt.s32.f32 %v3466
    %v3531 = vcvt.s32.f32 %v3467
    %v3532 = vcvt.s32.f32 %v3468
    %v3533 = vcvt.s32.f32 %v3469
    %v3534 = vcvt.s32.f32 %v3470
    %v3535 = vcvt.s32.f32 %v3471
    %v3536 = vcvt.s32.f32 %v3472
    %v3537 = vcvt.s32.f32 %v3473
    %v3538 = vcvt.s32.f32 %v3474
    %v3539 = vcvt.s32.f32 %v3475
    %v3540 = vcvt.s32.f32 %v3476
    %v3541 = vcvt.s32.f32 %v3477
    %v3542 = vcvt.s32.f32 %v3478
    %v3543 = vcvt.s32.f32 %v3479
    %v3544 = vcvt.s32.f32 %v3480
    %v3545 = vcvt.s32.f32 %v3481
    %v3546 = vcvt.s32.f32 %v3482
    %v3547 = vcvt.s32.f32 %v3483
    %v3548 = vcvt.s32.f32 %v3484
    %v3549 = vcvt.s32.f32 %v3485
    %v3550 = vcvt.s32.f32 %v3486
    %v3551 = vcvt.s32.f32 %v3487
    %v3552 = vcvt.s32.f32 %v3488
    %v3553 = vcvt.s32.f32 %v3489
    %v3554 = vcvt.s32.f32 %v3490
    %v3555 = vcvt.s32.f32 %v3491
    %v3556 = vcvt.s32.f32 %v3492
    %v3557 = vcvt.s32.f32 %v3493
    %v3558 = vcvt.s32.f32 %v3494
    %v3559 = vcvt.s32.f32 %v3495
    %v3560 = vcvt.s32.f32 %v3496
    %v3561 = vcvt.s32.f32 %v3497
    %v3562 = vcvt.s32.f32 %v3498
    %v3563 = vcvt.s32.f32 %v3499
    %v3564 = vcvt.s32.f32 %v3500
    %3565 = vmatpush.msra.mxu0 %v2907
    %3566 = vmatpush.msra.mxu0 %v2906
    %3567 = vmatpush.msra.mxu0 %v2905
    %3568 = vmatpush.msra.mxu0 %v2904
    %3569 = vmatpush.msra.mxu0 %v2903
    %3570 = vmatpush.msra.mxu0 %v2902
    %3571 = vmatpush.msra.mxu0 %v2901
    %3572 = vmatpush.msra.mxu0 %v2900
    %3573 = vmatpush.msra.mxu0 %v2899
    %3574 = vmatpush.msra.mxu0 %v2898
    %3575 = vmatpush.msra.mxu0 %v2897
    %3576 = vmatpush.msra.mxu0 %v2896
    %3577 = vmatpush.msra.mxu0 %v2895
    %3578 = vmatpush.msra.mxu0 %v2894
    %3579 = vmatpush.msra.mxu0 %v2893
    %3580 = vmatpush.msra.mxu0 %v2892
    %3581 = vmatmul.f32.gmra.mxu0 %v3197
    %v3582 = vpop.f32.mrf.mxu0
    %v3583 = vadd.f32 0.0, %v3582
    %3584 = vmatmul.f32.gmra.mxu0 %v3199
    %v3585 = vpop.f32.mrf.mxu0
    %v3586 = vadd.f32 0.0, %v3585
    %3587 = vmatmul.f32.gmra.mxu0 %v3201
    %v3588 = vpop.f32.mrf.mxu0
    %v3589 = vadd.f32 0.0, %v3588
    %3590 = vmatmul.f32.gmra.mxu0 %v3203
    %v3591 = vpop.f32.mrf.mxu0
    %v3592 = vadd.f32 0.0, %v3591
    %3593 = vmatmul.f32.gmra.mxu0 %v3205
    %v3594 = vpop.f32.mrf.mxu0
    %v3595 = vadd.f32 0.0, %v3594
    %3596 = vmatmul.f32.gmra.mxu0 %v3207
    %v3597 = vpop.f32.mrf.mxu0
    %v3598 = vadd.f32 0.0, %v3597
    %3599 = vmatmul.f32.gmra.mxu0 %v3209
    %v3600 = vpop.f32.mrf.mxu0
    %v3601 = vadd.f32 0.0, %v3600
    %3602 = vmatmul.f32.gmra.mxu0 %v3211
    %v3603 = vpop.f32.mrf.mxu0
    %v3604 = vadd.f32 0.0, %v3603
    %3605 = vmatmul.f32.gmra.mxu0 %v3213
    %v3606 = vpop.f32.mrf.mxu0
    %v3607 = vadd.f32 0.0, %v3606
    %3608 = vmatmul.f32.gmra.mxu0 %v3215
    %v3609 = vpop.f32.mrf.mxu0
    %v3610 = vadd.f32 0.0, %v3609
    %3611 = vmatmul.f32.gmra.mxu0 %v3217
    %v3612 = vpop.f32.mrf.mxu0
    %v3613 = vadd.f32 0.0, %v3612
    %3614 = vmatmul.f32.gmra.mxu0 %v3219
    %v3615 = vpop.f32.mrf.mxu0
    %v3616 = vadd.f32 0.0, %v3615
    %3617 = vmatmul.f32.gmra.mxu0 %v3221
    %v3618 = vpop.f32.mrf.mxu0
    %v3619 = vadd.f32 0.0, %v3618
    %3620 = vmatmul.f32.gmra.mxu0 %v3223
    %v3621 = vpop.f32.mrf.mxu0
    %v3622 = vadd.f32 0.0, %v3621
    %3623 = vmatmul.f32.gmra.mxu0 %v3225
    %v3624 = vpop.f32.mrf.mxu0
    %v3625 = vadd.f32 0.0, %v3624
    %3626 = vmatmul.f32.gmra.mxu0 %v3227
    %v3627 = vpop.f32.mrf.mxu0
    %v3628 = vadd.f32 0.0, %v3627
    %3629 = vmatmul.f32.gmra.mxu0 %v3229
    %v3630 = vpop.f32.mrf.mxu0
    %v3631 = vadd.f32 0.0, %v3630
    %3632 = vmatmul.f32.gmra.mxu0 %v3231
    %v3633 = vpop.f32.mrf.mxu0
    %v3634 = vadd.f32 0.0, %v3633
    %3635 = vmatmul.f32.gmra.mxu0 %v3233
    %v3636 = vpop.f32.mrf.mxu0
    %v3637 = vadd.f32 0.0, %v3636
    %3638 = vmatmul.f32.gmra.mxu0 %v3235
    %v3639 = vpop.f32.mrf.mxu0
    %v3640 = vadd.f32 0.0, %v3639
    %3641 = vmatmul.f32.gmra.mxu0 %v3237
    %v3642 = vpop.f32.mrf.mxu0
    %v3643 = vadd.f32 0.0, %v3642
    %3644 = vmatmul.f32.gmra.mxu0 %v3239
    %v3645 = vpop.f32.mrf.mxu0
    %v3646 = vadd.f32 0.0, %v3645
    %3647 = vmatmul.f32.gmra.mxu0 %v3241
    %v3648 = vpop.f32.mrf.mxu0
    %v3649 = vadd.f32 0.0, %v3648
    %3650 = vmatmul.f32.gmra.mxu0 %v3243
    %v3651 = vpop.f32.mrf.mxu0
    %v3652 = vadd.f32 0.0, %v3651
    %3653 = vmatmul.f32.gmra.mxu0 %v3245
    %v3654 = vpop.f32.mrf.mxu0
    %v3655 = vadd.f32 0.0, %v3654
    %3656 = vmatmul.f32.gmra.mxu0 %v3247
    %v3657 = vpop.f32.mrf.mxu0
    %v3658 = vadd.f32 0.0, %v3657
    %3659 = vmatmul.f32.gmra.mxu0 %v3249
    %v3660 = vpop.f32.mrf.mxu0
    %v3661 = vadd.f32 0.0, %v3660
    %3662 = vmatmul.f32.gmra.mxu0 %v3251
    %v3663 = vpop.f32.mrf.mxu0
    %v3664 = vadd.f32 0.0, %v3663
    %3665 = vmatmul.f32.gmra.mxu0 %v3253
    %v3666 = vpop.f32.mrf.mxu0
    %v3667 = vadd.f32 0.0, %v3666
    %3668 = vmatmul.f32.gmra.mxu0 %v3255
    %v3669 = vpop.f32.mrf.mxu0
    %v3670 = vadd.f32 0.0, %v3669
    %3671 = vmatmul.f32.gmra.mxu0 %v3257
    %v3672 = vpop.f32.mrf.mxu0
    %v3673 = vadd.f32 0.0, %v3672
    %3674 = vmatmul.f32.gmra.mxu0 %v3259
    %v3675 = vpop.f32.mrf.mxu0
    %v3676 = vadd.f32 0.0, %v3675
    %3677 = vdwg.mxu0
    %3678 = vmatpush.msra.mxu0 %v2923
    %3679 = vmatpush.msra.mxu0 %v2922
    %3680 = vmatpush.msra.mxu0 %v2921
    %3681 = vmatpush.msra.mxu0 %v2920
    %3682 = vmatpush.msra.mxu0 %v2919
    %3683 = vmatpush.msra.mxu0 %v2918
    %3684 = vmatpush.msra.mxu0 %v2917
    %3685 = vmatpush.msra.mxu0 %v2916
    %3686 = vmatpush.msra.mxu0 %v2915
    %3687 = vmatpush.msra.mxu0 %v2914
    %3688 = vmatpush.msra.mxu0 %v2913
    %3689 = vmatpush.msra.mxu0 %v2912
    %3690 = vmatpush.msra.mxu0 %v2911
    %3691 = vmatpush.msra.mxu0 %v2910
    %3692 = vmatpush.msra.mxu0 %v2909
    %3693 = vmatpush.msra.mxu0 %v2908
    %3694 = vmatmul.f32.gmra.mxu0 %v3198
    %v3695 = vpop.f32.mrf.mxu0
    %v3696 = vadd.f32 %v3583, %v3695
    %3697 = vmatmul.f32.gmra.mxu0 %v3200
    %v3698 = vpop.f32.mrf.mxu0
    %v3699 = vadd.f32 %v3586, %v3698
    %3700 = vmatmul.f32.gmra.mxu0 %v3202
    %v3701 = vpop.f32.mrf.mxu0
    %v3702 = vadd.f32 %v3589, %v3701
    %3703 = vmatmul.f32.gmra.mxu0 %v3204
    %v3704 = vpop.f32.mrf.mxu0
    %v3705 = vadd.f32 %v3592, %v3704
    %3706 = vmatmul.f32.gmra.mxu0 %v3206
    %v3707 = vpop.f32.mrf.mxu0
    %v3708 = vadd.f32 %v3595, %v3707
    %3709 = vmatmul.f32.gmra.mxu0 %v3208
    %v3710 = vpop.f32.mrf.mxu0
    %v3711 = vadd.f32 %v3598, %v3710
    %3712 = vmatmul.f32.gmra.mxu0 %v3210
    %v3713 = vpop.f32.mrf.mxu0
    %v3714 = vadd.f32 %v3601, %v3713
    %3715 = vmatmul.f32.gmra.mxu0 %v3212
    %v3716 = vpop.f32.mrf.mxu0
    %v3717 = vadd.f32 %v3604, %v3716
    %3718 = vmatmul.f32.gmra.mxu0 %v3214
    %v3719 = vpop.f32.mrf.mxu0
    %v3720 = vadd.f32 %v3607, %v3719
    %3721 = vmatmul.f32.gmra.mxu0 %v3216
    %v3722 = vpop.f32.mrf.mxu0
    %v3723 = vadd.f32 %v3610, %v3722
    %3724 = vmatmul.f32.gmra.mxu0 %v3218
    %v3725 = vpop.f32.mrf.mxu0
    %v3726 = vadd.f32 %v3613, %v3725
    %3727 = vmatmul.f32.gmra.mxu0 %v3220
    %v3728 = vpop.f32.mrf.mxu0
    %v3729 = vadd.f32 %v3616, %v3728
    %3730 = vmatmul.f32.gmra.mxu0 %v3222
    %v3731 = vpop.f32.mrf.mxu0
    %v3732 = vadd.f32 %v3619, %v3731
    %3733 = vmatmul.f32.gmra.mxu0 %v3224
    %v3734 = vpop.f32.mrf.mxu0
    %v3735 = vadd.f32 %v3622, %v3734
    %3736 = vmatmul.f32.gmra.mxu0 %v3226
    %v3737 = vpop.f32.mrf.mxu0
    %v3738 = vadd.f32 %v3625, %v3737
    %3739 = vmatmul.f32.gmra.mxu0 %v3228
    %v3740 = vpop.f32.mrf.mxu0
    %v3741 = vadd.f32 %v3628, %v3740
    %3742 = vmatmul.f32.gmra.mxu0 %v3230
    %v3743 = vpop.f32.mrf.mxu0
    %v3744 = vadd.f32 %v3631, %v3743
    %3745 = vmatmul.f32.gmra.mxu0 %v3232
    %v3746 = vpop.f32.mrf.mxu0
    %v3747 = vadd.f32 %v3634, %v3746
    %3748 = vmatmul.f32.gmra.mxu0 %v3234
    %v3749 = vpop.f32.mrf.mxu0
    %v3750 = vadd.f32 %v3637, %v3749
    %3751 = vmatmul.f32.gmra.mxu0 %v3236
    %v3752 = vpop.f32.mrf.mxu0
    %v3753 = vadd.f32 %v3640, %v3752
    %3754 = vmatmul.f32.gmra.mxu0 %v3238
    %v3755 = vpop.f32.mrf.mxu0
    %v3756 = vadd.f32 %v3643, %v3755
    %3757 = vmatmul.f32.gmra.mxu0 %v3240
    %v3758 = vpop.f32.mrf.mxu0
    %v3759 = vadd.f32 %v3646, %v3758
    %3760 = vmatmul.f32.gmra.mxu0 %v3242
    %v3761 = vpop.f32.mrf.mxu0
    %v3762 = vadd.f32 %v3649, %v3761
    %3763 = vmatmul.f32.gmra.mxu0 %v3244
    %v3764 = vpop.f32.mrf.mxu0
    %v3765 = vadd.f32 %v3652, %v3764
    %3766 = vmatmul.f32.gmra.mxu0 %v3246
    %v3767 = vpop.f32.mrf.mxu0
    %v3768 = vadd.f32 %v3655, %v3767
    %3769 = vmatmul.f32.gmra.mxu0 %v3248
    %v3770 = vpop.f32.mrf.mxu0
    %v3771 = vadd.f32 %v3658, %v3770
    %3772 = vmatmul.f32.gmra.mxu0 %v3250
    %v3773 = vpop.f32.mrf.mxu0
    %v3774 = vadd.f32 %v3661, %v3773
    %3775 = vmatmul.f32.gmra.mxu0 %v3252
    %v3776 = vpop.f32.mrf.mxu0
    %v3777 = vadd.f32 %v3664, %v3776
    %3778 = vmatmul.f32.gmra.mxu0 %v3254
    %v3779 = vpop.f32.mrf.mxu0
    %v3780 = vadd.f32 %v3667, %v3779
    %3781 = vmatmul.f32.gmra.mxu0 %v3256
    %v3782 = vpop.f32.mrf.mxu0
    %v3783 = vadd.f32 %v3670, %v3782
    %3784 = vmatmul.f32.gmra.mxu0 %v3258
    %v3785 = vpop.f32.mrf.mxu0
    %v3786 = vadd.f32 %v3673, %v3785
    %3787 = vmatmul.f32.gmra.mxu0 %v3260
    %v3788 = vpop.f32.mrf.mxu0
    %v3789 = vadd.f32 %v3676, %v3788
    %3790 = vdwg.mxu0
    %3791 = vmatpush.msra.mxu0 %v2907
    %3792 = vmatpush.msra.mxu0 %v2906
    %3793 = vmatpush.msra.mxu0 %v2905
    %3794 = vmatpush.msra.mxu0 %v2904
    %3795 = vmatpush.msra.mxu0 %v2903
    %3796 = vmatpush.msra.mxu0 %v2902
    %3797 = vmatpush.msra.mxu0 %v2901
    %3798 = vmatpush.msra.mxu0 %v2900
    %3799 = vmatpush.msra.mxu0 %v2899
    %3800 = vmatpush.msra.mxu0 %v2898
    %3801 = vmatpush.msra.mxu0 %v2897
    %3802 = vmatpush.msra.mxu0 %v2896
    %3803 = vmatpush.msra.mxu0 %v2895
    %3804 = vmatpush.msra.mxu0 %v2894
    %3805 = vmatpush.msra.mxu0 %v2893
    %3806 = vmatpush.msra.mxu0 %v2892
    %3807 = vmatmul.f32.gmra.mxu0 %v3501
    %v3808 = vpop.f32.mrf.mxu0
    %v3809 = vadd.f32 0.0, %v3808
    %3810 = vmatmul.f32.gmra.mxu0 %v3503
    %v3811 = vpop.f32.mrf.mxu0
    %v3812 = vadd.f32 0.0, %v3811
    %3813 = vmatmul.f32.gmra.mxu0 %v3505
    %v3814 = vpop.f32.mrf.mxu0
    %v3815 = vadd.f32 0.0, %v3814
    %3816 = vmatmul.f32.gmra.mxu0 %v3507
    %v3817 = vpop.f32.mrf.mxu0
    %v3818 = vadd.f32 0.0, %v3817
    %3819 = vmatmul.f32.gmra.mxu0 %v3509
    %v3820 = vpop.f32.mrf.mxu0
    %v3821 = vadd.f32 0.0, %v3820
    %3822 = vmatmul.f32.gmra.mxu0 %v3511
    %v3823 = vpop.f32.mrf.mxu0
    %v3824 = vadd.f32 0.0, %v3823
    %3825 = vmatmul.f32.gmra.mxu0 %v3513
    %v3826 = vpop.f32.mrf.mxu0
    %v3827 = vadd.f32 0.0, %v3826
    %3828 = vmatmul.f32.gmra.mxu0 %v3515
    %v3829 = vpop.f32.mrf.mxu0
    %v3830 = vadd.f32 0.0, %v3829
    %3831 = vmatmul.f32.gmra.mxu0 %v3517
    %v3832 = vpop.f32.mrf.mxu0
    %v3833 = vadd.f32 0.0, %v3832
    %3834 = vmatmul.f32.gmra.mxu0 %v3519
    %v3835 = vpop.f32.mrf.mxu0
    %v3836 = vadd.f32 0.0, %v3835
    %3837 = vmatmul.f32.gmra.mxu0 %v3521
    %v3838 = vpop.f32.mrf.mxu0
    %v3839 = vadd.f32 0.0, %v3838
    %3840 = vmatmul.f32.gmra.mxu0 %v3523
    %v3841 = vpop.f32.mrf.mxu0
    %v3842 = vadd.f32 0.0, %v3841
    %3843 = vmatmul.f32.gmra.mxu0 %v3525
    %v3844 = vpop.f32.mrf.mxu0
    %v3845 = vadd.f32 0.0, %v3844
    %3846 = vmatmul.f32.gmra.mxu0 %v3527
    %v3847 = vpop.f32.mrf.mxu0
    %v3848 = vadd.f32 0.0, %v3847
    %3849 = vmatmul.f32.gmra.mxu0 %v3529
    %v3850 = vpop.f32.mrf.mxu0
    %v3851 = vadd.f32 0.0, %v3850
    %3852 = vmatmul.f32.gmra.mxu0 %v3531
    %v3853 = vpop.f32.mrf.mxu0
    %v3854 = vadd.f32 0.0, %v3853
    %3855 = vmatmul.f32.gmra.mxu0 %v3533
    %v3856 = vpop.f32.mrf.mxu0
    %v3857 = vadd.f32 0.0, %v3856
    %3858 = vmatmul.f32.gmra.mxu0 %v3535
    %v3859 = vpop.f32.mrf.mxu0
    %v3860 = vadd.f32 0.0, %v3859
    %3861 = vmatmul.f32.gmra.mxu0 %v3537
    %v3862 = vpop.f32.mrf.mxu0
    %v3863 = vadd.f32 0.0, %v3862
    %3864 = vmatmul.f32.gmra.mxu0 %v3539
    %v3865 = vpop.f32.mrf.mxu0
    %v3866 = vadd.f32 0.0, %v3865
    %3867 = vmatmul.f32.gmra.mxu0 %v3541
    %v3868 = vpop.f32.mrf.mxu0
    %v3869 = vadd.f32 0.0, %v3868
    %3870 = vmatmul.f32.gmra.mxu0 %v3543
    %v3871 = vpop.f32.mrf.mxu0
    %v3872 = vadd.f32 0.0, %v3871
    %3873 = vmatmul.f32.gmra.mxu0 %v3545
    %v3874 = vpop.f32.mrf.mxu0
    %v3875 = vadd.f32 0.0, %v3874
    %3876 = vmatmul.f32.gmra.mxu0 %v3547
    %v3877 = vpop.f32.mrf.mxu0
    %v3878 = vadd.f32 0.0, %v3877
    %3879 = vmatmul.f32.gmra.mxu0 %v3549
    %v3880 = vpop.f32.mrf.mxu0
    %v3881 = vadd.f32 0.0, %v3880
    %3882 = vmatmul.f32.gmra.mxu0 %v3551
    %v3883 = vpop.f32.mrf.mxu0
    %v3884 = vadd.f32 0.0, %v3883
    %3885 = vmatmul.f32.gmra.mxu0 %v3553
    %v3886 = vpop.f32.mrf.mxu0
    %v3887 = vadd.f32 0.0, %v3886
    %3888 = vmatmul.f32.gmra.mxu0 %v3555
    %v3889 = vpop.f32.mrf.mxu0
    %v3890 = vadd.f32 0.0, %v3889
    %3891 = vmatmul.f32.gmra.mxu0 %v3557
    %v3892 = vpop.f32.mrf.mxu0
    %v3893 = vadd.f32 0.0, %v3892
    %3894 = vmatmul.f32.gmra.mxu0 %v3559
    %v3895 = vpop.f32.mrf.mxu0
    %v3896 = vadd.f32 0.0, %v3895
    %3897 = vmatmul.f32.gmra.mxu0 %v3561
    %v3898 = vpop.f32.mrf.mxu0
    %v3899 = vadd.f32 0.0, %v3898
    %3900 = vmatmul.f32.gmra.mxu0 %v3563
    %v3901 = vpop.f32.mrf.mxu0
    %v3902 = vadd.f32 0.0, %v3901
    %3903 = vdwg.mxu0
    %3904 = vmatpush.msra.mxu0 %v2923
    %3905 = vmatpush.msra.mxu0 %v2922
    %3906 = vmatpush.msra.mxu0 %v2921
    %3907 = vmatpush.msra.mxu0 %v2920
    %3908 = vmatpush.msra.mxu0 %v2919
    %3909 = vmatpush.msra.mxu0 %v2918
    %3910 = vmatpush.msra.mxu0 %v2917
    %3911 = vmatpush.msra.mxu0 %v2916
    %3912 = vmatpush.msra.mxu0 %v2915
    %3913 = vmatpush.msra.mxu0 %v2914
    %3914 = vmatpush.msra.mxu0 %v2913
    %3915 = vmatpush.msra.mxu0 %v2912
    %3916 = vmatpush.msra.mxu0 %v2911
    %3917 = vmatpush.msra.mxu0 %v2910
    %3918 = vmatpush.msra.mxu0 %v2909
    %3919 = vmatpush.msra.mxu0 %v2908
    %3920 = vmatmul.f32.gmra.mxu0 %v3502
    %v3921 = vpop.f32.mrf.mxu0
    %v3922 = vadd.f32 %v3809, %v3921
    %3923 = vmatmul.f32.gmra.mxu0 %v3504
    %v3924 = vpop.f32.mrf.mxu0
    %v3925 = vadd.f32 %v3812, %v3924
    %3926 = vmatmul.f32.gmra.mxu0 %v3506
    %v3927 = vpop.f32.mrf.mxu0
    %v3928 = vadd.f32 %v3815, %v3927
    %3929 = vmatmul.f32.gmra.mxu0 %v3508
    %v3930 = vpop.f32.mrf.mxu0
    %v3931 = vadd.f32 %v3818, %v3930
    %3932 = vmatmul.f32.gmra.mxu0 %v3510
    %v3933 = vpop.f32.mrf.mxu0
    %v3934 = vadd.f32 %v3821, %v3933
    %3935 = vmatmul.f32.gmra.mxu0 %v3512
    %v3936 = vpop.f32.mrf.mxu0
    %v3937 = vadd.f32 %v3824, %v3936
    %3938 = vmatmul.f32.gmra.mxu0 %v3514
    %v3939 = vpop.f32.mrf.mxu0
    %v3940 = vadd.f32 %v3827, %v3939
    %3941 = vmatmul.f32.gmra.mxu0 %v3516
    %v3942 = vpop.f32.mrf.mxu0
    %v3943 = vadd.f32 %v3830, %v3942
    %3944 = vmatmul.f32.gmra.mxu0 %v3518
    %v3945 = vpop.f32.mrf.mxu0
    %v3946 = vadd.f32 %v3833, %v3945
    %3947 = vmatmul.f32.gmra.mxu0 %v3520
    %v3948 = vpop.f32.mrf.mxu0
    %v3949 = vadd.f32 %v3836, %v3948
    %3950 = vmatmul.f32.gmra.mxu0 %v3522
    %v3951 = vpop.f32.mrf.mxu0
    %v3952 = vadd.f32 %v3839, %v3951
    %3953 = vmatmul.f32.gmra.mxu0 %v3524
    %v3954 = vpop.f32.mrf.mxu0
    %v3955 = vadd.f32 %v3842, %v3954
    %3956 = vmatmul.f32.gmra.mxu0 %v3526
    %v3957 = vpop.f32.mrf.mxu0
    %v3958 = vadd.f32 %v3845, %v3957
    %3959 = vmatmul.f32.gmra.mxu0 %v3528
    %v3960 = vpop.f32.mrf.mxu0
    %v3961 = vadd.f32 %v3848, %v3960
    %3962 = vmatmul.f32.gmra.mxu0 %v3530
    %v3963 = vpop.f32.mrf.mxu0
    %v3964 = vadd.f32 %v3851, %v3963
    %3965 = vmatmul.f32.gmra.mxu0 %v3532
    %v3966 = vpop.f32.mrf.mxu0
    %v3967 = vadd.f32 %v3854, %v3966
    %3968 = vmatmul.f32.gmra.mxu0 %v3534
    %v3969 = vpop.f32.mrf.mxu0
    %v3970 = vadd.f32 %v3857, %v3969
    %3971 = vmatmul.f32.gmra.mxu0 %v3536
    %v3972 = vpop.f32.mrf.mxu0
    %v3973 = vadd.f32 %v3860, %v3972
    %3974 = vmatmul.f32.gmra.mxu0 %v3538
    %v3975 = vpop.f32.mrf.mxu0
    %v3976 = vadd.f32 %v3863, %v3975
    %3977 = vmatmul.f32.gmra.mxu0 %v3540
    %v3978 = vpop.f32.mrf.mxu0
    %v3979 = vadd.f32 %v3866, %v3978
    %3980 = vmatmul.f32.gmra.mxu0 %v3542
    %v3981 = vpop.f32.mrf.mxu0
    %v3982 = vadd.f32 %v3869, %v3981
    %3983 = vmatmul.f32.gmra.mxu0 %v3544
    %v3984 = vpop.f32.mrf.mxu0
    %v3985 = vadd.f32 %v3872, %v3984
    %3986 = vmatmul.f32.gmra.mxu0 %v3546
    %v3987 = vpop.f32.mrf.mxu0
    %v3988 = vadd.f32 %v3875, %v3987
    %3989 = vmatmul.f32.gmra.mxu0 %v3548
    %v3990 = vpop.f32.mrf.mxu0
    %v3991 = vadd.f32 %v3878, %v3990
    %3992 = vmatmul.f32.gmra.mxu0 %v3550
    %v3993 = vpop.f32.mrf.mxu0
    %v3994 = vadd.f32 %v3881, %v3993
    %3995 = vmatmul.f32.gmra.mxu0 %v3552
    %v3996 = vpop.f32.mrf.mxu0
    %v3997 = vadd.f32 %v3884, %v3996
    %3998 = vmatmul.f32.gmra.mxu0 %v3554
    %v3999 = vpop.f32.mrf.mxu0
    %v4000 = vadd.f32 %v3887, %v3999
    %4001 = vmatmul.f32.gmra.mxu0 %v3556
    %v4002 = vpop.f32.mrf.mxu0
    %v4003 = vadd.f32 %v3890, %v4002
    %4004 = vmatmul.f32.gmra.mxu0 %v3558
    %v4005 = vpop.f32.mrf.mxu0
    %v4006 = vadd.f32 %v3893, %v4005
    %4007 = vmatmul.f32.gmra.mxu0 %v3560
    %v4008 = vpop.f32.mrf.mxu0
    %v4009 = vadd.f32 %v3896, %v4008
    %4010 = vmatmul.f32.gmra.mxu0 %v3562
    %v4011 = vpop.f32.mrf.mxu0
    %v4012 = vadd.f32 %v3899, %v4011
    %4013 = vmatmul.f32.gmra.mxu0 %v3564
    %v4014 = vpop.f32.mrf.mxu0
    %v4015 = vadd.f32 %v3902, %v4014
    %4016 = vdwg.mxu0
    %v4017 = vld [vmem:[%s8] sm:$0xff]
    %v4018 = vld [vmem:[%s8 + $0x8] sm:$0xff]
    %v4019 = vld [vmem:[%s8 + $0x10] sm:$0xff]
    %v4020 = vld [vmem:[%s8 + $0x18] sm:$0xff]
    %s4021 = scalar_lea.vmem %s8, 32
    %v4022 = vld [vmem:[%s4021] sm:$0xff]
    %v4023 = vld [vmem:[%s4021 + $0x8] sm:$0xff]
    %v4024 = vld [vmem:[%s4021 + $0x10] sm:$0xff]
    %v4025 = vld [vmem:[%s4021 + $0x18] sm:$0xff]
    %v4027 = vsel %vm95, %v2892, 0
    %v4030 = vsel %vm95, %v2893, 0
    %v4033 = vsel %vm95, %v2894, 0
    %v4036 = vsel %vm95, %v2895, 0
    %v4039 = vsel %vm95, %v2896, 0
    %v4042 = vsel %vm95, %v2897, 0
    %v4045 = vsel %vm95, %v2898, 0
    %v4048 = vsel %vm95, %v2899, 0
    %v4051 = vsel %vm95, %v2900, 0
    %v4054 = vsel %vm95, %v2901, 0
    %v4057 = vsel %vm95, %v2902, 0
    %v4060 = vsel %vm95, %v2903, 0
    %v4063 = vsel %vm95, %v2904, 0
    %v4066 = vsel %vm95, %v2905, 0
    %v4069 = vsel %vm95, %v2906, 0
    %v4072 = vsel %vm95, %v2907, 0
    %v4075 = vsel %vm95, %v2908, 0
    %v4078 = vsel %vm95, %v2909, 0
    %v4081 = vsel %vm95, %v2910, 0
    %v4084 = vsel %vm95, %v2911, 0
    %v4087 = vsel %vm95, %v2912, 0
    %v4090 = vsel %vm95, %v2913, 0
    %v4093 = vsel %vm95, %v2914, 0
    %v4096 = vsel %vm95, %v2915, 0
    %v4099 = vsel %vm95, %v2916, 0
    %v4102 = vsel %vm95, %v2917, 0
    %v4105 = vsel %vm95, %v2918, 0
    %v4108 = vsel %vm95, %v2919, 0
    %v4111 = vsel %vm95, %v2920, 0
    %v4114 = vsel %vm95, %v2921, 0
    %v4117 = vsel %vm95, %v2922, 0
    %v4120 = vsel %vm95, %v2923, 0
    %4122 = vmatpush.msra.mxu0 0.0
    %4123 = vmatpush.msra.mxu0 0.0
    %4124 = vmatpush.msra.mxu0 0.0
    %4125 = vmatpush.msra.mxu0 0.0
    %4126 = vmatpush.msra.mxu0 0.0
    %4127 = vmatpush.msra.mxu0 0.0
    %4128 = vmatpush.msra.mxu0 0.0
    %4129 = vmatpush.msra.mxu0 0.0
    %4130 = vmatpush.msra.mxu0 0.0
    %4131 = vmatpush.msra.mxu0 0.0
    %4132 = vmatpush.msra.mxu0 0.0
    %4133 = vmatpush.msra.mxu0 0.0
    %4134 = vmatpush.msra.mxu0 %v4025
    %4135 = vmatpush.msra.mxu0 %v4024
    %4136 = vmatpush.msra.mxu0 %v4023
    %4137 = vmatpush.msra.mxu0 %v4022
    %4138 = vmatmul.f32.gmra.mxu0 %v4027
    %v4139 = vpop.f32.mrf.mxu0
    %v4140 = vadd.f32 0.0, %v4139
    %4141 = vmatmul.f32.gmra.mxu0 %v4030
    %v4142 = vpop.f32.mrf.mxu0
    %v4143 = vadd.f32 0.0, %v4142
    %4144 = vmatmul.f32.gmra.mxu0 %v4033
    %v4145 = vpop.f32.mrf.mxu0
    %v4146 = vadd.f32 0.0, %v4145
    %4147 = vmatmul.f32.gmra.mxu0 %v4036
    %v4148 = vpop.f32.mrf.mxu0
    %v4149 = vadd.f32 0.0, %v4148
    %4150 = vmatmul.f32.gmra.mxu0 %v4039
    %v4151 = vpop.f32.mrf.mxu0
    %v4152 = vadd.f32 0.0, %v4151
    %4153 = vmatmul.f32.gmra.mxu0 %v4042
    %v4154 = vpop.f32.mrf.mxu0
    %v4155 = vadd.f32 0.0, %v4154
    %4156 = vmatmul.f32.gmra.mxu0 %v4045
    %v4157 = vpop.f32.mrf.mxu0
    %v4158 = vadd.f32 0.0, %v4157
    %4159 = vmatmul.f32.gmra.mxu0 %v4048
    %v4160 = vpop.f32.mrf.mxu0
    %v4161 = vadd.f32 0.0, %v4160
    %4162 = vmatmul.f32.gmra.mxu0 %v4051
    %v4163 = vpop.f32.mrf.mxu0
    %v4164 = vadd.f32 0.0, %v4163
    %4165 = vmatmul.f32.gmra.mxu0 %v4054
    %v4166 = vpop.f32.mrf.mxu0
    %v4167 = vadd.f32 0.0, %v4166
    %4168 = vmatmul.f32.gmra.mxu0 %v4057
    %v4169 = vpop.f32.mrf.mxu0
    %v4170 = vadd.f32 0.0, %v4169
    %4171 = vmatmul.f32.gmra.mxu0 %v4060
    %v4172 = vpop.f32.mrf.mxu0
    %v4173 = vadd.f32 0.0, %v4172
    %4174 = vmatmul.f32.gmra.mxu0 %v4063
    %v4175 = vpop.f32.mrf.mxu0
    %v4176 = vadd.f32 0.0, %v4175
    %4177 = vmatmul.f32.gmra.mxu0 %v4066
    %v4178 = vpop.f32.mrf.mxu0
    %v4179 = vadd.f32 0.0, %v4178
    %4180 = vmatmul.f32.gmra.mxu0 %v4069
    %v4181 = vpop.f32.mrf.mxu0
    %v4182 = vadd.f32 0.0, %v4181
    %4183 = vmatmul.f32.gmra.mxu0 %v4072
    %v4184 = vpop.f32.mrf.mxu0
    %v4185 = vadd.f32 0.0, %v4184
    %4186 = vmatmul.f32.gmra.mxu0 %v4075
    %v4187 = vpop.f32.mrf.mxu0
    %v4188 = vadd.f32 0.0, %v4187
    %4189 = vmatmul.f32.gmra.mxu0 %v4078
    %v4190 = vpop.f32.mrf.mxu0
    %v4191 = vadd.f32 0.0, %v4190
    %4192 = vmatmul.f32.gmra.mxu0 %v4081
    %v4193 = vpop.f32.mrf.mxu0
    %v4194 = vadd.f32 0.0, %v4193
    %4195 = vmatmul.f32.gmra.mxu0 %v4084
    %v4196 = vpop.f32.mrf.mxu0
    %v4197 = vadd.f32 0.0, %v4196
    %4198 = vmatmul.f32.gmra.mxu0 %v4087
    %v4199 = vpop.f32.mrf.mxu0
    %v4200 = vadd.f32 0.0, %v4199
    %4201 = vmatmul.f32.gmra.mxu0 %v4090
    %v4202 = vpop.f32.mrf.mxu0
    %v4203 = vadd.f32 0.0, %v4202
    %4204 = vmatmul.f32.gmra.mxu0 %v4093
    %v4205 = vpop.f32.mrf.mxu0
    %v4206 = vadd.f32 0.0, %v4205
    %4207 = vmatmul.f32.gmra.mxu0 %v4096
    %v4208 = vpop.f32.mrf.mxu0
    %v4209 = vadd.f32 0.0, %v4208
    %4210 = vmatmul.f32.gmra.mxu0 %v4099
    %v4211 = vpop.f32.mrf.mxu0
    %v4212 = vadd.f32 0.0, %v4211
    %4213 = vmatmul.f32.gmra.mxu0 %v4102
    %v4214 = vpop.f32.mrf.mxu0
    %v4215 = vadd.f32 0.0, %v4214
    %4216 = vmatmul.f32.gmra.mxu0 %v4105
    %v4217 = vpop.f32.mrf.mxu0
    %v4218 = vadd.f32 0.0, %v4217
    %4219 = vmatmul.f32.gmra.mxu0 %v4108
    %v4220 = vpop.f32.mrf.mxu0
    %v4221 = vadd.f32 0.0, %v4220
    %4222 = vmatmul.f32.gmra.mxu0 %v4111
    %v4223 = vpop.f32.mrf.mxu0
    %v4224 = vadd.f32 0.0, %v4223
    %4225 = vmatmul.f32.gmra.mxu0 %v4114
    %v4226 = vpop.f32.mrf.mxu0
    %v4227 = vadd.f32 0.0, %v4226
    %4228 = vmatmul.f32.gmra.mxu0 %v4117
    %v4229 = vpop.f32.mrf.mxu0
    %v4230 = vadd.f32 0.0, %v4229
    %4231 = vmatmul.f32.gmra.mxu0 %v4120
    %v4232 = vpop.f32.mrf.mxu0
    %v4233 = vadd.f32 0.0, %v4232
    %4234 = vdwg.mxu0
    %v4236 = vsel %vm95, %v3696, 0
    %v4239 = vsel %vm95, %v3699, 0
    %v4242 = vsel %vm95, %v3702, 0
    %v4245 = vsel %vm95, %v3705, 0
    %v4248 = vsel %vm95, %v3708, 0
    %v4251 = vsel %vm95, %v3711, 0
    %v4254 = vsel %vm95, %v3714, 0
    %v4257 = vsel %vm95, %v3717, 0
    %v4260 = vsel %vm95, %v3720, 0
    %v4263 = vsel %vm95, %v3723, 0
    %v4266 = vsel %vm95, %v3726, 0
    %v4269 = vsel %vm95, %v3729, 0
    %v4272 = vsel %vm95, %v3732, 0
    %v4275 = vsel %vm95, %v3735, 0
    %v4278 = vsel %vm95, %v3738, 0
    %v4281 = vsel %vm95, %v3741, 0
    %v4284 = vsel %vm95, %v3744, 0
    %v4287 = vsel %vm95, %v3747, 0
    %v4290 = vsel %vm95, %v3750, 0
    %v4293 = vsel %vm95, %v3753, 0
    %v4296 = vsel %vm95, %v3756, 0
    %v4299 = vsel %vm95, %v3759, 0
    %v4302 = vsel %vm95, %v3762, 0
    %v4305 = vsel %vm95, %v3765, 0
    %v4308 = vsel %vm95, %v3768, 0
    %v4311 = vsel %vm95, %v3771, 0
    %v4314 = vsel %vm95, %v3774, 0
    %v4317 = vsel %vm95, %v3777, 0
    %v4320 = vsel %vm95, %v3780, 0
    %v4323 = vsel %vm95, %v3783, 0
    %v4326 = vsel %vm95, %v3786, 0
    %v4329 = vsel %vm95, %v3789, 0
    %4331 = vmatpush.msra.mxu0 0.0
    %4332 = vmatpush.msra.mxu0 0.0
    %4333 = vmatpush.msra.mxu0 0.0
    %4334 = vmatpush.msra.mxu0 0.0
    %4335 = vmatpush.msra.mxu0 0.0
    %4336 = vmatpush.msra.mxu0 0.0
    %4337 = vmatpush.msra.mxu0 0.0
    %4338 = vmatpush.msra.mxu0 0.0
    %4339 = vmatpush.msra.mxu0 0.0
    %4340 = vmatpush.msra.mxu0 0.0
    %4341 = vmatpush.msra.mxu0 0.0
    %4342 = vmatpush.msra.mxu0 0.0
    %4343 = vmatpush.msra.mxu0 %v4020
    %4344 = vmatpush.msra.mxu0 %v4019
    %4345 = vmatpush.msra.mxu0 %v4018
    %4346 = vmatpush.msra.mxu0 %v4017
    %4347 = vmatmul.f32.gmra.mxu0 %v4236
    %v4348 = vpop.f32.mrf.mxu0
    %v4349 = vadd.f32 %v4140, %v4348
    %4350 = vmatmul.f32.gmra.mxu0 %v4239
    %v4351 = vpop.f32.mrf.mxu0
    %v4352 = vadd.f32 %v4143, %v4351
    %4353 = vmatmul.f32.gmra.mxu0 %v4242
    %v4354 = vpop.f32.mrf.mxu0
    %v4355 = vadd.f32 %v4146, %v4354
    %4356 = vmatmul.f32.gmra.mxu0 %v4245
    %v4357 = vpop.f32.mrf.mxu0
    %v4358 = vadd.f32 %v4149, %v4357
    %4359 = vmatmul.f32.gmra.mxu0 %v4248
    %v4360 = vpop.f32.mrf.mxu0
    %v4361 = vadd.f32 %v4152, %v4360
    %4362 = vmatmul.f32.gmra.mxu0 %v4251
    %v4363 = vpop.f32.mrf.mxu0
    %v4364 = vadd.f32 %v4155, %v4363
    %4365 = vmatmul.f32.gmra.mxu0 %v4254
    %v4366 = vpop.f32.mrf.mxu0
    %v4367 = vadd.f32 %v4158, %v4366
    %4368 = vmatmul.f32.gmra.mxu0 %v4257
    %v4369 = vpop.f32.mrf.mxu0
    %v4370 = vadd.f32 %v4161, %v4369
    %4371 = vmatmul.f32.gmra.mxu0 %v4260
    %v4372 = vpop.f32.mrf.mxu0
    %v4373 = vadd.f32 %v4164, %v4372
    %4374 = vmatmul.f32.gmra.mxu0 %v4263
    %v4375 = vpop.f32.mrf.mxu0
    %v4376 = vadd.f32 %v4167, %v4375
    %4377 = vmatmul.f32.gmra.mxu0 %v4266
    %v4378 = vpop.f32.mrf.mxu0
    %v4379 = vadd.f32 %v4170, %v4378
    %4380 = vmatmul.f32.gmra.mxu0 %v4269
    %v4381 = vpop.f32.mrf.mxu0
    %v4382 = vadd.f32 %v4173, %v4381
    %4383 = vmatmul.f32.gmra.mxu0 %v4272
    %v4384 = vpop.f32.mrf.mxu0
    %v4385 = vadd.f32 %v4176, %v4384
    %4386 = vmatmul.f32.gmra.mxu0 %v4275
    %v4387 = vpop.f32.mrf.mxu0
    %v4388 = vadd.f32 %v4179, %v4387
    %4389 = vmatmul.f32.gmra.mxu0 %v4278
    %v4390 = vpop.f32.mrf.mxu0
    %v4391 = vadd.f32 %v4182, %v4390
    %4392 = vmatmul.f32.gmra.mxu0 %v4281
    %v4393 = vpop.f32.mrf.mxu0
    %v4394 = vadd.f32 %v4185, %v4393
    %4395 = vmatmul.f32.gmra.mxu0 %v4284
    %v4396 = vpop.f32.mrf.mxu0
    %v4397 = vadd.f32 %v4188, %v4396
    %4398 = vmatmul.f32.gmra.mxu0 %v4287
    %v4399 = vpop.f32.mrf.mxu0
    %v4400 = vadd.f32 %v4191, %v4399
    %4401 = vmatmul.f32.gmra.mxu0 %v4290
    %v4402 = vpop.f32.mrf.mxu0
    %v4403 = vadd.f32 %v4194, %v4402
    %4404 = vmatmul.f32.gmra.mxu0 %v4293
    %v4405 = vpop.f32.mrf.mxu0
    %v4406 = vadd.f32 %v4197, %v4405
    %4407 = vmatmul.f32.gmra.mxu0 %v4296
    %v4408 = vpop.f32.mrf.mxu0
    %v4409 = vadd.f32 %v4200, %v4408
    %4410 = vmatmul.f32.gmra.mxu0 %v4299
    %v4411 = vpop.f32.mrf.mxu0
    %v4412 = vadd.f32 %v4203, %v4411
    %4413 = vmatmul.f32.gmra.mxu0 %v4302
    %v4414 = vpop.f32.mrf.mxu0
    %v4415 = vadd.f32 %v4206, %v4414
    %4416 = vmatmul.f32.gmra.mxu0 %v4305
    %v4417 = vpop.f32.mrf.mxu0
    %v4418 = vadd.f32 %v4209, %v4417
    %4419 = vmatmul.f32.gmra.mxu0 %v4308
    %v4420 = vpop.f32.mrf.mxu0
    %v4421 = vadd.f32 %v4212, %v4420
    %4422 = vmatmul.f32.gmra.mxu0 %v4311
    %v4423 = vpop.f32.mrf.mxu0
    %v4424 = vadd.f32 %v4215, %v4423
    %4425 = vmatmul.f32.gmra.mxu0 %v4314
    %v4426 = vpop.f32.mrf.mxu0
    %v4427 = vadd.f32 %v4218, %v4426
    %4428 = vmatmul.f32.gmra.mxu0 %v4317
    %v4429 = vpop.f32.mrf.mxu0
    %v4430 = vadd.f32 %v4221, %v4429
    %4431 = vmatmul.f32.gmra.mxu0 %v4320
    %v4432 = vpop.f32.mrf.mxu0
    %v4433 = vadd.f32 %v4224, %v4432
    %4434 = vmatmul.f32.gmra.mxu0 %v4323
    %v4435 = vpop.f32.mrf.mxu0
    %v4436 = vadd.f32 %v4227, %v4435
    %4437 = vmatmul.f32.gmra.mxu0 %v4326
    %v4438 = vpop.f32.mrf.mxu0
    %v4439 = vadd.f32 %v4230, %v4438
    %4440 = vmatmul.f32.gmra.mxu0 %v4329
    %v4441 = vpop.f32.mrf.mxu0
    %v4442 = vadd.f32 %v4233, %v4441
    %4443 = vdwg.mxu0
    %s4444 = scalar_lea.vmem %s8, 64
    %v4445 = vld [vmem:[%s4444] sm:$0xff]
    %v4446 = vld [vmem:[%s4444 + $0x8] sm:$0xff]
    %v4447 = vld [vmem:[%s4444 + $0x10] sm:$0xff]
    %v4448 = vld [vmem:[%s4444 + $0x18] sm:$0xff]
    %v4450 = vsel %vm95, %v3922, 0
    %v4453 = vsel %vm95, %v3925, 0
    %v4456 = vsel %vm95, %v3928, 0
    %v4459 = vsel %vm95, %v3931, 0
    %v4462 = vsel %vm95, %v3934, 0
    %v4465 = vsel %vm95, %v3937, 0
    %v4468 = vsel %vm95, %v3940, 0
    %v4471 = vsel %vm95, %v3943, 0
    %v4474 = vsel %vm95, %v3946, 0
    %v4477 = vsel %vm95, %v3949, 0
    %v4480 = vsel %vm95, %v3952, 0
    %v4483 = vsel %vm95, %v3955, 0
    %v4486 = vsel %vm95, %v3958, 0
    %v4489 = vsel %vm95, %v3961, 0
    %v4492 = vsel %vm95, %v3964, 0
    %v4495 = vsel %vm95, %v3967, 0
    %v4498 = vsel %vm95, %v3970, 0
    %v4501 = vsel %vm95, %v3973, 0
    %v4504 = vsel %vm95, %v3976, 0
    %v4507 = vsel %vm95, %v3979, 0
    %v4510 = vsel %vm95, %v3982, 0
    %v4513 = vsel %vm95, %v3985, 0
    %v4516 = vsel %vm95, %v3988, 0
    %v4519 = vsel %vm95, %v3991, 0
    %v4522 = vsel %vm95, %v3994, 0
    %v4525 = vsel %vm95, %v3997, 0
    %v4528 = vsel %vm95, %v4000, 0
    %v4531 = vsel %vm95, %v4003, 0
    %v4534 = vsel %vm95, %v4006, 0
    %v4537 = vsel %vm95, %v4009, 0
    %v4540 = vsel %vm95, %v4012, 0
    %v4543 = vsel %vm95, %v4015, 0
    %4545 = vmatpush.msra.mxu0 0.0
    %4546 = vmatpush.msra.mxu0 0.0
    %4547 = vmatpush.msra.mxu0 0.0
    %4548 = vmatpush.msra.mxu0 0.0
    %4549 = vmatpush.msra.mxu0 0.0
    %4550 = vmatpush.msra.mxu0 0.0
    %4551 = vmatpush.msra.mxu0 0.0
    %4552 = vmatpush.msra.mxu0 0.0
    %4553 = vmatpush.msra.mxu0 0.0
    %4554 = vmatpush.msra.mxu0 0.0
    %4555 = vmatpush.msra.mxu0 0.0
    %4556 = vmatpush.msra.mxu0 0.0
    %4557 = vmatpush.msra.mxu0 %v4448
    %4558 = vmatpush.msra.mxu0 %v4447
    %4559 = vmatpush.msra.mxu0 %v4446
    %4560 = vmatpush.msra.mxu0 %v4445
    %4561 = vmatmul.f32.gmra.mxu0 %v4450
    %v4562 = vpop.f32.mrf.mxu0
    %v4563 = vadd.f32 0.0, %v4562
    %4564 = vmatmul.f32.gmra.mxu0 %v4453
    %v4565 = vpop.f32.mrf.mxu0
    %v4566 = vadd.f32 0.0, %v4565
    %4567 = vmatmul.f32.gmra.mxu0 %v4456
    %v4568 = vpop.f32.mrf.mxu0
    %v4569 = vadd.f32 0.0, %v4568
    %4570 = vmatmul.f32.gmra.mxu0 %v4459
    %v4571 = vpop.f32.mrf.mxu0
    %v4572 = vadd.f32 0.0, %v4571
    %4573 = vmatmul.f32.gmra.mxu0 %v4462
    %v4574 = vpop.f32.mrf.mxu0
    %v4575 = vadd.f32 0.0, %v4574
    %4576 = vmatmul.f32.gmra.mxu0 %v4465
    %v4577 = vpop.f32.mrf.mxu0
    %v4578 = vadd.f32 0.0, %v4577
    %4579 = vmatmul.f32.gmra.mxu0 %v4468
    %v4580 = vpop.f32.mrf.mxu0
    %v4581 = vadd.f32 0.0, %v4580
    %4582 = vmatmul.f32.gmra.mxu0 %v4471
    %v4583 = vpop.f32.mrf.mxu0
    %v4584 = vadd.f32 0.0, %v4583
    %4585 = vmatmul.f32.gmra.mxu0 %v4474
    %v4586 = vpop.f32.mrf.mxu0
    %v4587 = vadd.f32 0.0, %v4586
    %4588 = vmatmul.f32.gmra.mxu0 %v4477
    %v4589 = vpop.f32.mrf.mxu0
    %v4590 = vadd.f32 0.0, %v4589
    %4591 = vmatmul.f32.gmra.mxu0 %v4480
    %v4592 = vpop.f32.mrf.mxu0
    %v4593 = vadd.f32 0.0, %v4592
    %4594 = vmatmul.f32.gmra.mxu0 %v4483
    %v4595 = vpop.f32.mrf.mxu0
    %v4596 = vadd.f32 0.0, %v4595
    %4597 = vmatmul.f32.gmra.mxu0 %v4486
    %v4598 = vpop.f32.mrf.mxu0
    %v4599 = vadd.f32 0.0, %v4598
    %4600 = vmatmul.f32.gmra.mxu0 %v4489
    %v4601 = vpop.f32.mrf.mxu0
    %v4602 = vadd.f32 0.0, %v4601
    %4603 = vmatmul.f32.gmra.mxu0 %v4492
    %v4604 = vpop.f32.mrf.mxu0
    %v4605 = vadd.f32 0.0, %v4604
    %4606 = vmatmul.f32.gmra.mxu0 %v4495
    %v4607 = vpop.f32.mrf.mxu0
    %v4608 = vadd.f32 0.0, %v4607
    %4609 = vmatmul.f32.gmra.mxu0 %v4498
    %v4610 = vpop.f32.mrf.mxu0
    %v4611 = vadd.f32 0.0, %v4610
    %4612 = vmatmul.f32.gmra.mxu0 %v4501
    %v4613 = vpop.f32.mrf.mxu0
    %v4614 = vadd.f32 0.0, %v4613
    %4615 = vmatmul.f32.gmra.mxu0 %v4504
    %v4616 = vpop.f32.mrf.mxu0
    %v4617 = vadd.f32 0.0, %v4616
    %4618 = vmatmul.f32.gmra.mxu0 %v4507
    %v4619 = vpop.f32.mrf.mxu0
    %v4620 = vadd.f32 0.0, %v4619
    %4621 = vmatmul.f32.gmra.mxu0 %v4510
    %v4622 = vpop.f32.mrf.mxu0
    %v4623 = vadd.f32 0.0, %v4622
    %4624 = vmatmul.f32.gmra.mxu0 %v4513
    %v4625 = vpop.f32.mrf.mxu0
    %v4626 = vadd.f32 0.0, %v4625
    %4627 = vmatmul.f32.gmra.mxu0 %v4516
    %v4628 = vpop.f32.mrf.mxu0
    %v4629 = vadd.f32 0.0, %v4628
    %4630 = vmatmul.f32.gmra.mxu0 %v4519
    %v4631 = vpop.f32.mrf.mxu0
    %v4632 = vadd.f32 0.0, %v4631
    %4633 = vmatmul.f32.gmra.mxu0 %v4522
    %v4634 = vpop.f32.mrf.mxu0
    %v4635 = vadd.f32 0.0, %v4634
    %4636 = vmatmul.f32.gmra.mxu0 %v4525
    %v4637 = vpop.f32.mrf.mxu0
    %v4638 = vadd.f32 0.0, %v4637
    %4639 = vmatmul.f32.gmra.mxu0 %v4528
    %v4640 = vpop.f32.mrf.mxu0
    %v4641 = vadd.f32 0.0, %v4640
    %4642 = vmatmul.f32.gmra.mxu0 %v4531
    %v4643 = vpop.f32.mrf.mxu0
    %v4644 = vadd.f32 0.0, %v4643
    %4645 = vmatmul.f32.gmra.mxu0 %v4534
    %v4646 = vpop.f32.mrf.mxu0
    %v4647 = vadd.f32 0.0, %v4646
    %4648 = vmatmul.f32.gmra.mxu0 %v4537
    %v4649 = vpop.f32.mrf.mxu0
    %v4650 = vadd.f32 0.0, %v4649
    %4651 = vmatmul.f32.gmra.mxu0 %v4540
    %v4652 = vpop.f32.mrf.mxu0
    %v4653 = vadd.f32 0.0, %v4652
    %4654 = vmatmul.f32.gmra.mxu0 %v4543
    %v4655 = vpop.f32.mrf.mxu0
    %v4656 = vadd.f32 0.0, %v4655
    %4657 = vdwg.mxu0
    %v4658 = vadd.f32 %v4349, %v4563
    %v4659 = vadd.f32 %v4352, %v4566
    %v4660 = vadd.f32 %v4355, %v4569
    %v4661 = vadd.f32 %v4358, %v4572
    %v4662 = vadd.f32 %v4361, %v4575
    %v4663 = vadd.f32 %v4364, %v4578
    %v4664 = vadd.f32 %v4367, %v4581
    %v4665 = vadd.f32 %v4370, %v4584
    %v4666 = vadd.f32 %v4373, %v4587
    %v4667 = vadd.f32 %v4376, %v4590
    %v4668 = vadd.f32 %v4379, %v4593
    %v4669 = vadd.f32 %v4382, %v4596
    %v4670 = vadd.f32 %v4385, %v4599
    %v4671 = vadd.f32 %v4388, %v4602
    %v4672 = vadd.f32 %v4391, %v4605
    %v4673 = vadd.f32 %v4394, %v4608
    %v4674 = vadd.f32 %v4397, %v4611
    %v4675 = vadd.f32 %v4400, %v4614
    %v4676 = vadd.f32 %v4403, %v4617
    %v4677 = vadd.f32 %v4406, %v4620
    %v4678 = vadd.f32 %v4409, %v4623
    %v4679 = vadd.f32 %v4412, %v4626
    %v4680 = vadd.f32 %v4415, %v4629
    %v4681 = vadd.f32 %v4418, %v4632
    %v4682 = vadd.f32 %v4421, %v4635
    %v4683 = vadd.f32 %v4424, %v4638
    %v4684 = vadd.f32 %v4427, %v4641
    %v4685 = vadd.f32 %v4430, %v4644
    %v4686 = vadd.f32 %v4433, %v4647
    %v4687 = vadd.f32 %v4436, %v4650
    %v4688 = vadd.f32 %v4439, %v4653
    %v4689 = vadd.f32 %v4442, %v4656
    %v4690 = vperm.slane %v37, 0
    %v4691 = vadd.f32 %v4658, %v4690
    %v4692 = vadd.f32 %v4659, %v4690
    %v4693 = vadd.f32 %v4660, %v4690
    %v4694 = vadd.f32 %v4661, %v4690
    %v4695 = vadd.f32 %v4662, %v4690
    %v4696 = vadd.f32 %v4663, %v4690
    %v4697 = vadd.f32 %v4664, %v4690
    %v4698 = vadd.f32 %v4665, %v4690
    %v4699 = vadd.f32 %v4666, %v4690
    %v4700 = vadd.f32 %v4667, %v4690
    %v4701 = vadd.f32 %v4668, %v4690
    %v4702 = vadd.f32 %v4669, %v4690
    %v4703 = vadd.f32 %v4670, %v4690
    %v4704 = vadd.f32 %v4671, %v4690
    %v4705 = vadd.f32 %v4672, %v4690
    %v4706 = vadd.f32 %v4673, %v4690
    %v4707 = vadd.f32 %v4674, %v4690
    %v4708 = vadd.f32 %v4675, %v4690
    %v4709 = vadd.f32 %v4676, %v4690
    %v4710 = vadd.f32 %v4677, %v4690
    %v4711 = vadd.f32 %v4678, %v4690
    %v4712 = vadd.f32 %v4679, %v4690
    %v4713 = vadd.f32 %v4680, %v4690
    %v4714 = vadd.f32 %v4681, %v4690
    %v4715 = vadd.f32 %v4682, %v4690
    %v4716 = vadd.f32 %v4683, %v4690
    %v4717 = vadd.f32 %v4684, %v4690
    %v4718 = vadd.f32 %v4685, %v4690
    %v4719 = vadd.f32 %v4686, %v4690
    %v4720 = vadd.f32 %v4687, %v4690
    %v4721 = vadd.f32 %v4688, %v4690
    %v4722 = vadd.f32 %v4689, %v4690
    %v4723 = vshra.s32 %v150, 7
    %v4724 = vshra.s32 %v2924, 7
    %vm4725 = vcmp.eq.s32.totalorder %v4723, %v380
    %vm4726 = vcmp.eq.s32.totalorder %v4724, %v380
    %v4727 = vsel %vm4725, 1, 0
    %v4728 = vsel %vm4726, 1, 0
    %v4729 = vcvt.s32.f32 %v4727
    %v4730 = vcvt.s32.f32 %v4728
    %vm4731 = vcmp.eq.s32.totalorder %v3005, %v150
    %vm4732 = vcmp.eq.s32.totalorder %v3006, %v150
    %vm4733 = vcmp.eq.s32.totalorder %v3007, %v150
    %vm4734 = vcmp.eq.s32.totalorder %v3008, %v150
    %vm4735 = vcmp.eq.s32.totalorder %v3009, %v150
    %vm4736 = vcmp.eq.s32.totalorder %v3010, %v150
    %vm4737 = vcmp.eq.s32.totalorder %v3011, %v150
    %vm4738 = vcmp.eq.s32.totalorder %v3012, %v150
    %vm4739 = vcmp.eq.s32.totalorder %v3013, %v150
    %vm4740 = vcmp.eq.s32.totalorder %v3014, %v150
    %vm4741 = vcmp.eq.s32.totalorder %v3015, %v150
    %vm4742 = vcmp.eq.s32.totalorder %v3016, %v150
    %vm4743 = vcmp.eq.s32.totalorder %v3017, %v150
    %vm4744 = vcmp.eq.s32.totalorder %v3018, %v150
    %vm4745 = vcmp.eq.s32.totalorder %v3019, %v150
    %vm4746 = vcmp.eq.s32.totalorder %v3020, %v150
    %vm4747 = vcmp.eq.s32.totalorder %v3021, %v150
    %vm4748 = vcmp.eq.s32.totalorder %v3022, %v150
    %vm4749 = vcmp.eq.s32.totalorder %v3023, %v150
    %vm4750 = vcmp.eq.s32.totalorder %v3024, %v150
    %vm4751 = vcmp.eq.s32.totalorder %v3025, %v150
    %vm4752 = vcmp.eq.s32.totalorder %v3026, %v150
    %vm4753 = vcmp.eq.s32.totalorder %v3027, %v150
    %vm4754 = vcmp.eq.s32.totalorder %v3028, %v150
    %vm4755 = vcmp.eq.s32.totalorder %v3029, %v150
    %vm4756 = vcmp.eq.s32.totalorder %v3030, %v150
    %vm4757 = vcmp.eq.s32.totalorder %v3031, %v150
    %vm4758 = vcmp.eq.s32.totalorder %v3032, %v150
    %vm4759 = vcmp.eq.s32.totalorder %v3033, %v150
    %vm4760 = vcmp.eq.s32.totalorder %v3034, %v150
    %vm4761 = vcmp.eq.s32.totalorder %v3035, %v150
    %vm4762 = vcmp.eq.s32.totalorder %v3036, %v150
    %v4763 = vsel %vm4731, 1, 0
    %v4764 = vsel %vm4732, 1, 0
    %v4765 = vsel %vm4733, 1, 0
    %v4766 = vsel %vm4734, 1, 0
    %v4767 = vsel %vm4735, 1, 0
    %v4768 = vsel %vm4736, 1, 0
    %v4769 = vsel %vm4737, 1, 0
    %v4770 = vsel %vm4738, 1, 0
    %v4771 = vsel %vm4739, 1, 0
    %v4772 = vsel %vm4740, 1, 0
    %v4773 = vsel %vm4741, 1, 0
    %v4774 = vsel %vm4742, 1, 0
    %v4775 = vsel %vm4743, 1, 0
    %v4776 = vsel %vm4744, 1, 0
    %v4777 = vsel %vm4745, 1, 0
    %v4778 = vsel %vm4746, 1, 0
    %v4779 = vsel %vm4747, 1, 0
    %v4780 = vsel %vm4748, 1, 0
    %v4781 = vsel %vm4749, 1, 0
    %v4782 = vsel %vm4750, 1, 0
    %v4783 = vsel %vm4751, 1, 0
    %v4784 = vsel %vm4752, 1, 0
    %v4785 = vsel %vm4753, 1, 0
    %v4786 = vsel %vm4754, 1, 0
    %v4787 = vsel %vm4755, 1, 0
    %v4788 = vsel %vm4756, 1, 0
    %v4789 = vsel %vm4757, 1, 0
    %v4790 = vsel %vm4758, 1, 0
    %v4791 = vsel %vm4759, 1, 0
    %v4792 = vsel %vm4760, 1, 0
    %v4793 = vsel %vm4761, 1, 0
    %v4794 = vsel %vm4762, 1, 0
    %v4795 = vcvt.s32.f32 %v4763
    %v4796 = vcvt.s32.f32 %v4764
    %v4797 = vcvt.s32.f32 %v4765
    %v4798 = vcvt.s32.f32 %v4766
    %v4799 = vcvt.s32.f32 %v4767
    %v4800 = vcvt.s32.f32 %v4768
    %v4801 = vcvt.s32.f32 %v4769
    %v4802 = vcvt.s32.f32 %v4770
    %v4803 = vcvt.s32.f32 %v4771
    %v4804 = vcvt.s32.f32 %v4772
    %v4805 = vcvt.s32.f32 %v4773
    %v4806 = vcvt.s32.f32 %v4774
    %v4807 = vcvt.s32.f32 %v4775
    %v4808 = vcvt.s32.f32 %v4776
    %v4809 = vcvt.s32.f32 %v4777
    %v4810 = vcvt.s32.f32 %v4778
    %v4811 = vcvt.s32.f32 %v4779
    %v4812 = vcvt.s32.f32 %v4780
    %v4813 = vcvt.s32.f32 %v4781
    %v4814 = vcvt.s32.f32 %v4782
    %v4815 = vcvt.s32.f32 %v4783
    %v4816 = vcvt.s32.f32 %v4784
    %v4817 = vcvt.s32.f32 %v4785
    %v4818 = vcvt.s32.f32 %v4786
    %v4819 = vcvt.s32.f32 %v4787
    %v4820 = vcvt.s32.f32 %v4788
    %v4821 = vcvt.s32.f32 %v4789
    %v4822 = vcvt.s32.f32 %v4790
    %v4823 = vcvt.s32.f32 %v4791
    %v4824 = vcvt.s32.f32 %v4792
    %v4825 = vcvt.s32.f32 %v4793
    %v4826 = vcvt.s32.f32 %v4794
    %4828 = vset.pattern.permute.xlu0 0
    %4829 = vperm.xlu0 %4828, %v4691
    %v4830 = vpop.permute.xlu0 %4829
    %4833 = vset.pattern.permute.xlu0 0
    %4834 = vperm.xlu0 %4833, %v4692
    %v4835 = vpop.permute.xlu0 %4834
    %4838 = vset.pattern.permute.xlu0 0
    %4839 = vperm.xlu0 %4838, %v4693
    %v4840 = vpop.permute.xlu0 %4839
    %4843 = vset.pattern.permute.xlu0 0
    %4844 = vperm.xlu0 %4843, %v4694
    %v4845 = vpop.permute.xlu0 %4844
    %4848 = vset.pattern.permute.xlu0 0
    %4849 = vperm.xlu0 %4848, %v4695
    %v4850 = vpop.permute.xlu0 %4849
    %4853 = vset.pattern.permute.xlu0 0
    %4854 = vperm.xlu0 %4853, %v4696
    %v4855 = vpop.permute.xlu0 %4854
    %4858 = vset.pattern.permute.xlu0 0
    %4859 = vperm.xlu0 %4858, %v4697
    %v4860 = vpop.permute.xlu0 %4859
    %4863 = vset.pattern.permute.xlu0 0
    %4864 = vperm.xlu0 %4863, %v4698
    %v4865 = vpop.permute.xlu0 %4864
    %4868 = vset.pattern.permute.xlu0 0
    %4869 = vperm.xlu0 %4868, %v4699
    %v4870 = vpop.permute.xlu0 %4869
    %4873 = vset.pattern.permute.xlu0 0
    %4874 = vperm.xlu0 %4873, %v4700
    %v4875 = vpop.permute.xlu0 %4874
    %4878 = vset.pattern.permute.xlu0 0
    %4879 = vperm.xlu0 %4878, %v4701
    %v4880 = vpop.permute.xlu0 %4879
    %4883 = vset.pattern.permute.xlu0 0
    %4884 = vperm.xlu0 %4883, %v4702
    %v4885 = vpop.permute.xlu0 %4884
    %4888 = vset.pattern.permute.xlu0 0
    %4889 = vperm.xlu0 %4888, %v4703
    %v4890 = vpop.permute.xlu0 %4889
    %4893 = vset.pattern.permute.xlu0 0
    %4894 = vperm.xlu0 %4893, %v4704
    %v4895 = vpop.permute.xlu0 %4894
    %4898 = vset.pattern.permute.xlu0 0
    %4899 = vperm.xlu0 %4898, %v4705
    %v4900 = vpop.permute.xlu0 %4899
    %4903 = vset.pattern.permute.xlu0 0
    %4904 = vperm.xlu0 %4903, %v4706
    %v4905 = vpop.permute.xlu0 %4904
    %4908 = vset.pattern.permute.xlu0 0
    %4909 = vperm.xlu0 %4908, %v4707
    %v4910 = vpop.permute.xlu0 %4909
    %4913 = vset.pattern.permute.xlu0 0
    %4914 = vperm.xlu0 %4913, %v4708
    %v4915 = vpop.permute.xlu0 %4914
    %4918 = vset.pattern.permute.xlu0 0
    %4919 = vperm.xlu0 %4918, %v4709
    %v4920 = vpop.permute.xlu0 %4919
    %4923 = vset.pattern.permute.xlu0 0
    %4924 = vperm.xlu0 %4923, %v4710
    %v4925 = vpop.permute.xlu0 %4924
    %4928 = vset.pattern.permute.xlu0 0
    %4929 = vperm.xlu0 %4928, %v4711
    %v4930 = vpop.permute.xlu0 %4929
    %4933 = vset.pattern.permute.xlu0 0
    %4934 = vperm.xlu0 %4933, %v4712
    %v4935 = vpop.permute.xlu0 %4934
    %4938 = vset.pattern.permute.xlu0 0
    %4939 = vperm.xlu0 %4938, %v4713
    %v4940 = vpop.permute.xlu0 %4939
    %4943 = vset.pattern.permute.xlu0 0
    %4944 = vperm.xlu0 %4943, %v4714
    %v4945 = vpop.permute.xlu0 %4944
    %4948 = vset.pattern.permute.xlu0 0
    %4949 = vperm.xlu0 %4948, %v4715
    %v4950 = vpop.permute.xlu0 %4949
    %4953 = vset.pattern.permute.xlu0 0
    %4954 = vperm.xlu0 %4953, %v4716
    %v4955 = vpop.permute.xlu0 %4954
    %4958 = vset.pattern.permute.xlu0 0
    %4959 = vperm.xlu0 %4958, %v4717
    %v4960 = vpop.permute.xlu0 %4959
    %4963 = vset.pattern.permute.xlu0 0
    %4964 = vperm.xlu0 %4963, %v4718
    %v4965 = vpop.permute.xlu0 %4964
    %4968 = vset.pattern.permute.xlu0 0
    %4969 = vperm.xlu0 %4968, %v4719
    %v4970 = vpop.permute.xlu0 %4969
    %4973 = vset.pattern.permute.xlu0 0
    %4974 = vperm.xlu0 %4973, %v4720
    %v4975 = vpop.permute.xlu0 %4974
    %4978 = vset.pattern.permute.xlu0 0
    %4979 = vperm.xlu0 %4978, %v4721
    %v4980 = vpop.permute.xlu0 %4979
    %4983 = vset.pattern.permute.xlu0 0
    %4984 = vperm.xlu0 %4983, %v4722
    %v4985 = vpop.permute.xlu0 %4984
    %v4987 = vmul.f32 %v4830, %v4795
    %v4988 = vmul.f32 %v4835, %v4796
    %v4989 = vmul.f32 %v4840, %v4797
    %v4990 = vmul.f32 %v4845, %v4798
    %v4991 = vmul.f32 %v4850, %v4799
    %v4992 = vmul.f32 %v4855, %v4800
    %v4993 = vmul.f32 %v4860, %v4801
    %v4994 = vmul.f32 %v4865, %v4802
    %v4995 = vmul.f32 %v4870, %v4803
    %v4996 = vmul.f32 %v4875, %v4804
    %v4997 = vmul.f32 %v4880, %v4805
    %v4998 = vmul.f32 %v4885, %v4806
    %v4999 = vmul.f32 %v4890, %v4807
    %v5000 = vmul.f32 %v4895, %v4808
    %v5001 = vmul.f32 %v4900, %v4809
    %v5002 = vmul.f32 %v4905, %v4810
    %v5003 = vmul.f32 %v4910, %v4811
    %v5004 = vmul.f32 %v4915, %v4812
    %v5005 = vmul.f32 %v4920, %v4813
    %v5006 = vmul.f32 %v4925, %v4814
    %v5007 = vmul.f32 %v4930, %v4815
    %v5008 = vmul.f32 %v4935, %v4816
    %v5009 = vmul.f32 %v4940, %v4817
    %v5010 = vmul.f32 %v4945, %v4818
    %v5011 = vmul.f32 %v4950, %v4819
    %v5012 = vmul.f32 %v4955, %v4820
    %v5013 = vmul.f32 %v4960, %v4821
    %v5014 = vmul.f32 %v4965, %v4822
    %v5015 = vmul.f32 %v4970, %v4823
    %v5016 = vmul.f32 %v4975, %v4824
    %v5017 = vmul.f32 %v4980, %v4825
    %v5018 = vmul.f32 %v4985, %v4826
    %5019 = vmatpush.msra.mxu0 %v5002
    %5020 = vmatpush.msra.mxu0 %v5001
    %5021 = vmatpush.msra.mxu0 %v5000
    %5022 = vmatpush.msra.mxu0 %v4999
    %5023 = vmatpush.msra.mxu0 %v4998
    %5024 = vmatpush.msra.mxu0 %v4997
    %5025 = vmatpush.msra.mxu0 %v4996
    %5026 = vmatpush.msra.mxu0 %v4995
    %5027 = vmatpush.msra.mxu0 %v4994
    %5028 = vmatpush.msra.mxu0 %v4993
    %5029 = vmatpush.msra.mxu0 %v4992
    %5030 = vmatpush.msra.mxu0 %v4991
    %5031 = vmatpush.msra.mxu0 %v4990
    %5032 = vmatpush.msra.mxu0 %v4989
    %5033 = vmatpush.msra.mxu0 %v4988
    %5034 = vmatpush.msra.mxu0 %v4987
    %5035 = vmatmul.f32.gmra.mxu0 %v4729
    %v5036 = vpop.f32.mrf.mxu0
    %v5037 = vadd.f32 0.0, %v5036
    %5038 = vdwg.mxu0
    %5039 = vmatpush.msra.mxu0 %v5018
    %5040 = vmatpush.msra.mxu0 %v5017
    %5041 = vmatpush.msra.mxu0 %v5016
    %5042 = vmatpush.msra.mxu0 %v5015
    %5043 = vmatpush.msra.mxu0 %v5014
    %5044 = vmatpush.msra.mxu0 %v5013
    %5045 = vmatpush.msra.mxu0 %v5012
    %5046 = vmatpush.msra.mxu0 %v5011
    %5047 = vmatpush.msra.mxu0 %v5010
    %5048 = vmatpush.msra.mxu0 %v5009
    %5049 = vmatpush.msra.mxu0 %v5008
    %5050 = vmatpush.msra.mxu0 %v5007
    %5051 = vmatpush.msra.mxu0 %v5006
    %5052 = vmatpush.msra.mxu0 %v5005
    %5053 = vmatpush.msra.mxu0 %v5004
    %5054 = vmatpush.msra.mxu0 %v5003
    %5055 = vmatmul.f32.gmra.mxu0 %v4730
    %v5056 = vpop.f32.mrf.mxu0
    %v5057 = vadd.f32 %v5037, %v5056
    %5058 = vdwg.mxu0
    %v5059 = vtanh.pop %v5057
    %5060 = vst [vmem:[#allocation2] sm:$0x3] %v5059
    // Predicated region
    $region42: #{baseline_inference.1} parent=1 // pred_check
      _
    $region43: #{baseline_inference.1} parent=1 // pred_check_branch
      %5062 = sbr.rel (0) target = $region45
    $region44: #{baseline_inference.1} parent=1 // pred_region
      %5064 = vsyncadd [#allocation3], 0
      %s5066 = sshll.u32 [#allocation2], 4
      %s5067 = int_to_ptr.vmem [resolvable:$true] %s5066
      %s5068 = sshll.u32 %s10, 4
      %s5069 = int_to_ptr.hbm [resolvable:$true] %s5068
      %5071 = dma.vmem_to_hbm [thread:$0]  %s5067, 32, %s5069, [#allocation3]
    $region45: #{baseline_inference.1} parent=1 // pred_fallthru
      _
    // Predicated region
    $region46: #{baseline_inference.1} parent=1 // pred_check
      _
    $region47: #{baseline_inference.1} parent=1 // pred_check_branch
      %5073 = sbr.rel (0) target = $region49
    $region48: #{baseline_inference.1} parent=1 // pred_region
      %5075 = dma.done [#allocation3], 32
    $region49: #{baseline_inference.1} parent=1 // pred_fallthru
      _
    %5076 = vsyncpa [#allocation3], 1

</llo_original>
